<compile_context>
chip_gen: v7x
topology: tpu7x:2x2x1
jax: 0.10.0
libtpu: 0.0.40
codegen_flags: <defaults>
</compile_context>

<pallas_src>
import functools

import jax
import jax.numpy as jnp
from jax import lax
from jax.experimental import pallas as pl
from jax.experimental.pallas import tpu as pltpu


def _conv_band(x, wpk, kh, kw, dil_h):
    """Valid conv with kernel dilation (dil_h, 1), channels-leading layout.

    x   : (Cin, Hs, Ws) activation band -- H on sublanes, W on lanes.
    wpk : (Cout, kh*kw*Cin) weights packed in (i, j, ci) patch order.
    Returns (Cout, Hs - dil_h*(kh-1), Ws - (kw-1)) in float32.
    """
    _, hs, ws = x.shape
    ho = hs - dil_h * (kh - 1)
    wo = ws - (kw - 1)
    # im2col: gather every (i, j) tap once and contract taps+channels in a
    # single MXU dot (no zero-init accumulator, no per-tap VALU adds).
    patches = [x[:, i * dil_h:i * dil_h + ho, j:j + wo]
               for i in range(kh) for j in range(kw)]
    xcat = patches[0] if len(patches) == 1 else jnp.concatenate(patches, axis=0)
    return lax.dot_general(
        wpk, xcat,
        dimension_numbers=(((1,), (0,)), ((), ())),
        preferred_element_type=jnp.float32)


def _network_kernel(x_ref, w1_ref, w2_ref, w3_ref, o_ref, *, dil, k1, k2, k3):
    # x_ref: (1, Cin, band_in, W) halo'd input row band, NCHW layout.
    x = x_ref[0].astype(jnp.float32)
    h = jnp.maximum(_conv_band(x, w1_ref[...], k1[0], k1[1], dil), 0.0)  # conv1+ReLU
    h = jnp.maximum(_conv_band(h, w2_ref[...], k2[0], k2[1], dil), 0.0)  # 1x1 +ReLU
    y = _conv_band(h, w3_ref[...], k3[0], k3[1], dil)                    # conv3
    o_ref[0] = y.astype(o_ref.dtype)                                     # lane-dense W


def _pack_weights(w_oihw):
    """(Cout, Cin, KH, KW) -> (Cout, KH*KW*Cin), matching _conv_band patch order."""
    co, ci, kh, kw = w_oihw.shape
    return jnp.transpose(w_oihw, (2, 3, 1, 0)).reshape(kh * kw * ci, co).T


def network_forward(x_nchw, w1, w2, w3, acc_rate, h_band=None):
    """Forward pass of `network`. x_nchw: (N, Cin, H, W); weights OIHW; returns NCHW."""
    N, Cin, H, W = x_nchw.shape
    R = acc_rate
    C1, _, kh1, kw1 = w1.shape
    C2, _, kh2, kw2 = w2.shape
    C3, _, kh3, kw3 = w3.shape

    halo = R * ((kh1 - 1) + (kh2 - 1) + (kh3 - 1))    # extra input rows per band
    H3 = H - halo                                     # output height
    W3 = W - ((kw1 - 1) + (kw2 - 1) + (kw3 - 1))      # output width
    assert H3 > 0 and W3 > 0, "input spatially too small for three valid convs"

    # ---- pick the output-row band (multiple of 8): per-band working set of a
    # few MiB so double-buffered blocks + intermediates fit v7x VMEM easily.
    if h_band is None:
        budget = 8 * 1024 * 1024
        per_row = 4 * W * (kh1 * kw1 * Cin + C1 + C2 + kh3 * kw3 * C2
                           + 2 * Cin + 2 * C3)
        h_band = max(8, min(128, (budget // max(per_row, 1)) // 8 * 8))
    if h_band >= H3:
        h_band, num_bands = H3, 1
    else:
        h_band = max(8, (h_band // 8) * 8)
        num_bands = int(pl.cdiv(H3, h_band))
    H3_pad = num_bands * h_band
    band_in = h_band + halo

    # ---- pad H (zeros) so the last band has a full halo window, then build
    # halo-overlapping input row bands so BlockSpec can pipeline them.
    # Single-band case: feed the original array (no HBM duplication).
    pad_h = H3_pad - H3
    if pad_h:
        x_nchw = jnp.pad(x_nchw, ((0, 0), (0, 0), (0, pad_h), (0, 0)))
    if num_bands == 1:
        x_bands = x_nchw                                  # (N, Cin, band_in, W)
    else:
        x_bands = jnp.stack(
            [x_nchw[:, :, b * h_band:b * h_band + band_in, :]
             for b in range(num_bands)],
            axis=1).reshape(N * num_bands, Cin, band_in, W)

    # ---- im2col-packed weights, whole-array resident in VMEM.
    w1p, w2p, w3p = _pack_weights(w1), _pack_weights(w2), _pack_weights(w3)

    # Rough per-step f32 VMEM need: double-buffered in/out blocks + band
    # intermediates + weights.  Raise the scoped limit only when needed and
    # keep headroom under v7x's 64 MiB physical VMEM.
    band_mid = h_band + R * (kh3 - 1)
    est = 4 * (2 * Cin * band_in * W + 2 * C3 * h_band * W3
               + (kh1 * kw1 * Cin + C1 + C2) * band_mid * W
               + kh3 * kw3 * C2 * h_band * W
               + w1p.size + w2p.size + w3p.size)
    vmem_limit = int(min(max(32 * 1024 * 1024, 2 * est), 56 * 1024 * 1024))

    kernel = functools.partial(_network_kernel, dil=R,
                               k1=(kh1, kw1), k2=(kh2, kw2), k3=(kh3, kw3))
    vmem_full = pl.BlockSpec(memory_space=pltpu.MemorySpace.VMEM)

    out = pl.pallas_call(
        kernel,
        out_shape=jax.ShapeDtypeStruct((N, C3, H3_pad, W3), jnp.float32),
        grid=(N, num_bands),
        in_specs=[
            pl.BlockSpec((1, Cin, band_in, W),
                         lambda n, b: (n * num_bands + b, 0, 0, 0)),
            vmem_full, vmem_full, vmem_full,     # packed weights, resident
        ],
        out_specs=pl.BlockSpec((1, C3, h_band, W3), lambda n, b: (n, 0, b, 0)),
        compiler_params=pltpu.CompilerParams(
            dimension_semantics=("parallel", "parallel"),
            vmem_limit_bytes=vmem_limit),
    )(x_bands, w1p, w2p, w3p)

    return out[:, :, :H3, :] if pad_h else out


def _reference_forward(x_nchw, w1, w2, w3, acc_rate):
    """Pure-JAX reference with torch.nn.Conv2d semantics (NCHW in, OIHW weights)."""
    def conv(x, w):
        return lax.conv_general_dilated(
            x, w, window_strides=(1, 1), padding="VALID",
            rhs_dilation=(acc_rate, 1),
            dimension_numbers=("NCHW", "OIHW", "NCHW"))
    y = jnp.maximum(conv(x_nchw, w1), 0.0)
    y = jnp.maximum(conv(y, w2), 0.0)
    return conv(y, w3)


if __name__ == "__main__":
    acc_rate = 4          # R
    no_ch = 4
    N, H, W = 2, 32, 16   # H large enough to exercise 3 output-row bands

    key = jax.random.PRNGKey(0)
    kx, k1, k2, k3 = jax.random.split(key, 4)
    x = jax.random.normal(kx, (N, no_ch, H, W), dtype=jnp.float32)
    # PyTorch Conv2d weight layout: (Cout, Cin, KH, KW), bias=False.
    w1 = jax.random.normal(k1, (32, no_ch, 2, 5), dtype=jnp.float32) * 0.1
    w2 = jax.random.normal(k2, (8, 32, 1, 1), dtype=jnp.float32) * 0.1
    w3 = jax.random.normal(k3, (acc_rate - 1, 8, 2, 3), dtype=jnp.float32) * 0.1

    out = network_forward(x, w1, w2, w3, acc_rate, h_band=8)   # 3 row bands, grid (2, 3)
    out = jax.block_until_ready(out)

    ref = _reference_forward(x, w1, w2, w3, acc_rate)
    assert out.shape == (N, acc_rate - 1, H - 2 * acc_rate, W - 6), out.shape
    assert jnp.allclose(out, ref, atol=1e-4, rtol=1e-4), \
        float(jnp.max(jnp.abs(out - ref)))

    # Also cover the single-band fast path (no halo-duplication copy).
    out1 = jax.block_until_ready(network_forward(x, w1, w2, w3, acc_rate))
    assert jnp.allclose(out1, ref, atol=1e-4, rtol=1e-4)

    print("KERNEL_OK")
</pallas_src>

<mosaic_0001>
module attributes {stable_mosaic.version = 11 : i64} {
  func.func @_network_kernel(%arg0: i32, %arg1: i32, %arg2: memref<1x4x16x16xf32, #tpu.memory_space<vmem>>, %arg3: memref<32x40xf32, #tpu.memory_space<vmem>>, %arg4: memref<8x32xf32, #tpu.memory_space<vmem>>, %arg5: memref<3x48xf32, #tpu.memory_space<vmem>>, %arg6: memref<1x3x8x10xf32, #tpu.memory_space<vmem>>) attributes {dimension_semantics = [#tpu.dimension_semantics<parallel>, #tpu.dimension_semantics<parallel>], iteration_bounds = array<i64: 2, 3>, scalar_prefetch = 0 : i64, scratch_operands = 0 : i64, tpu.core_type = #tpu.core_type<tc>, window_params = [{transform_indices = @transform_0, window_bounds = array<i64: 1, 4, 16, 16>}, {pipeline_mode = #tpu.pipeline_mode<synchronous>, transform_indices = @transform_1, window_bounds = array<i64: 32, 40>}, {pipeline_mode = #tpu.pipeline_mode<synchronous>, transform_indices = @transform_2, window_bounds = array<i64: 8, 32>}, {pipeline_mode = #tpu.pipeline_mode<synchronous>, transform_indices = @transform_3, window_bounds = array<i64: 3, 48>}, {transform_indices = @transform_4, window_bounds = array<i64: 1, 3, 8, 10>}]} {
    %c0 = arith.constant 0 : index
    %c0_0 = arith.constant 0 : index
    %c0_1 = arith.constant 0 : index
    %c0_2 = arith.constant 0 : index
    %0 = vector.load %arg2[%c0, %c0_0, %c0_1, %c0_2] : memref<1x4x16x16xf32, #tpu.memory_space<vmem>>, vector<1x4x16x16xf32>
    %1 = vector.shape_cast %0 : vector<1x4x16x16xf32> to vector<4x16x16xf32>
    %c0_3 = arith.constant 0 : index
    %c0_4 = arith.constant 0 : index
    %2 = vector.load %arg3[%c0_3, %c0_4] : memref<32x40xf32, #tpu.memory_space<vmem>>, vector<32x40xf32>
    %3 = vector.extract_strided_slice %1 {offsets = [0, 0, 0], sizes = [4, 12, 12], strides = [1, 1, 1]} : vector<4x16x16xf32> to vector<4x12x12xf32>
    %4 = vector.extract_strided_slice %1 {offsets = [0, 0, 1], sizes = [4, 12, 12], strides = [1, 1, 1]} : vector<4x16x16xf32> to vector<4x12x12xf32>
    %5 = vector.extract_strided_slice %1 {offsets = [0, 0, 2], sizes = [4, 12, 12], strides = [1, 1, 1]} : vector<4x16x16xf32> to vector<4x12x12xf32>
    %6 = vector.extract_strided_slice %1 {offsets = [0, 0, 3], sizes = [4, 12, 12], strides = [1, 1, 1]} : vector<4x16x16xf32> to vector<4x12x12xf32>
    %7 = vector.extract_strided_slice %1 {offsets = [0, 0, 4], sizes = [4, 12, 12], strides = [1, 1, 1]} : vector<4x16x16xf32> to vector<4x12x12xf32>
    %8 = vector.extract_strided_slice %1 {offsets = [0, 4, 0], sizes = [4, 12, 12], strides = [1, 1, 1]} : vector<4x16x16xf32> to vector<4x12x12xf32>
    %9 = vector.extract_strided_slice %1 {offsets = [0, 4, 1], sizes = [4, 12, 12], strides = [1, 1, 1]} : vector<4x16x16xf32> to vector<4x12x12xf32>
    %10 = vector.extract_strided_slice %1 {offsets = [0, 4, 2], sizes = [4, 12, 12], strides = [1, 1, 1]} : vector<4x16x16xf32> to vector<4x12x12xf32>
    %11 = vector.extract_strided_slice %1 {offsets = [0, 4, 3], sizes = [4, 12, 12], strides = [1, 1, 1]} : vector<4x16x16xf32> to vector<4x12x12xf32>
    %12 = vector.extract_strided_slice %1 {offsets = [0, 4, 4], sizes = [4, 12, 12], strides = [1, 1, 1]} : vector<4x16x16xf32> to vector<4x12x12xf32>
    %13 = tpu.concatenate %3, %4, %5, %6, %7, %8, %9, %10, %11, %12 in 0 : vector<4x12x12xf32>, vector<4x12x12xf32>, vector<4x12x12xf32>, vector<4x12x12xf32>, vector<4x12x12xf32>, vector<4x12x12xf32>, vector<4x12x12xf32>, vector<4x12x12xf32>, vector<4x12x12xf32>, vector<4x12x12xf32> -> vector<40x12x12xf32>
    %cst = arith.constant dense<0.000000e+00> : vector<32x12x12xf32>
    %14 = tpu.matmul %2, %13, %cst {dimension_numbers = #tpu.dot_dimension_numbers<[1], [0], [0], [1, 2], [0, 0, 1, 1, 1, 2], [], []>} : vector<32x40xf32>, vector<40x12x12xf32>, vector<32x12x12xf32> -> vector<32x12x12xf32>
    %cst_5 = arith.constant 0.000000e+00 : f32
    %15 = vector.broadcast %cst_5 : f32 to vector<32x12x12xf32>
    %16 = arith.maximumf %14, %15 : vector<32x12x12xf32>
    %c0_6 = arith.constant 0 : index
    %c0_7 = arith.constant 0 : index
    %17 = vector.load %arg4[%c0_6, %c0_7] : memref<8x32xf32, #tpu.memory_space<vmem>>, vector<8x32xf32>
    %cst_8 = arith.constant dense<0.000000e+00> : vector<8x12x12xf32>
    %18 = tpu.matmul %17, %16, %cst_8 {dimension_numbers = #tpu.dot_dimension_numbers<[1], [0], [0], [1, 2], [0, 0, 1, 1, 1, 2], [], []>} : vector<8x32xf32>, vector<32x12x12xf32>, vector<8x12x12xf32> -> vector<8x12x12xf32>
    %cst_9 = arith.constant 0.000000e+00 : f32
    %19 = vector.broadcast %cst_9 : f32 to vector<8x12x12xf32>
    %20 = arith.maximumf %18, %19 : vector<8x12x12xf32>
    %c0_10 = arith.constant 0 : index
    %c0_11 = arith.constant 0 : index
    %21 = vector.load %arg5[%c0_10, %c0_11] : memref<3x48xf32, #tpu.memory_space<vmem>>, vector<3x48xf32>
    %22 = vector.extract_strided_slice %20 {offsets = [0, 0, 0], sizes = [8, 8, 10], strides = [1, 1, 1]} : vector<8x12x12xf32> to vector<8x8x10xf32>
    %23 = vector.extract_strided_slice %20 {offsets = [0, 0, 1], sizes = [8, 8, 10], strides = [1, 1, 1]} : vector<8x12x12xf32> to vector<8x8x10xf32>
    %24 = vector.extract_strided_slice %20 {offsets = [0, 0, 2], sizes = [8, 8, 10], strides = [1, 1, 1]} : vector<8x12x12xf32> to vector<8x8x10xf32>
    %25 = vector.extract_strided_slice %20 {offsets = [0, 4, 0], sizes = [8, 8, 10], strides = [1, 1, 1]} : vector<8x12x12xf32> to vector<8x8x10xf32>
    %26 = vector.extract_strided_slice %20 {offsets = [0, 4, 1], sizes = [8, 8, 10], strides = [1, 1, 1]} : vector<8x12x12xf32> to vector<8x8x10xf32>
    %27 = vector.extract_strided_slice %20 {offsets = [0, 4, 2], sizes = [8, 8, 10], strides = [1, 1, 1]} : vector<8x12x12xf32> to vector<8x8x10xf32>
    %28 = tpu.concatenate %22, %23, %24, %25, %26, %27 in 0 : vector<8x8x10xf32>, vector<8x8x10xf32>, vector<8x8x10xf32>, vector<8x8x10xf32>, vector<8x8x10xf32>, vector<8x8x10xf32> -> vector<48x8x10xf32>
    %cst_12 = arith.constant dense<0.000000e+00> : vector<3x8x10xf32>
    %29 = tpu.matmul %21, %28, %cst_12 {dimension_numbers = #tpu.dot_dimension_numbers<[1], [0], [0], [1, 2], [0, 0, 1, 1, 1, 2], [], []>} : vector<3x48xf32>, vector<48x8x10xf32>, vector<3x8x10xf32> -> vector<3x8x10xf32>
    %c0_13 = arith.constant 0 : index
    %c0_14 = arith.constant 0 : index
    %c0_15 = arith.constant 0 : index
    %c0_16 = arith.constant 0 : index
    %30 = vector.load %arg6[%c0_13, %c0_14, %c0_15, %c0_16] : memref<1x3x8x10xf32, #tpu.memory_space<vmem>>, vector<1x3x8x10xf32>
    %31 = vector.shape_cast %30 : vector<1x3x8x10xf32> to vector<3x8x10xf32>
    %32 = vector.shape_cast %29 : vector<3x8x10xf32> to vector<1x3x8x10xf32>
    tpu.vector_store %arg6[%c0_13, %c0_14, %c0_15, %c0_16], %32 {strides = array<i32>} : memref<1x3x8x10xf32, #tpu.memory_space<vmem>>, vector<1x3x8x10xf32>,
    return
  }
  func.func @transform_0(%arg0: i32, %arg1: i32) -> (i32, i32, i32, i32) {
    %c3_i32 = arith.constant 3 : i32
    %0 = arith.muli %arg0, %c3_i32 : i32
    %1 = arith.addi %0, %arg1 : i32
    %c0_i32 = arith.constant 0 : i32
    %c0_i32_0 = arith.constant 0 : i32
    %c0_i32_1 = arith.constant 0 : i32
    %c0_i32_2 = arith.constant 0 : i32
    return %1, %c0_i32, %c0_i32_0, %c0_i32_1 : i32, i32, i32, i32
  }
  func.func @transform_1(%arg0: i32, %arg1: i32) -> (i32, i32) {
    %c0_i32 = arith.constant 0 : i32
    %c0_i32_0 = arith.constant 0 : i32
    %c0_i32_1 = arith.constant 0 : i32
    return %c0_i32, %c0_i32_0 : i32, i32
  }
  func.func @transform_2(%arg0: i32, %arg1: i32) -> (i32, i32) {
    %c0_i32 = arith.constant 0 : i32
    %c0_i32_0 = arith.constant 0 : i32
    %c0_i32_1 = arith.constant 0 : i32
    return %c0_i32, %c0_i32_0 : i32, i32
  }
  func.func @transform_3(%arg0: i32, %arg1: i32) -> (i32, i32) {
    %c0_i32 = arith.constant 0 : i32
    %c0_i32_0 = arith.constant 0 : i32
    %c0_i32_1 = arith.constant 0 : i32
    return %c0_i32, %c0_i32_0 : i32, i32
  }
  func.func @transform_4(%arg0: i32, %arg1: i32) -> (i32, i32, i32, i32) {
    %c0_i32 = arith.constant 0 : i32
    %c0_i32_0 = arith.constant 0 : i32
    %c0_i32_1 = arith.constant 0 : i32
    return %arg0, %c0_i32, %arg1, %c0_i32_0 : i32, i32, i32, i32
  }
}

</mosaic_0001>

<llo_original>
// kernel: tpu_custom_call.1
$region0: #{tpu_custom_call.1}
  #allocation0 [shape = 'u32[]', space=smem, size = 0x4, offset = 0x4, fixed_abs, tag = 'smem constant byte address 0x4 - core index']
  #allocation1 [shape = 'u32[144,128]{1,0:T(1,128)}', space=vmem, size = 0x12000, scoped, tag = 'internal scratch']
  %s0 = inlined_call_operand.hbm [shape: f32[6,4,16,16], index: 0, kind: input, shape index: {}]
  %s1 = inlined_call_operand.hbm [shape: f32[32,40], index: 1, kind: input, shape index: {}]
  %s2 = inlined_call_operand.hbm [shape: f32[8,32], index: 2, kind: input, shape index: {}]
  %s3 = inlined_call_operand.vmem [shape: f32[3,48], index: 3, kind: input, shape index: {}]
  %s4 = inlined_call_operand.vmem [shape: f32[2,3,24,10], index: 4, kind: output, shape index: {}]
  %s5 = sld [smem:[#allocation0]]
  $region95: #{tpu_custom_call.1} parent=0
    _
  %s7 = ssub.s32 1, %s5
  %s8 = scalar_select 0, %s7, %s5
  $region1: #{tpu_custom_call.1} parent=0
    #allocation2 [shape = 'u8[65536]{0}', space=vmem, size = 0x10000, scoped, tag = 'input window, operand 0']
    #allocation3 [shape = 's32[2]{0}', space=sflag, size = 0x8, scoped, tag = 'scoped memory for tpu_custom_call.1']
    #allocation4 [shape = 'u8[16384]{0}', space=vmem, size = 0x4000, scoped, tag = 'input window, operand 1, single buffered']
    #allocation5 [shape = 's32[1]{0}', space=sflag, size = 0x4, scoped, tag = 'scoped memory for tpu_custom_call.1']
    #allocation6 [shape = 'u8[4096]{0}', space=vmem, size = 0x1000, scoped, tag = 'input window, operand 2, single buffered']
    #allocation7 [shape = 'u8[24576]{0}', space=vmem, size = 0x6000, scoped, tag = 'output window, operand 0']
    %9 = vsyncpa [#allocation3], 0
    %s10 = scalar_lea.sflag [#allocation3], 1
    %11 = vsyncpa %s10, 0
    %12 = vsyncpa [#allocation5], 0
    loop: start=0, step=1, limit=8
    $region2: #{tpu_custom_call.1} parent=1 // loop_pre_header
      _
    $region3: #{tpu_custom_call.1} parent=1 // loop_header
      %s14 = sphi 0, %s18
      %p15 = scmp.ge.s32.totalorder %s14, 8
      %s21 = sphi 0, %s33
      %s22 = sphi 0, %s29
      %s23 = sphi 0, %s21
      %s24 = sphi 0, %s22
      %s25 = sphi 0, %s23
      %s26 = sphi 0, %s24
      %s40 = sphi 0, %s42
      %s43 = sphi 0, %s40
      %s44 = sphi 0, %s43
      %s60 = sphi 0, %s44
      %s64 = sphi 0, %s64
      %s66 = sphi 0, %s64
      %s67 = sphi 0, %s66
      %s81 = sphi 0, %s67
      %s85 = sphi 0, %s85
      %s87 = sphi 0, %s85
      %s88 = sphi 0, %s87
      %s102 = sphi 0, %s88
      %s106 = sphi 0, %s106
      %s108 = sphi 0, %s106
      %s109 = sphi 0, %s108
      %s123 = sphi 0, %s109
      %s131 = sphi 0, %s133
      %s134 = sphi 0, %s131
      %s135 = sphi 0, %s134
      %s151 = sphi 0, %s135
    $region4: #{tpu_custom_call.1} parent=1 // loop_header_branch
      %17 = sbr.rel (%p15) target = $region8
    $region5: #{tpu_custom_call.1} parent=1 // loop_body
      %s19 = ssub.s32 %s14, 1
      %s20 = ssub.s32 %s14, 2
      %s27 = sadd.s32 1, %s22
      %p28 = scmp.ge.s32.totalorder %s27, 3
      %s29 = scalar_select %p28, 0, %s27
      %s30 = sadd.s32 1, %s21
      %s31 = scalar_select %p28, %s30, %s21
      %p32 = scmp.ge.s32.totalorder %s31, 2
      %s33 = scalar_select %p32, 0, %s31
      %s34 = smul.u32 %s21, 3
      %s35 = sadd.s32 %s34, %s22
      %s36 = smul.u32 %s33, 3
      %s37 = sadd.s32 %s36, %s29
      %s38 = ssub.s32 %s35, %s37
      %p39 = scmp.eq.s32.totalorder %s38, 0
      %s41 = sadd.s32 %s40, 1
      %s42 = scalar_select %p39, %s40, %s41
      %p45 = pneg %p39
      %p46 = scmp.eq.s32.totalorder %s14, 5
      %p47 = por %p45, %p46
      %p48 = scmp.ne.s32.totalorder %s40, %s43
      %p49 = scmp.eq.s32.totalorder %s14, 0
      %p50 = por %p48, %p49
      %p51 = scmp.ne.s32.totalorder %s40, %s43
      %p52 = scmp.eq.s32.totalorder %s19, 5
      %p53 = por %p51, %p52
      %p54 = scmp.ne.s32.totalorder %s43, %s44
      %p55 = scmp.eq.s32.totalorder %s19, 0
      %p56 = por %p54, %p55
      %p57 = scmp.ne.s32.totalorder %s43, %s44
      %p58 = scmp.eq.s32.totalorder %s20, 5
      %p59 = por %p57, %p58
      %p61 = scmp.ne.s32.totalorder %s44, %s60
      %p62 = scmp.eq.s32.totalorder %s20, 0
      %p63 = por %p61, %p62
      %s65 = sadd.s32 %s64, 1
      %p68 = scmp.eq.s32.totalorder %s14, 5
      %p69 = scmp.ne.s32.totalorder %s64, %s66
      %p70 = scmp.eq.s32.totalorder %s14, 0
      %p71 = por %p69, %p70
      %p72 = scmp.ne.s32.totalorder %s64, %s66
      %p73 = scmp.eq.s32.totalorder %s19, 5
      %p74 = por %p72, %p73
      %p75 = scmp.ne.s32.totalorder %s66, %s67
      %p76 = scmp.eq.s32.totalorder %s19, 0
      %p77 = por %p75, %p76
      %p78 = scmp.ne.s32.totalorder %s66, %s67
      %p79 = scmp.eq.s32.totalorder %s20, 5
      %p80 = por %p78, %p79
      %p82 = scmp.ne.s32.totalorder %s67, %s81
      %p83 = scmp.eq.s32.totalorder %s20, 0
      %p84 = por %p82, %p83
      %s86 = sadd.s32 %s85, 1
      %p89 = scmp.eq.s32.totalorder %s14, 5
      %p90 = scmp.ne.s32.totalorder %s85, %s87
      %p91 = scmp.eq.s32.totalorder %s14, 0
      %p92 = por %p90, %p91
      %p93 = scmp.ne.s32.totalorder %s85, %s87
      %p94 = scmp.eq.s32.totalorder %s19, 5
      %p95 = por %p93, %p94
      %p96 = scmp.ne.s32.totalorder %s87, %s88
      %p97 = scmp.eq.s32.totalorder %s19, 0
      %p98 = por %p96, %p97
      %p99 = scmp.ne.s32.totalorder %s87, %s88
      %p100 = scmp.eq.s32.totalorder %s20, 5
      %p101 = por %p99, %p100
      %p103 = scmp.ne.s32.totalorder %s88, %s102
      %p104 = scmp.eq.s32.totalorder %s20, 0
      %p105 = por %p103, %p104
      %s107 = sadd.s32 %s106, 1
      %p110 = scmp.eq.s32.totalorder %s14, 5
      %p111 = scmp.ne.s32.totalorder %s106, %s108
      %p112 = scmp.eq.s32.totalorder %s14, 0
      %p113 = por %p111, %p112
      %p114 = scmp.ne.s32.totalorder %s106, %s108
      %p115 = scmp.eq.s32.totalorder %s19, 5
      %p116 = por %p114, %p115
      %p117 = scmp.ne.s32.totalorder %s108, %s109
      %p118 = scmp.eq.s32.totalorder %s19, 0
      %p119 = por %p117, %p118
      %p120 = scmp.ne.s32.totalorder %s108, %s109
      %p121 = scmp.eq.s32.totalorder %s20, 5
      %p122 = por %p120, %p121
      %p124 = scmp.ne.s32.totalorder %s109, %s123
      %p125 = scmp.eq.s32.totalorder %s20, 0
      %p126 = por %p124, %p125
      %s127 = ssub.s32 %s21, %s33
      %s128 = ssub.s32 %s22, %s29
      %s129 = sor.u32 %s127, %s128
      %p130 = scmp.eq.s32.totalorder %s129, 0
      %s132 = sadd.s32 %s131, 1
      %s133 = scalar_select %p130, %s131, %s132
      %p136 = pneg %p130
      %p137 = scmp.eq.s32.totalorder %s14, 5
      %p138 = por %p136, %p137
      %p139 = scmp.ne.s32.totalorder %s131, %s134
      %p140 = scmp.eq.s32.totalorder %s14, 0
      %p141 = por %p139, %p140
      %p142 = scmp.ne.s32.totalorder %s131, %s134
      %p143 = scmp.eq.s32.totalorder %s19, 5
      %p144 = por %p142, %p143
      %p145 = scmp.ne.s32.totalorder %s134, %s135
      %p146 = scmp.eq.s32.totalorder %s19, 0
      %p147 = por %p145, %p146
      %p148 = scmp.ne.s32.totalorder %s134, %s135
      %p149 = scmp.eq.s32.totalorder %s20, 5
      %p150 = por %p148, %p149
      %p152 = scmp.ne.s32.totalorder %s135, %s151
      %p153 = scmp.eq.s32.totalorder %s20, 0
      %p154 = por %p152, %p153
      %p155 = scmp.le.s32.totalorder 1, %s14
      %p156 = scmp.lt.s32.totalorder %s14, 7
      %p157 = pnand %p155, %p156
      %p158 = pneg %p157
      // Predicated region
      $region9: #{tpu_custom_call.1} parent=5 // pred_check
        _
      $region10: #{tpu_custom_call.1} parent=5 // pred_check_branch
        %160 = sbr.rel (%p157) target = $region12
      $region11: #{tpu_custom_call.1} parent=5 // pred_region
        %s161 = ssub.s32 %s14, 1
        // Predicated region
        $region13: #{tpu_custom_call.1} parent=11 // pred_check
          %p162 = pneg %p77
        $region14: #{tpu_custom_call.1} parent=11 // pred_check_branch
          %164 = sbr.rel (%p162) target = $region16
        $region15: #{tpu_custom_call.1} parent=11 // pred_region
          %s166 = ssub.s32 512, 512
          %167 = vsyncadd [#allocation5], %s166
          %s168 = sshll.u32 [#allocation4], 4
          %s169 = int_to_ptr.vmem [resolvable:$true] %s168
          %174 = dma.hbm_to_vmem [thread:$0]  %s1, 512, %s169, [#allocation5], 128, 128, 8
        $region16: #{tpu_custom_call.1} parent=11 // pred_fallthru
          _
        // Predicated region
        $region17: #{tpu_custom_call.1} parent=11 // pred_check
          %p175 = pneg %p98
        $region18: #{tpu_custom_call.1} parent=11 // pred_check_branch
          %177 = sbr.rel (%p175) target = $region20
        $region19: #{tpu_custom_call.1} parent=11 // pred_region
          %s179 = ssub.s32 128, 128
          %180 = vsyncadd [#allocation5], %s179
          %s182 = sshll.u32 [#allocation6], 4
          %s183 = int_to_ptr.vmem [resolvable:$true] %s182
          %185 = dma.hbm_to_vmem [thread:$0]  %s2, 128, %s183, [#allocation5]
        $region20: #{tpu_custom_call.1} parent=11 // pred_fallthru
          _
        // Predicated region
        $region21: #{tpu_custom_call.1} parent=11 // pred_check
          %p186 = pneg %p119
        $region22: #{tpu_custom_call.1} parent=11 // pred_check_branch
          %188 = sbr.rel (%p186) target = $region24
        $region23: #{tpu_custom_call.1} parent=11 // pred_region
          _
        $region24: #{tpu_custom_call.1} parent=11 // pred_fallthru
          _
      $region12: #{tpu_custom_call.1} parent=5 // pred_fallthru
        _
      %p189 = scmp.lt.s32.totalorder %s14, 6
      // Predicated region
      $region25: #{tpu_custom_call.1} parent=5 // pred_check
        %p190 = pneg %p189
      $region26: #{tpu_custom_call.1} parent=5 // pred_check_branch
        %192 = sbr.rel (%p190) target = $region28
      $region27: #{tpu_custom_call.1} parent=5 // pred_region
        // Predicated region
        $region29: #{tpu_custom_call.1} parent=27 // pred_check
          %p193 = pneg %p50
        $region30: #{tpu_custom_call.1} parent=27 // pred_check_branch
          %195 = sbr.rel (%p193) target = $region32
        $region31: #{tpu_custom_call.1} parent=27 // pred_region
          %s196 = sand.u32 %s40, 1
          %s197 = scalar_lea.sflag [#allocation3], %s196
          %s198 = sand.u32 %s40, 1
          %s199 = smul.addr %s198, 64
          %s200 = scalar_lea.vmem [#allocation2], %s199
          %s201 = smul.u32 %s21, 3
          %s202 = sadd.s32 %s201, %s22
          %s204 = ssub.s32 1024, 1024
          %205 = vsyncadd %s197, %s204
          %s206 = smul.addr %s202, 8
          %s207 = smul.addr %s206, 128
          %s208 = scalar_lea.hbm %s0, %s207
          %s209 = sshll.u32 %s200, 4
          %s210 = int_to_ptr.vmem [resolvable:$true] %s209
          %215 = dma.hbm_to_vmem [thread:$0]  %s208, 1024, %s210, %s197, 128, 128, 8
        $region32: #{tpu_custom_call.1} parent=27 // pred_fallthru
          _
      $region28: #{tpu_custom_call.1} parent=5 // pred_fallthru
        _
      %p216 = scmp.le.s32.totalorder 1, %s14
      %p217 = scmp.lt.s32.totalorder %s14, 7
      %p218 = pnand %p216, %p217
      %p219 = pneg %p218
      // Predicated region
      $region33: #{tpu_custom_call.1} parent=5 // pred_check
        _
      $region34: #{tpu_custom_call.1} parent=5 // pred_check_branch
        %221 = sbr.rel (%p218) target = $region36
      $region35: #{tpu_custom_call.1} parent=5 // pred_region
        %s222 = ssub.s32 %s14, 1
        %s223 = sand.u32 %s43, 1
        %s224 = scalar_lea.sflag [#allocation3], %s223
        %s225 = sand.u32 %s43, 1
        %s226 = smul.addr %s225, 64
        %s227 = scalar_lea.vmem [#allocation2], %s226
        // Predicated region
        $region37: #{tpu_custom_call.1} parent=35 // pred_check
          %p228 = pneg %p56
        $region38: #{tpu_custom_call.1} parent=35 // pred_check_branch
          %230 = sbr.rel (%p228) target = $region40
        $region39: #{tpu_custom_call.1} parent=35 // pred_region
          %231 = dma.done %s224, 1024
        $region40: #{tpu_custom_call.1} parent=35 // pred_fallthru
          _
        // Predicated region
        $region41: #{tpu_custom_call.1} parent=35 // pred_check
          %p232 = pneg %p77
        $region42: #{tpu_custom_call.1} parent=35 // pred_check_branch
          %234 = sbr.rel (%p232) target = $region44
        $region43: #{tpu_custom_call.1} parent=35 // pred_region
          %235 = dma.done [#allocation5], 512
        $region44: #{tpu_custom_call.1} parent=35 // pred_fallthru
          _
        // Predicated region
        $region45: #{tpu_custom_call.1} parent=35 // pred_check
          %p236 = pneg %p98
        $region46: #{tpu_custom_call.1} parent=35 // pred_check_branch
          %238 = sbr.rel (%p236) target = $region48
        $region47: #{tpu_custom_call.1} parent=35 // pred_region
          %239 = dma.done [#allocation5], 128
        $region48: #{tpu_custom_call.1} parent=35 // pred_fallthru
          _
        %s240 = sand.u32 %s43, 1
        %s241 = scalar_lea.sflag [#allocation3], %s240
        %s242 = sand.u32 %s43, 1
        %s243 = smul.addr %s242, 64
        %s244 = scalar_lea.vmem [#allocation2], %s243
        %p245 = pneg %p56
        %p246 = pneg %p53
        %p247 = pneg %p77
        %p248 = pneg %p74
        %p249 = pneg %p98
        %p250 = pneg %p95
        %p251 = pneg %p119
        %p252 = pneg %p116
        %p253 = pneg %p147
        %p254 = pneg %p144
        %s255 = sand.u32 %s134, 1
        %s256 = sand.u32 %s134, 1
        %s257 = smul.addr %s256, 24
        %s258 = scalar_lea.vmem [#allocation7], %s257
        %s259 = smul.u32 %s23, 3
        %s260 = sadd.s32 %s259, %s24
        %v261 = vld [vmem:[%s227] sm:$0xff]
        %v262 = vld [vmem:[%s227 + $0x8] sm:$0xff]
        %v263 = vld [vmem:[%s227 + $0x10] sm:$0xff]
        %v264 = vld [vmem:[%s227 + $0x18] sm:$0xff]
        %v265 = vld [vmem:[%s227 + $0x20] sm:$0xff]
        %v266 = vld [vmem:[%s227 + $0x28] sm:$0xff]
        %v267 = vld [vmem:[%s227 + $0x30] sm:$0xff]
        %v268 = vld [vmem:[%s227 + $0x38] sm:$0xff]
        %v269 = vld [vmem:[#allocation4] sm:$0xff]
        %v270 = vld [vmem:[#allocation4 + $0x8] sm:$0xff]
        %v271 = vld [vmem:[#allocation4 + $0x10] sm:$0xff]
        %v272 = vld [vmem:[#allocation4 + $0x18] sm:$0xff]
        %281 = vrot.lane.b32.xlu0 %v261, 127
        %v282 = vpop.permute.xlu0 %281
        %283 = vrot.lane.b32.xlu0 %v262, 127
        %v284 = vpop.permute.xlu0 %283
        %285 = vrot.lane.b32.xlu0 %v263, 127
        %v286 = vpop.permute.xlu0 %285
        %287 = vrot.lane.b32.xlu0 %v264, 127
        %v288 = vpop.permute.xlu0 %287
        %289 = vrot.lane.b32.xlu0 %v265, 127
        %v290 = vpop.permute.xlu0 %289
        %291 = vrot.lane.b32.xlu0 %v266, 127
        %v292 = vpop.permute.xlu0 %291
        %293 = vrot.lane.b32.xlu0 %v267, 127
        %v294 = vpop.permute.xlu0 %293
        %295 = vrot.lane.b32.xlu0 %v268, 127
        %v296 = vpop.permute.xlu0 %295
        %305 = vrot.lane.b32.xlu0 %v261, 126
        %v306 = vpop.permute.xlu0 %305
        %307 = vrot.lane.b32.xlu0 %v262, 126
        %v308 = vpop.permute.xlu0 %307
        %309 = vrot.lane.b32.xlu0 %v263, 126
        %v310 = vpop.permute.xlu0 %309
        %311 = vrot.lane.b32.xlu0 %v264, 126
        %v312 = vpop.permute.xlu0 %311
        %313 = vrot.lane.b32.xlu0 %v265, 126
        %v314 = vpop.permute.xlu0 %313
        %315 = vrot.lane.b32.xlu0 %v266, 126
        %v316 = vpop.permute.xlu0 %315
        %317 = vrot.lane.b32.xlu0 %v267, 126
        %v318 = vpop.permute.xlu0 %317
        %319 = vrot.lane.b32.xlu0 %v268, 126
        %v320 = vpop.permute.xlu0 %319
        %329 = vrot.lane.b32.xlu0 %v261, 125
        %v330 = vpop.permute.xlu0 %329
        %331 = vrot.lane.b32.xlu0 %v262, 125
        %v332 = vpop.permute.xlu0 %331
        %333 = vrot.lane.b32.xlu0 %v263, 125
        %v334 = vpop.permute.xlu0 %333
        %335 = vrot.lane.b32.xlu0 %v264, 125
        %v336 = vpop.permute.xlu0 %335
        %337 = vrot.lane.b32.xlu0 %v265, 125
        %v338 = vpop.permute.xlu0 %337
        %339 = vrot.lane.b32.xlu0 %v266, 125
        %v340 = vpop.permute.xlu0 %339
        %341 = vrot.lane.b32.xlu0 %v267, 125
        %v342 = vpop.permute.xlu0 %341
        %343 = vrot.lane.b32.xlu0 %v268, 125
        %v344 = vpop.permute.xlu0 %343
        %353 = vrot.lane.b32.xlu0 %v261, 124
        %v354 = vpop.permute.xlu0 %353
        %355 = vrot.lane.b32.xlu0 %v262, 124
        %v356 = vpop.permute.xlu0 %355
        %357 = vrot.lane.b32.xlu0 %v263, 124
        %v358 = vpop.permute.xlu0 %357
        %359 = vrot.lane.b32.xlu0 %v264, 124
        %v360 = vpop.permute.xlu0 %359
        %361 = vrot.lane.b32.xlu0 %v265, 124
        %v362 = vpop.permute.xlu0 %361
        %363 = vrot.lane.b32.xlu0 %v266, 124
        %v364 = vpop.permute.xlu0 %363
        %365 = vrot.lane.b32.xlu0 %v267, 124
        %v366 = vpop.permute.xlu0 %365
        %367 = vrot.lane.b32.xlu0 %v268, 124
        %v368 = vpop.permute.xlu0 %367
        %vm377 = vcmask 1043456
        %v378 = vrot.slane %v261, 4
        %v379 = vrot.slane %v262, 4
        %v380 = vsel %vm377, %v378, %v379
        %v381 = vrot.slane %v263, 4
        %v382 = vrot.slane %v264, 4
        %v383 = vsel %vm377, %v381, %v382
        %v384 = vrot.slane %v265, 4
        %v385 = vrot.slane %v266, 4
        %v386 = vsel %vm377, %v384, %v385
        %v387 = vrot.slane %v267, 4
        %v388 = vrot.slane %v268, 4
        %v389 = vsel %vm377, %v387, %v388
        %398 = vrot.lane.b32.xlu0 %v380, 127
        %v399 = vpop.permute.xlu0 %398
        %400 = vrot.lane.b32.xlu0 %v379, 127
        %v401 = vpop.permute.xlu0 %400
        %402 = vrot.lane.b32.xlu0 %v383, 127
        %v403 = vpop.permute.xlu0 %402
        %404 = vrot.lane.b32.xlu0 %v382, 127
        %v405 = vpop.permute.xlu0 %404
        %406 = vrot.lane.b32.xlu0 %v386, 127
        %v407 = vpop.permute.xlu0 %406
        %408 = vrot.lane.b32.xlu0 %v385, 127
        %v409 = vpop.permute.xlu0 %408
        %410 = vrot.lane.b32.xlu0 %v389, 127
        %v411 = vpop.permute.xlu0 %410
        %412 = vrot.lane.b32.xlu0 %v388, 127
        %v413 = vpop.permute.xlu0 %412
        %422 = vrot.lane.b32.xlu0 %v380, 126
        %v423 = vpop.permute.xlu0 %422
        %424 = vrot.lane.b32.xlu0 %v379, 126
        %v425 = vpop.permute.xlu0 %424
        %426 = vrot.lane.b32.xlu0 %v383, 126
        %v427 = vpop.permute.xlu0 %426
        %428 = vrot.lane.b32.xlu0 %v382, 126
        %v429 = vpop.permute.xlu0 %428
        %430 = vrot.lane.b32.xlu0 %v386, 126
        %v431 = vpop.permute.xlu0 %430
        %432 = vrot.lane.b32.xlu0 %v385, 126
        %v433 = vpop.permute.xlu0 %432
        %434 = vrot.lane.b32.xlu0 %v389, 126
        %v435 = vpop.permute.xlu0 %434
        %436 = vrot.lane.b32.xlu0 %v388, 126
        %v437 = vpop.permute.xlu0 %436
        %446 = vrot.lane.b32.xlu0 %v380, 125
        %v447 = vpop.permute.xlu0 %446
        %448 = vrot.lane.b32.xlu0 %v379, 125
        %v449 = vpop.permute.xlu0 %448
        %450 = vrot.lane.b32.xlu0 %v383, 125
        %v451 = vpop.permute.xlu0 %450
        %452 = vrot.lane.b32.xlu0 %v382, 125
        %v453 = vpop.permute.xlu0 %452
        %454 = vrot.lane.b32.xlu0 %v386, 125
        %v455 = vpop.permute.xlu0 %454
        %456 = vrot.lane.b32.xlu0 %v385, 125
        %v457 = vpop.permute.xlu0 %456
        %458 = vrot.lane.b32.xlu0 %v389, 125
        %v459 = vpop.permute.xlu0 %458
        %460 = vrot.lane.b32.xlu0 %v388, 125
        %v461 = vpop.permute.xlu0 %460
        %470 = vrot.lane.b32.xlu0 %v380, 124
        %v471 = vpop.permute.xlu0 %470
        %472 = vrot.lane.b32.xlu0 %v379, 124
        %v473 = vpop.permute.xlu0 %472
        %474 = vrot.lane.b32.xlu0 %v383, 124
        %v475 = vpop.permute.xlu0 %474
        %476 = vrot.lane.b32.xlu0 %v382, 124
        %v477 = vpop.permute.xlu0 %476
        %478 = vrot.lane.b32.xlu0 %v386, 124
        %v479 = vpop.permute.xlu0 %478
        %480 = vrot.lane.b32.xlu0 %v385, 124
        %v481 = vpop.permute.xlu0 %480
        %482 = vrot.lane.b32.xlu0 %v389, 124
        %v483 = vpop.permute.xlu0 %482
        %484 = vrot.lane.b32.xlu0 %v388, 124
        %v485 = vpop.permute.xlu0 %484
        %v494 = vcombine.low %v261, %v265
        %v495 = vcombine.high %v261, %v265
        %v497 = vunpack.c.l.s4 1983009808
        %v498 = vunpack.c.0.s8 %v497
        %v499 = vlaneseq
        %v500 = vshrl.u32 %v499, 7
        %v501 = vsub.s32 %v498, %v500
        %v502 = vrot.slane %v494, %v501
        %v504 = vunpack.c.l.s4 1983009808
        %v505 = vunpack.c.0.s8 %v504
        %v506 = vlaneseq
        %v507 = vshrl.u32 %v506, 7
        %v508 = vsub.s32 %v505, %v507
        %v509 = vrot.slane %v495, %v508
        %v510 = vcombine.low %v263, %v267
        %v511 = vcombine.high %v263, %v267
        %v513 = vunpack.c.l.s4 1983009808
        %v514 = vunpack.c.0.s8 %v513
        %v515 = vlaneseq
        %v516 = vshrl.u32 %v515, 7
        %v517 = vsub.s32 %v514, %v516
        %v518 = vrot.slane %v510, %v517
        %v520 = vunpack.c.l.s4 1983009808
        %v521 = vunpack.c.0.s8 %v520
        %v522 = vlaneseq
        %v523 = vshrl.u32 %v522, 7
        %v524 = vsub.s32 %v521, %v523
        %v525 = vrot.slane %v511, %v524
        %v526 = vcombine.low %v282, %v290
        %v527 = vcombine.high %v282, %v290
        %v529 = vunpack.c.l.s4 1983009808
        %v530 = vunpack.c.0.s8 %v529
        %v531 = vlaneseq
        %v532 = vshrl.u32 %v531, 7
        %v533 = vsub.s32 %v530, %v532
        %v534 = vrot.slane %v526, %v533
        %v536 = vunpack.c.l.s4 1983009808
        %v537 = vunpack.c.0.s8 %v536
        %v538 = vlaneseq
        %v539 = vshrl.u32 %v538, 7
        %v540 = vsub.s32 %v537, %v539
        %v541 = vrot.slane %v527, %v540
        %v542 = vcombine.low %v286, %v294
        %v543 = vcombine.high %v286, %v294
        %v545 = vunpack.c.l.s4 1983009808
        %v546 = vunpack.c.0.s8 %v545
        %v547 = vlaneseq
        %v548 = vshrl.u32 %v547, 7
        %v549 = vsub.s32 %v546, %v548
        %v550 = vrot.slane %v542, %v549
        %v552 = vunpack.c.l.s4 1983009808
        %v553 = vunpack.c.0.s8 %v552
        %v554 = vlaneseq
        %v555 = vshrl.u32 %v554, 7
        %v556 = vsub.s32 %v553, %v555
        %v557 = vrot.slane %v543, %v556
        %v558 = vcombine.low %v502, %v518
        %v559 = vcombine.high %v502, %v518
        %v561 = vunpack.c.l.s4 1934713408
        %v562 = vunpack.c.0.s8 %v561
        %v563 = vlaneseq
        %v564 = vshrl.u32 %v563, 7
        %v565 = vsub.s32 %v562, %v564
        %v566 = vrot.slane %v558, %v565
        %v568 = vunpack.c.l.s4 1934713408
        %v569 = vunpack.c.0.s8 %v568
        %v570 = vlaneseq
        %v571 = vshrl.u32 %v570, 7
        %v572 = vsub.s32 %v569, %v571
        %v573 = vrot.slane %v559, %v572
        %v574 = vcombine.low %v509, %v525
        %v575 = vcombine.high %v509, %v525
        %v577 = vunpack.c.l.s4 1934713408
        %v578 = vunpack.c.0.s8 %v577
        %v579 = vlaneseq
        %v580 = vshrl.u32 %v579, 7
        %v581 = vsub.s32 %v578, %v580
        %v582 = vrot.slane %v574, %v581
        %v584 = vunpack.c.l.s4 1934713408
        %v585 = vunpack.c.0.s8 %v584
        %v586 = vlaneseq
        %v587 = vshrl.u32 %v586, 7
        %v588 = vsub.s32 %v585, %v587
        %v589 = vrot.slane %v575, %v588
        %v590 = vcombine.low %v534, %v550
        %v591 = vcombine.high %v534, %v550
        %v593 = vunpack.c.l.s4 1934713408
        %v594 = vunpack.c.0.s8 %v593
        %v595 = vlaneseq
        %v596 = vshrl.u32 %v595, 7
        %v597 = vsub.s32 %v594, %v596
        %v598 = vrot.slane %v590, %v597
        %v600 = vunpack.c.l.s4 1934713408
        %v601 = vunpack.c.0.s8 %v600
        %v602 = vlaneseq
        %v603 = vshrl.u32 %v602, 7
        %v604 = vsub.s32 %v601, %v603
        %v605 = vrot.slane %v591, %v604
        %v606 = vcombine.low %v541, %v557
        %v607 = vcombine.high %v541, %v557
        %v609 = vunpack.c.l.s4 1934713408
        %v610 = vunpack.c.0.s8 %v609
        %v611 = vlaneseq
        %v612 = vshrl.u32 %v611, 7
        %v613 = vsub.s32 %v610, %v612
        %v614 = vrot.slane %v606, %v613
        %v616 = vunpack.c.l.s4 1934713408
        %v617 = vunpack.c.0.s8 %v616
        %v618 = vlaneseq
        %v619 = vshrl.u32 %v618, 7
        %v620 = vsub.s32 %v617, %v619
        %v621 = vrot.slane %v607, %v620
        %v622 = vcombine.low %v566, %v598
        %v623 = vcombine.high %v566, %v598
        %v624 = vcombine.low %v573, %v605
        %v625 = vcombine.high %v573, %v605
        %v626 = vcombine.low %v582, %v614
        %v627 = vcombine.high %v582, %v614
        %v628 = vcombine.low %v589, %v621
        %v629 = vcombine.high %v589, %v621
        %v630 = vcombine.low %v306, %v314
        %v631 = vcombine.high %v306, %v314
        %v633 = vunpack.c.l.s4 1983009808
        %v634 = vunpack.c.0.s8 %v633
        %v635 = vlaneseq
        %v636 = vshrl.u32 %v635, 7
        %v637 = vsub.s32 %v634, %v636
        %v638 = vrot.slane %v630, %v637
        %v640 = vunpack.c.l.s4 1983009808
        %v641 = vunpack.c.0.s8 %v640
        %v642 = vlaneseq
        %v643 = vshrl.u32 %v642, 7
        %v644 = vsub.s32 %v641, %v643
        %v645 = vrot.slane %v631, %v644
        %v646 = vcombine.low %v310, %v318
        %v647 = vcombine.high %v310, %v318
        %v649 = vunpack.c.l.s4 1983009808
        %v650 = vunpack.c.0.s8 %v649
        %v651 = vlaneseq
        %v652 = vshrl.u32 %v651, 7
        %v653 = vsub.s32 %v650, %v652
        %v654 = vrot.slane %v646, %v653
        %v656 = vunpack.c.l.s4 1983009808
        %v657 = vunpack.c.0.s8 %v656
        %v658 = vlaneseq
        %v659 = vshrl.u32 %v658, 7
        %v660 = vsub.s32 %v657, %v659
        %v661 = vrot.slane %v647, %v660
        %v662 = vcombine.low %v330, %v338
        %v663 = vcombine.high %v330, %v338
        %v665 = vunpack.c.l.s4 1983009808
        %v666 = vunpack.c.0.s8 %v665
        %v667 = vlaneseq
        %v668 = vshrl.u32 %v667, 7
        %v669 = vsub.s32 %v666, %v668
        %v670 = vrot.slane %v662, %v669
        %v672 = vunpack.c.l.s4 1983009808
        %v673 = vunpack.c.0.s8 %v672
        %v674 = vlaneseq
        %v675 = vshrl.u32 %v674, 7
        %v676 = vsub.s32 %v673, %v675
        %v677 = vrot.slane %v663, %v676
        %v678 = vcombine.low %v334, %v342
        %v679 = vcombine.high %v334, %v342
        %v681 = vunpack.c.l.s4 1983009808
        %v682 = vunpack.c.0.s8 %v681
        %v683 = vlaneseq
        %v684 = vshrl.u32 %v683, 7
        %v685 = vsub.s32 %v682, %v684
        %v686 = vrot.slane %v678, %v685
        %v688 = vunpack.c.l.s4 1983009808
        %v689 = vunpack.c.0.s8 %v688
        %v690 = vlaneseq
        %v691 = vshrl.u32 %v690, 7
        %v692 = vsub.s32 %v689, %v691
        %v693 = vrot.slane %v679, %v692
        %v694 = vcombine.low %v638, %v654
        %v695 = vcombine.high %v638, %v654
        %v697 = vunpack.c.l.s4 1934713408
        %v698 = vunpack.c.0.s8 %v697
        %v699 = vlaneseq
        %v700 = vshrl.u32 %v699, 7
        %v701 = vsub.s32 %v698, %v700
        %v702 = vrot.slane %v694, %v701
        %v704 = vunpack.c.l.s4 1934713408
        %v705 = vunpack.c.0.s8 %v704
        %v706 = vlaneseq
        %v707 = vshrl.u32 %v706, 7
        %v708 = vsub.s32 %v705, %v707
        %v709 = vrot.slane %v695, %v708
        %v710 = vcombine.low %v645, %v661
        %v711 = vcombine.high %v645, %v661
        %v713 = vunpack.c.l.s4 1934713408
        %v714 = vunpack.c.0.s8 %v713
        %v715 = vlaneseq
        %v716 = vshrl.u32 %v715, 7
        %v717 = vsub.s32 %v714, %v716
        %v718 = vrot.slane %v710, %v717
        %v720 = vunpack.c.l.s4 1934713408
        %v721 = vunpack.c.0.s8 %v720
        %v722 = vlaneseq
        %v723 = vshrl.u32 %v722, 7
        %v724 = vsub.s32 %v721, %v723
        %v725 = vrot.slane %v711, %v724
        %v726 = vcombine.low %v670, %v686
        %v727 = vcombine.high %v670, %v686
        %v729 = vunpack.c.l.s4 1934713408
        %v730 = vunpack.c.0.s8 %v729
        %v731 = vlaneseq
        %v732 = vshrl.u32 %v731, 7
        %v733 = vsub.s32 %v730, %v732
        %v734 = vrot.slane %v726, %v733
        %v736 = vunpack.c.l.s4 1934713408
        %v737 = vunpack.c.0.s8 %v736
        %v738 = vlaneseq
        %v739 = vshrl.u32 %v738, 7
        %v740 = vsub.s32 %v737, %v739
        %v741 = vrot.slane %v727, %v740
        %v742 = vcombine.low %v677, %v693
        %v743 = vcombine.high %v677, %v693
        %v745 = vunpack.c.l.s4 1934713408
        %v746 = vunpack.c.0.s8 %v745
        %v747 = vlaneseq
        %v748 = vshrl.u32 %v747, 7
        %v749 = vsub.s32 %v746, %v748
        %v750 = vrot.slane %v742, %v749
        %v752 = vunpack.c.l.s4 1934713408
        %v753 = vunpack.c.0.s8 %v752
        %v754 = vlaneseq
        %v755 = vshrl.u32 %v754, 7
        %v756 = vsub.s32 %v753, %v755
        %v757 = vrot.slane %v743, %v756
        %v758 = vcombine.low %v702, %v734
        %v759 = vcombine.high %v702, %v734
        %v760 = vcombine.low %v709, %v741
        %v761 = vcombine.high %v709, %v741
        %v762 = vcombine.low %v718, %v750
        %v763 = vcombine.high %v718, %v750
        %v764 = vcombine.low %v725, %v757
        %v765 = vcombine.high %v725, %v757
        %v766 = vcombine.low %v354, %v362
        %v767 = vcombine.high %v354, %v362
        %v769 = vunpack.c.l.s4 1983009808
        %v770 = vunpack.c.0.s8 %v769
        %v771 = vlaneseq
        %v772 = vshrl.u32 %v771, 7
        %v773 = vsub.s32 %v770, %v772
        %v774 = vrot.slane %v766, %v773
        %v776 = vunpack.c.l.s4 1983009808
        %v777 = vunpack.c.0.s8 %v776
        %v778 = vlaneseq
        %v779 = vshrl.u32 %v778, 7
        %v780 = vsub.s32 %v777, %v779
        %v781 = vrot.slane %v767, %v780
        %v782 = vcombine.low %v358, %v366
        %v783 = vcombine.high %v358, %v366
        %v785 = vunpack.c.l.s4 1983009808
        %v786 = vunpack.c.0.s8 %v785
        %v787 = vlaneseq
        %v788 = vshrl.u32 %v787, 7
        %v789 = vsub.s32 %v786, %v788
        %v790 = vrot.slane %v782, %v789
        %v792 = vunpack.c.l.s4 1983009808
        %v793 = vunpack.c.0.s8 %v792
        %v794 = vlaneseq
        %v795 = vshrl.u32 %v794, 7
        %v796 = vsub.s32 %v793, %v795
        %v797 = vrot.slane %v783, %v796
        %v798 = vcombine.low %v380, %v386
        %v799 = vcombine.high %v380, %v386
        %v801 = vunpack.c.l.s4 1983009808
        %v802 = vunpack.c.0.s8 %v801
        %v803 = vlaneseq
        %v804 = vshrl.u32 %v803, 7
        %v805 = vsub.s32 %v802, %v804
        %v806 = vrot.slane %v798, %v805
        %v808 = vunpack.c.l.s4 1983009808
        %v809 = vunpack.c.0.s8 %v808
        %v810 = vlaneseq
        %v811 = vshrl.u32 %v810, 7
        %v812 = vsub.s32 %v809, %v811
        %v813 = vrot.slane %v799, %v812
        %v814 = vcombine.low %v383, %v389
        %v815 = vcombine.high %v383, %v389
        %v817 = vunpack.c.l.s4 1983009808
        %v818 = vunpack.c.0.s8 %v817
        %v819 = vlaneseq
        %v820 = vshrl.u32 %v819, 7
        %v821 = vsub.s32 %v818, %v820
        %v822 = vrot.slane %v814, %v821
        %v824 = vunpack.c.l.s4 1983009808
        %v825 = vunpack.c.0.s8 %v824
        %v826 = vlaneseq
        %v827 = vshrl.u32 %v826, 7
        %v828 = vsub.s32 %v825, %v827
        %v829 = vrot.slane %v815, %v828
        %v830 = vcombine.low %v774, %v790
        %v831 = vcombine.high %v774, %v790
        %v833 = vunpack.c.l.s4 1934713408
        %v834 = vunpack.c.0.s8 %v833
        %v835 = vlaneseq
        %v836 = vshrl.u32 %v835, 7
        %v837 = vsub.s32 %v834, %v836
        %v838 = vrot.slane %v830, %v837
        %v840 = vunpack.c.l.s4 1934713408
        %v841 = vunpack.c.0.s8 %v840
        %v842 = vlaneseq
        %v843 = vshrl.u32 %v842, 7
        %v844 = vsub.s32 %v841, %v843
        %v845 = vrot.slane %v831, %v844
        %v846 = vcombine.low %v781, %v797
        %v847 = vcombine.high %v781, %v797
        %v849 = vunpack.c.l.s4 1934713408
        %v850 = vunpack.c.0.s8 %v849
        %v851 = vlaneseq
        %v852 = vshrl.u32 %v851, 7
        %v853 = vsub.s32 %v850, %v852
        %v854 = vrot.slane %v846, %v853
        %v856 = vunpack.c.l.s4 1934713408
        %v857 = vunpack.c.0.s8 %v856
        %v858 = vlaneseq
        %v859 = vshrl.u32 %v858, 7
        %v860 = vsub.s32 %v857, %v859
        %v861 = vrot.slane %v847, %v860
        %v862 = vcombine.low %v806, %v822
        %v863 = vcombine.high %v806, %v822
        %v865 = vunpack.c.l.s4 1934713408
        %v866 = vunpack.c.0.s8 %v865
        %v867 = vlaneseq
        %v868 = vshrl.u32 %v867, 7
        %v869 = vsub.s32 %v866, %v868
        %v870 = vrot.slane %v862, %v869
        %v872 = vunpack.c.l.s4 1934713408
        %v873 = vunpack.c.0.s8 %v872
        %v874 = vlaneseq
        %v875 = vshrl.u32 %v874, 7
        %v876 = vsub.s32 %v873, %v875
        %v877 = vrot.slane %v863, %v876
        %v878 = vcombine.low %v813, %v829
        %v879 = vcombine.high %v813, %v829
        %v881 = vunpack.c.l.s4 1934713408
        %v882 = vunpack.c.0.s8 %v881
        %v883 = vlaneseq
        %v884 = vshrl.u32 %v883, 7
        %v885 = vsub.s32 %v882, %v884
        %v886 = vrot.slane %v878, %v885
        %v888 = vunpack.c.l.s4 1934713408
        %v889 = vunpack.c.0.s8 %v888
        %v890 = vlaneseq
        %v891 = vshrl.u32 %v890, 7
        %v892 = vsub.s32 %v889, %v891
        %v893 = vrot.slane %v879, %v892
        %v894 = vcombine.low %v838, %v870
        %v895 = vcombine.high %v838, %v870
        %v896 = vcombine.low %v845, %v877
        %v897 = vcombine.high %v845, %v877
        %v898 = vcombine.low %v854, %v886
        %v899 = vcombine.high %v854, %v886
        %v900 = vcombine.low %v861, %v893
        %v901 = vcombine.high %v861, %v893
        %v902 = vcombine.low %v399, %v407
        %v903 = vcombine.high %v399, %v407
        %v905 = vunpack.c.l.s4 1983009808
        %v906 = vunpack.c.0.s8 %v905
        %v907 = vlaneseq
        %v908 = vshrl.u32 %v907, 7
        %v909 = vsub.s32 %v906, %v908
        %v910 = vrot.slane %v902, %v909
        %v912 = vunpack.c.l.s4 1983009808
        %v913 = vunpack.c.0.s8 %v912
        %v914 = vlaneseq
        %v915 = vshrl.u32 %v914, 7
        %v916 = vsub.s32 %v913, %v915
        %v917 = vrot.slane %v903, %v916
        %v918 = vcombine.low %v403, %v411
        %v919 = vcombine.high %v403, %v411
        %v921 = vunpack.c.l.s4 1983009808
        %v922 = vunpack.c.0.s8 %v921
        %v923 = vlaneseq
        %v924 = vshrl.u32 %v923, 7
        %v925 = vsub.s32 %v922, %v924
        %v926 = vrot.slane %v918, %v925
        %v928 = vunpack.c.l.s4 1983009808
        %v929 = vunpack.c.0.s8 %v928
        %v930 = vlaneseq
        %v931 = vshrl.u32 %v930, 7
        %v932 = vsub.s32 %v929, %v931
        %v933 = vrot.slane %v919, %v932
        %v934 = vcombine.low %v423, %v431
        %v935 = vcombine.high %v423, %v431
        %v937 = vunpack.c.l.s4 1983009808
        %v938 = vunpack.c.0.s8 %v937
        %v939 = vlaneseq
        %v940 = vshrl.u32 %v939, 7
        %v941 = vsub.s32 %v938, %v940
        %v942 = vrot.slane %v934, %v941
        %v944 = vunpack.c.l.s4 1983009808
        %v945 = vunpack.c.0.s8 %v944
        %v946 = vlaneseq
        %v947 = vshrl.u32 %v946, 7
        %v948 = vsub.s32 %v945, %v947
        %v949 = vrot.slane %v935, %v948
        %v950 = vcombine.low %v427, %v435
        %v951 = vcombine.high %v427, %v435
        %v953 = vunpack.c.l.s4 1983009808
        %v954 = vunpack.c.0.s8 %v953
        %v955 = vlaneseq
        %v956 = vshrl.u32 %v955, 7
        %v957 = vsub.s32 %v954, %v956
        %v958 = vrot.slane %v950, %v957
        %v960 = vunpack.c.l.s4 1983009808
        %v961 = vunpack.c.0.s8 %v960
        %v962 = vlaneseq
        %v963 = vshrl.u32 %v962, 7
        %v964 = vsub.s32 %v961, %v963
        %v965 = vrot.slane %v951, %v964
        %v966 = vcombine.low %v910, %v926
        %v967 = vcombine.high %v910, %v926
        %v969 = vunpack.c.l.s4 1934713408
        %v970 = vunpack.c.0.s8 %v969
        %v971 = vlaneseq
        %v972 = vshrl.u32 %v971, 7
        %v973 = vsub.s32 %v970, %v972
        %v974 = vrot.slane %v966, %v973
        %v976 = vunpack.c.l.s4 1934713408
        %v977 = vunpack.c.0.s8 %v976
        %v978 = vlaneseq
        %v979 = vshrl.u32 %v978, 7
        %v980 = vsub.s32 %v977, %v979
        %v981 = vrot.slane %v967, %v980
        %v982 = vcombine.low %v917, %v933
        %v983 = vcombine.high %v917, %v933
        %v985 = vunpack.c.l.s4 1934713408
        %v986 = vunpack.c.0.s8 %v985
        %v987 = vlaneseq
        %v988 = vshrl.u32 %v987, 7
        %v989 = vsub.s32 %v986, %v988
        %v990 = vrot.slane %v982, %v989
        %v992 = vunpack.c.l.s4 1934713408
        %v993 = vunpack.c.0.s8 %v992
        %v994 = vlaneseq
        %v995 = vshrl.u32 %v994, 7
        %v996 = vsub.s32 %v993, %v995
        %v997 = vrot.slane %v983, %v996
        %v998 = vcombine.low %v942, %v958
        %v999 = vcombine.high %v942, %v958
        %v1001 = vunpack.c.l.s4 1934713408
        %v1002 = vunpack.c.0.s8 %v1001
        %v1003 = vlaneseq
        %v1004 = vshrl.u32 %v1003, 7
        %v1005 = vsub.s32 %v1002, %v1004
        %v1006 = vrot.slane %v998, %v1005
        %v1008 = vunpack.c.l.s4 1934713408
        %v1009 = vunpack.c.0.s8 %v1008
        %v1010 = vlaneseq
        %v1011 = vshrl.u32 %v1010, 7
        %v1012 = vsub.s32 %v1009, %v1011
        %v1013 = vrot.slane %v999, %v1012
        %v1014 = vcombine.low %v949, %v965
        %v1015 = vcombine.high %v949, %v965
        %v1017 = vunpack.c.l.s4 1934713408
        %v1018 = vunpack.c.0.s8 %v1017
        %v1019 = vlaneseq
        %v1020 = vshrl.u32 %v1019, 7
        %v1021 = vsub.s32 %v1018, %v1020
        %v1022 = vrot.slane %v1014, %v1021
        %v1024 = vunpack.c.l.s4 1934713408
        %v1025 = vunpack.c.0.s8 %v1024
        %v1026 = vlaneseq
        %v1027 = vshrl.u32 %v1026, 7
        %v1028 = vsub.s32 %v1025, %v1027
        %v1029 = vrot.slane %v1015, %v1028
        %v1030 = vcombine.low %v974, %v1006
        %v1031 = vcombine.high %v974, %v1006
        %v1032 = vcombine.low %v981, %v1013
        %v1033 = vcombine.high %v981, %v1013
        %v1034 = vcombine.low %v990, %v1022
        %v1035 = vcombine.high %v990, %v1022
        %v1036 = vcombine.low %v997, %v1029
        %v1037 = vcombine.high %v997, %v1029
        %v1038 = vcombine.low %v447, %v455
        %v1039 = vcombine.high %v447, %v455
        %v1041 = vunpack.c.l.s4 1983009808
        %v1042 = vunpack.c.0.s8 %v1041
        %v1043 = vlaneseq
        %v1044 = vshrl.u32 %v1043, 7
        %v1045 = vsub.s32 %v1042, %v1044
        %v1046 = vrot.slane %v1038, %v1045
        %v1048 = vunpack.c.l.s4 1983009808
        %v1049 = vunpack.c.0.s8 %v1048
        %v1050 = vlaneseq
        %v1051 = vshrl.u32 %v1050, 7
        %v1052 = vsub.s32 %v1049, %v1051
        %v1053 = vrot.slane %v1039, %v1052
        %v1054 = vcombine.low %v451, %v459
        %v1055 = vcombine.high %v451, %v459
        %v1057 = vunpack.c.l.s4 1983009808
        %v1058 = vunpack.c.0.s8 %v1057
        %v1059 = vlaneseq
        %v1060 = vshrl.u32 %v1059, 7
        %v1061 = vsub.s32 %v1058, %v1060
        %v1062 = vrot.slane %v1054, %v1061
        %v1064 = vunpack.c.l.s4 1983009808
        %v1065 = vunpack.c.0.s8 %v1064
        %v1066 = vlaneseq
        %v1067 = vshrl.u32 %v1066, 7
        %v1068 = vsub.s32 %v1065, %v1067
        %v1069 = vrot.slane %v1055, %v1068
        %v1070 = vcombine.low %v471, %v479
        %v1071 = vcombine.high %v471, %v479
        %v1073 = vunpack.c.l.s4 1983009808
        %v1074 = vunpack.c.0.s8 %v1073
        %v1075 = vlaneseq
        %v1076 = vshrl.u32 %v1075, 7
        %v1077 = vsub.s32 %v1074, %v1076
        %v1078 = vrot.slane %v1070, %v1077
        %v1080 = vunpack.c.l.s4 1983009808
        %v1081 = vunpack.c.0.s8 %v1080
        %v1082 = vlaneseq
        %v1083 = vshrl.u32 %v1082, 7
        %v1084 = vsub.s32 %v1081, %v1083
        %v1085 = vrot.slane %v1071, %v1084
        %v1086 = vcombine.low %v475, %v483
        %v1087 = vcombine.high %v475, %v483
        %v1089 = vunpack.c.l.s4 1983009808
        %v1090 = vunpack.c.0.s8 %v1089
        %v1091 = vlaneseq
        %v1092 = vshrl.u32 %v1091, 7
        %v1093 = vsub.s32 %v1090, %v1092
        %v1094 = vrot.slane %v1086, %v1093
        %v1096 = vunpack.c.l.s4 1983009808
        %v1097 = vunpack.c.0.s8 %v1096
        %v1098 = vlaneseq
        %v1099 = vshrl.u32 %v1098, 7
        %v1100 = vsub.s32 %v1097, %v1099
        %v1101 = vrot.slane %v1087, %v1100
        %v1102 = vcombine.low %v1046, %v1062
        %v1103 = vcombine.high %v1046, %v1062
        %v1105 = vunpack.c.l.s4 1934713408
        %v1106 = vunpack.c.0.s8 %v1105
        %v1107 = vlaneseq
        %v1108 = vshrl.u32 %v1107, 7
        %v1109 = vsub.s32 %v1106, %v1108
        %v1110 = vrot.slane %v1102, %v1109
        %v1112 = vunpack.c.l.s4 1934713408
        %v1113 = vunpack.c.0.s8 %v1112
        %v1114 = vlaneseq
        %v1115 = vshrl.u32 %v1114, 7
        %v1116 = vsub.s32 %v1113, %v1115
        %v1117 = vrot.slane %v1103, %v1116
        %v1118 = vcombine.low %v1053, %v1069
        %v1119 = vcombine.high %v1053, %v1069
        %v1121 = vunpack.c.l.s4 1934713408
        %v1122 = vunpack.c.0.s8 %v1121
        %v1123 = vlaneseq
        %v1124 = vshrl.u32 %v1123, 7
        %v1125 = vsub.s32 %v1122, %v1124
        %v1126 = vrot.slane %v1118, %v1125
        %v1128 = vunpack.c.l.s4 1934713408
        %v1129 = vunpack.c.0.s8 %v1128
        %v1130 = vlaneseq
        %v1131 = vshrl.u32 %v1130, 7
        %v1132 = vsub.s32 %v1129, %v1131
        %v1133 = vrot.slane %v1119, %v1132
        %v1134 = vcombine.low %v1078, %v1094
        %v1135 = vcombine.high %v1078, %v1094
        %v1137 = vunpack.c.l.s4 1934713408
        %v1138 = vunpack.c.0.s8 %v1137
        %v1139 = vlaneseq
        %v1140 = vshrl.u32 %v1139, 7
        %v1141 = vsub.s32 %v1138, %v1140
        %v1142 = vrot.slane %v1134, %v1141
        %v1144 = vunpack.c.l.s4 1934713408
        %v1145 = vunpack.c.0.s8 %v1144
        %v1146 = vlaneseq
        %v1147 = vshrl.u32 %v1146, 7
        %v1148 = vsub.s32 %v1145, %v1147
        %v1149 = vrot.slane %v1135, %v1148
        %v1150 = vcombine.low %v1085, %v1101
        %v1151 = vcombine.high %v1085, %v1101
        %v1153 = vunpack.c.l.s4 1934713408
        %v1154 = vunpack.c.0.s8 %v1153
        %v1155 = vlaneseq
        %v1156 = vshrl.u32 %v1155, 7
        %v1157 = vsub.s32 %v1154, %v1156
        %v1158 = vrot.slane %v1150, %v1157
        %v1160 = vunpack.c.l.s4 1934713408
        %v1161 = vunpack.c.0.s8 %v1160
        %v1162 = vlaneseq
        %v1163 = vshrl.u32 %v1162, 7
        %v1164 = vsub.s32 %v1161, %v1163
        %v1165 = vrot.slane %v1151, %v1164
        %v1166 = vcombine.low %v1110, %v1142
        %v1167 = vcombine.high %v1110, %v1142
        %v1168 = vcombine.low %v1117, %v1149
        %v1169 = vcombine.high %v1117, %v1149
        %v1170 = vcombine.low %v1126, %v1158
        %v1171 = vcombine.high %v1126, %v1158
        %v1172 = vcombine.low %v1133, %v1165
        %v1173 = vcombine.high %v1133, %v1165
        %v1174 = vcombine.low %v262, %v266
        %v1176 = vunpack.c.l.s4 1983009808
        %v1177 = vunpack.c.0.s8 %v1176
        %v1178 = vlaneseq
        %v1179 = vshrl.u32 %v1178, 7
        %v1180 = vsub.s32 %v1177, %v1179
        %v1181 = vrot.slane %v1174, %v1180
        %v1182 = vcombine.low %v264, %v268
        %v1184 = vunpack.c.l.s4 1983009808
        %v1185 = vunpack.c.0.s8 %v1184
        %v1186 = vlaneseq
        %v1187 = vshrl.u32 %v1186, 7
        %v1188 = vsub.s32 %v1185, %v1187
        %v1189 = vrot.slane %v1182, %v1188
        %v1190 = vcombine.low %v284, %v292
        %v1192 = vunpack.c.l.s4 1983009808
        %v1193 = vunpack.c.0.s8 %v1192
        %v1194 = vlaneseq
        %v1195 = vshrl.u32 %v1194, 7
        %v1196 = vsub.s32 %v1193, %v1195
        %v1197 = vrot.slane %v1190, %v1196
        %v1198 = vcombine.low %v288, %v296
        %v1200 = vunpack.c.l.s4 1983009808
        %v1201 = vunpack.c.0.s8 %v1200
        %v1202 = vlaneseq
        %v1203 = vshrl.u32 %v1202, 7
        %v1204 = vsub.s32 %v1201, %v1203
        %v1205 = vrot.slane %v1198, %v1204
        %v1206 = vcombine.low %v1181, %v1189
        %v1207 = vcombine.high %v1181, %v1189
        %v1209 = vunpack.c.l.s4 1934713408
        %v1210 = vunpack.c.0.s8 %v1209
        %v1211 = vlaneseq
        %v1212 = vshrl.u32 %v1211, 7
        %v1213 = vsub.s32 %v1210, %v1212
        %v1214 = vrot.slane %v1206, %v1213
        %v1216 = vunpack.c.l.s4 1934713408
        %v1217 = vunpack.c.0.s8 %v1216
        %v1218 = vlaneseq
        %v1219 = vshrl.u32 %v1218, 7
        %v1220 = vsub.s32 %v1217, %v1219
        %v1221 = vrot.slane %v1207, %v1220
        %v1222 = vcombine.low %v1197, %v1205
        %v1223 = vcombine.high %v1197, %v1205
        %v1225 = vunpack.c.l.s4 1934713408
        %v1226 = vunpack.c.0.s8 %v1225
        %v1227 = vlaneseq
        %v1228 = vshrl.u32 %v1227, 7
        %v1229 = vsub.s32 %v1226, %v1228
        %v1230 = vrot.slane %v1222, %v1229
        %v1232 = vunpack.c.l.s4 1934713408
        %v1233 = vunpack.c.0.s8 %v1232
        %v1234 = vlaneseq
        %v1235 = vshrl.u32 %v1234, 7
        %v1236 = vsub.s32 %v1233, %v1235
        %v1237 = vrot.slane %v1223, %v1236
        %v1238 = vcombine.low %v1214, %v1230
        %v1239 = vcombine.high %v1214, %v1230
        %v1240 = vcombine.low %v1221, %v1237
        %v1241 = vcombine.high %v1221, %v1237
        %v1242 = vcombine.low %v308, %v316
        %v1244 = vunpack.c.l.s4 1983009808
        %v1245 = vunpack.c.0.s8 %v1244
        %v1246 = vlaneseq
        %v1247 = vshrl.u32 %v1246, 7
        %v1248 = vsub.s32 %v1245, %v1247
        %v1249 = vrot.slane %v1242, %v1248
        %v1250 = vcombine.low %v312, %v320
        %v1252 = vunpack.c.l.s4 1983009808
        %v1253 = vunpack.c.0.s8 %v1252
        %v1254 = vlaneseq
        %v1255 = vshrl.u32 %v1254, 7
        %v1256 = vsub.s32 %v1253, %v1255
        %v1257 = vrot.slane %v1250, %v1256
        %v1258 = vcombine.low %v332, %v340
        %v1260 = vunpack.c.l.s4 1983009808
        %v1261 = vunpack.c.0.s8 %v1260
        %v1262 = vlaneseq
        %v1263 = vshrl.u32 %v1262, 7
        %v1264 = vsub.s32 %v1261, %v1263
        %v1265 = vrot.slane %v1258, %v1264
        %v1266 = vcombine.low %v336, %v344
        %v1268 = vunpack.c.l.s4 1983009808
        %v1269 = vunpack.c.0.s8 %v1268
        %v1270 = vlaneseq
        %v1271 = vshrl.u32 %v1270, 7
        %v1272 = vsub.s32 %v1269, %v1271
        %v1273 = vrot.slane %v1266, %v1272
        %v1274 = vcombine.low %v1249, %v1257
        %v1275 = vcombine.high %v1249, %v1257
        %v1277 = vunpack.c.l.s4 1934713408
        %v1278 = vunpack.c.0.s8 %v1277
        %v1279 = vlaneseq
        %v1280 = vshrl.u32 %v1279, 7
        %v1281 = vsub.s32 %v1278, %v1280
        %v1282 = vrot.slane %v1274, %v1281
        %v1284 = vunpack.c.l.s4 1934713408
        %v1285 = vunpack.c.0.s8 %v1284
        %v1286 = vlaneseq
        %v1287 = vshrl.u32 %v1286, 7
        %v1288 = vsub.s32 %v1285, %v1287
        %v1289 = vrot.slane %v1275, %v1288
        %v1290 = vcombine.low %v1265, %v1273
        %v1291 = vcombine.high %v1265, %v1273
        %v1293 = vunpack.c.l.s4 1934713408
        %v1294 = vunpack.c.0.s8 %v1293
        %v1295 = vlaneseq
        %v1296 = vshrl.u32 %v1295, 7
        %v1297 = vsub.s32 %v1294, %v1296
        %v1298 = vrot.slane %v1290, %v1297
        %v1300 = vunpack.c.l.s4 1934713408
        %v1301 = vunpack.c.0.s8 %v1300
        %v1302 = vlaneseq
        %v1303 = vshrl.u32 %v1302, 7
        %v1304 = vsub.s32 %v1301, %v1303
        %v1305 = vrot.slane %v1291, %v1304
        %v1306 = vcombine.low %v1282, %v1298
        %v1307 = vcombine.high %v1282, %v1298
        %v1308 = vcombine.low %v1289, %v1305
        %v1309 = vcombine.high %v1289, %v1305
        %v1310 = vcombine.low %v356, %v364
        %v1312 = vunpack.c.l.s4 1983009808
        %v1313 = vunpack.c.0.s8 %v1312
        %v1314 = vlaneseq
        %v1315 = vshrl.u32 %v1314, 7
        %v1316 = vsub.s32 %v1313, %v1315
        %v1317 = vrot.slane %v1310, %v1316
        %v1318 = vcombine.low %v360, %v368
        %v1320 = vunpack.c.l.s4 1983009808
        %v1321 = vunpack.c.0.s8 %v1320
        %v1322 = vlaneseq
        %v1323 = vshrl.u32 %v1322, 7
        %v1324 = vsub.s32 %v1321, %v1323
        %v1325 = vrot.slane %v1318, %v1324
        %v1326 = vcombine.low %v379, %v385
        %v1328 = vunpack.c.l.s4 1983009808
        %v1329 = vunpack.c.0.s8 %v1328
        %v1330 = vlaneseq
        %v1331 = vshrl.u32 %v1330, 7
        %v1332 = vsub.s32 %v1329, %v1331
        %v1333 = vrot.slane %v1326, %v1332
        %v1334 = vcombine.low %v382, %v388
        %v1336 = vunpack.c.l.s4 1983009808
        %v1337 = vunpack.c.0.s8 %v1336
        %v1338 = vlaneseq
        %v1339 = vshrl.u32 %v1338, 7
        %v1340 = vsub.s32 %v1337, %v1339
        %v1341 = vrot.slane %v1334, %v1340
        %v1342 = vcombine.low %v1317, %v1325
        %v1343 = vcombine.high %v1317, %v1325
        %v1345 = vunpack.c.l.s4 1934713408
        %v1346 = vunpack.c.0.s8 %v1345
        %v1347 = vlaneseq
        %v1348 = vshrl.u32 %v1347, 7
        %v1349 = vsub.s32 %v1346, %v1348
        %v1350 = vrot.slane %v1342, %v1349
        %v1352 = vunpack.c.l.s4 1934713408
        %v1353 = vunpack.c.0.s8 %v1352
        %v1354 = vlaneseq
        %v1355 = vshrl.u32 %v1354, 7
        %v1356 = vsub.s32 %v1353, %v1355
        %v1357 = vrot.slane %v1343, %v1356
        %v1358 = vcombine.low %v1333, %v1341
        %v1359 = vcombine.high %v1333, %v1341
        %v1361 = vunpack.c.l.s4 1934713408
        %v1362 = vunpack.c.0.s8 %v1361
        %v1363 = vlaneseq
        %v1364 = vshrl.u32 %v1363, 7
        %v1365 = vsub.s32 %v1362, %v1364
        %v1366 = vrot.slane %v1358, %v1365
        %v1368 = vunpack.c.l.s4 1934713408
        %v1369 = vunpack.c.0.s8 %v1368
        %v1370 = vlaneseq
        %v1371 = vshrl.u32 %v1370, 7
        %v1372 = vsub.s32 %v1369, %v1371
        %v1373 = vrot.slane %v1359, %v1372
        %v1374 = vcombine.low %v1350, %v1366
        %v1375 = vcombine.high %v1350, %v1366
        %v1376 = vcombine.low %v1357, %v1373
        %v1377 = vcombine.high %v1357, %v1373
        %v1378 = vcombine.low %v401, %v409
        %v1380 = vunpack.c.l.s4 1983009808
        %v1381 = vunpack.c.0.s8 %v1380
        %v1382 = vlaneseq
        %v1383 = vshrl.u32 %v1382, 7
        %v1384 = vsub.s32 %v1381, %v1383
        %v1385 = vrot.slane %v1378, %v1384
        %v1386 = vcombine.low %v405, %v413
        %v1388 = vunpack.c.l.s4 1983009808
        %v1389 = vunpack.c.0.s8 %v1388
        %v1390 = vlaneseq
        %v1391 = vshrl.u32 %v1390, 7
        %v1392 = vsub.s32 %v1389, %v1391
        %v1393 = vrot.slane %v1386, %v1392
        %v1394 = vcombine.low %v425, %v433
        %v1396 = vunpack.c.l.s4 1983009808
        %v1397 = vunpack.c.0.s8 %v1396
        %v1398 = vlaneseq
        %v1399 = vshrl.u32 %v1398, 7
        %v1400 = vsub.s32 %v1397, %v1399
        %v1401 = vrot.slane %v1394, %v1400
        %v1402 = vcombine.low %v429, %v437
        %v1404 = vunpack.c.l.s4 1983009808
        %v1405 = vunpack.c.0.s8 %v1404
        %v1406 = vlaneseq
        %v1407 = vshrl.u32 %v1406, 7
        %v1408 = vsub.s32 %v1405, %v1407
        %v1409 = vrot.slane %v1402, %v1408
        %v1410 = vcombine.low %v1385, %v1393
        %v1411 = vcombine.high %v1385, %v1393
        %v1413 = vunpack.c.l.s4 1934713408
        %v1414 = vunpack.c.0.s8 %v1413
        %v1415 = vlaneseq
        %v1416 = vshrl.u32 %v1415, 7
        %v1417 = vsub.s32 %v1414, %v1416
        %v1418 = vrot.slane %v1410, %v1417
        %v1420 = vunpack.c.l.s4 1934713408
        %v1421 = vunpack.c.0.s8 %v1420
        %v1422 = vlaneseq
        %v1423 = vshrl.u32 %v1422, 7
        %v1424 = vsub.s32 %v1421, %v1423
        %v1425 = vrot.slane %v1411, %v1424
        %v1426 = vcombine.low %v1401, %v1409
        %v1427 = vcombine.high %v1401, %v1409
        %v1429 = vunpack.c.l.s4 1934713408
        %v1430 = vunpack.c.0.s8 %v1429
        %v1431 = vlaneseq
        %v1432 = vshrl.u32 %v1431, 7
        %v1433 = vsub.s32 %v1430, %v1432
        %v1434 = vrot.slane %v1426, %v1433
        %v1436 = vunpack.c.l.s4 1934713408
        %v1437 = vunpack.c.0.s8 %v1436
        %v1438 = vlaneseq
        %v1439 = vshrl.u32 %v1438, 7
        %v1440 = vsub.s32 %v1437, %v1439
        %v1441 = vrot.slane %v1427, %v1440
        %v1442 = vcombine.low %v1418, %v1434
        %v1443 = vcombine.high %v1418, %v1434
        %v1444 = vcombine.low %v1425, %v1441
        %v1445 = vcombine.high %v1425, %v1441
        %v1446 = vcombine.low %v449, %v457
        %v1448 = vunpack.c.l.s4 1983009808
        %v1449 = vunpack.c.0.s8 %v1448
        %v1450 = vlaneseq
        %v1451 = vshrl.u32 %v1450, 7
        %v1452 = vsub.s32 %v1449, %v1451
        %v1453 = vrot.slane %v1446, %v1452
        %v1454 = vcombine.low %v453, %v461
        %v1456 = vunpack.c.l.s4 1983009808
        %v1457 = vunpack.c.0.s8 %v1456
        %v1458 = vlaneseq
        %v1459 = vshrl.u32 %v1458, 7
        %v1460 = vsub.s32 %v1457, %v1459
        %v1461 = vrot.slane %v1454, %v1460
        %v1462 = vcombine.low %v473, %v481
        %v1464 = vunpack.c.l.s4 1983009808
        %v1465 = vunpack.c.0.s8 %v1464
        %v1466 = vlaneseq
        %v1467 = vshrl.u32 %v1466, 7
        %v1468 = vsub.s32 %v1465, %v1467
        %v1469 = vrot.slane %v1462, %v1468
        %v1470 = vcombine.low %v477, %v485
        %v1472 = vunpack.c.l.s4 1983009808
        %v1473 = vunpack.c.0.s8 %v1472
        %v1474 = vlaneseq
        %v1475 = vshrl.u32 %v1474, 7
        %v1476 = vsub.s32 %v1473, %v1475
        %v1477 = vrot.slane %v1470, %v1476
        %v1478 = vcombine.low %v1453, %v1461
        %v1479 = vcombine.high %v1453, %v1461
        %v1481 = vunpack.c.l.s4 1934713408
        %v1482 = vunpack.c.0.s8 %v1481
        %v1483 = vlaneseq
        %v1484 = vshrl.u32 %v1483, 7
        %v1485 = vsub.s32 %v1482, %v1484
        %v1486 = vrot.slane %v1478, %v1485
        %v1488 = vunpack.c.l.s4 1934713408
        %v1489 = vunpack.c.0.s8 %v1488
        %v1490 = vlaneseq
        %v1491 = vshrl.u32 %v1490, 7
        %v1492 = vsub.s32 %v1489, %v1491
        %v1493 = vrot.slane %v1479, %v1492
        %v1494 = vcombine.low %v1469, %v1477
        %v1495 = vcombine.high %v1469, %v1477
        %v1497 = vunpack.c.l.s4 1934713408
        %v1498 = vunpack.c.0.s8 %v1497
        %v1499 = vlaneseq
        %v1500 = vshrl.u32 %v1499, 7
        %v1501 = vsub.s32 %v1498, %v1500
        %v1502 = vrot.slane %v1494, %v1501
        %v1504 = vunpack.c.l.s4 1934713408
        %v1505 = vunpack.c.0.s8 %v1504
        %v1506 = vlaneseq
        %v1507 = vshrl.u32 %v1506, 7
        %v1508 = vsub.s32 %v1505, %v1507
        %v1509 = vrot.slane %v1495, %v1508
        %v1510 = vcombine.low %v1486, %v1502
        %v1511 = vcombine.high %v1486, %v1502
        %v1512 = vcombine.low %v1493, %v1509
        %v1513 = vcombine.high %v1493, %v1509
        %1519 = vrot.lane.b32.xlu0 %v623, 12
        %v1520 = vpop.permute.xlu0 %1519
        %1521 = vrot.lane.b32.xlu0 %v759, 12
        %v1522 = vpop.permute.xlu0 %1521
        %1523 = vrot.lane.b32.xlu0 %v895, 12
        %v1524 = vpop.permute.xlu0 %1523
        %1525 = vrot.lane.b32.xlu0 %v1031, 12
        %v1526 = vpop.permute.xlu0 %1525
        %1527 = vrot.lane.b32.xlu0 %v1167, 12
        %v1528 = vpop.permute.xlu0 %1527
        %1539 = vrot.lane.b32.xlu0 %v624, 24
        %v1540 = vpop.permute.xlu0 %1539
        %1541 = vrot.lane.b32.xlu0 %v760, 24
        %v1542 = vpop.permute.xlu0 %1541
        %1543 = vrot.lane.b32.xlu0 %v896, 24
        %v1544 = vpop.permute.xlu0 %1543
        %1545 = vrot.lane.b32.xlu0 %v1032, 24
        %v1546 = vpop.permute.xlu0 %1545
        %1547 = vrot.lane.b32.xlu0 %v1168, 24
        %v1548 = vpop.permute.xlu0 %1547
        %1559 = vrot.lane.b32.xlu0 %v625, 36
        %v1560 = vpop.permute.xlu0 %1559
        %1561 = vrot.lane.b32.xlu0 %v761, 36
        %v1562 = vpop.permute.xlu0 %1561
        %1563 = vrot.lane.b32.xlu0 %v897, 36
        %v1564 = vpop.permute.xlu0 %1563
        %1565 = vrot.lane.b32.xlu0 %v1033, 36
        %v1566 = vpop.permute.xlu0 %1565
        %1567 = vrot.lane.b32.xlu0 %v1169, 36
        %v1568 = vpop.permute.xlu0 %1567
        %1579 = vrot.lane.b32.xlu0 %v626, 48
        %v1580 = vpop.permute.xlu0 %1579
        %1581 = vrot.lane.b32.xlu0 %v762, 48
        %v1582 = vpop.permute.xlu0 %1581
        %1583 = vrot.lane.b32.xlu0 %v898, 48
        %v1584 = vpop.permute.xlu0 %1583
        %1585 = vrot.lane.b32.xlu0 %v1034, 48
        %v1586 = vpop.permute.xlu0 %1585
        %1587 = vrot.lane.b32.xlu0 %v1170, 48
        %v1588 = vpop.permute.xlu0 %1587
        %1599 = vrot.lane.b32.xlu0 %v627, 60
        %v1600 = vpop.permute.xlu0 %1599
        %1601 = vrot.lane.b32.xlu0 %v763, 60
        %v1602 = vpop.permute.xlu0 %1601
        %1603 = vrot.lane.b32.xlu0 %v899, 60
        %v1604 = vpop.permute.xlu0 %1603
        %1605 = vrot.lane.b32.xlu0 %v1035, 60
        %v1606 = vpop.permute.xlu0 %1605
        %1607 = vrot.lane.b32.xlu0 %v1171, 60
        %v1608 = vpop.permute.xlu0 %1607
        %1619 = vrot.lane.b32.xlu0 %v628, 72
        %v1620 = vpop.permute.xlu0 %1619
        %1621 = vrot.lane.b32.xlu0 %v764, 72
        %v1622 = vpop.permute.xlu0 %1621
        %1623 = vrot.lane.b32.xlu0 %v900, 72
        %v1624 = vpop.permute.xlu0 %1623
        %1625 = vrot.lane.b32.xlu0 %v1036, 72
        %v1626 = vpop.permute.xlu0 %1625
        %1627 = vrot.lane.b32.xlu0 %v1172, 72
        %v1628 = vpop.permute.xlu0 %1627
        %1639 = vrot.lane.b32.xlu0 %v629, 84
        %v1640 = vpop.permute.xlu0 %1639
        %1641 = vrot.lane.b32.xlu0 %v765, 84
        %v1642 = vpop.permute.xlu0 %1641
        %1643 = vrot.lane.b32.xlu0 %v901, 84
        %v1644 = vpop.permute.xlu0 %1643
        %1645 = vrot.lane.b32.xlu0 %v1037, 84
        %v1646 = vpop.permute.xlu0 %1645
        %1647 = vrot.lane.b32.xlu0 %v1173, 84
        %v1648 = vpop.permute.xlu0 %1647
        %1659 = vrot.lane.b32.xlu0 %v1238, 96
        %v1660 = vpop.permute.xlu0 %1659
        %1661 = vrot.lane.b32.xlu0 %v1306, 96
        %v1662 = vpop.permute.xlu0 %1661
        %1663 = vrot.lane.b32.xlu0 %v1374, 96
        %v1664 = vpop.permute.xlu0 %1663
        %1665 = vrot.lane.b32.xlu0 %v1442, 96
        %v1666 = vpop.permute.xlu0 %1665
        %1667 = vrot.lane.b32.xlu0 %v1510, 96
        %v1668 = vpop.permute.xlu0 %1667
        %1679 = vrot.lane.b32.xlu0 %v1239, 108
        %v1680 = vpop.permute.xlu0 %1679
        %1681 = vrot.lane.b32.xlu0 %v1307, 108
        %v1682 = vpop.permute.xlu0 %1681
        %1683 = vrot.lane.b32.xlu0 %v1375, 108
        %v1684 = vpop.permute.xlu0 %1683
        %1685 = vrot.lane.b32.xlu0 %v1443, 108
        %v1686 = vpop.permute.xlu0 %1685
        %1687 = vrot.lane.b32.xlu0 %v1511, 108
        %v1688 = vpop.permute.xlu0 %1687
        %1699 = vrot.lane.b32.xlu0 %v1240, 120
        %v1700 = vpop.permute.xlu0 %1699
        %1701 = vrot.lane.b32.xlu0 %v1308, 120
        %v1702 = vpop.permute.xlu0 %1701
        %1703 = vrot.lane.b32.xlu0 %v1376, 120
        %v1704 = vpop.permute.xlu0 %1703
        %1705 = vrot.lane.b32.xlu0 %v1444, 120
        %v1706 = vpop.permute.xlu0 %1705
        %1707 = vrot.lane.b32.xlu0 %v1512, 120
        %v1708 = vpop.permute.xlu0 %1707
        %1719 = vrot.lane.b32.xlu0 %v1241, 4
        %v1720 = vpop.permute.xlu0 %1719
        %1721 = vrot.lane.b32.xlu0 %v1309, 4
        %v1722 = vpop.permute.xlu0 %1721
        %1723 = vrot.lane.b32.xlu0 %v1377, 4
        %v1724 = vpop.permute.xlu0 %1723
        %1725 = vrot.lane.b32.xlu0 %v1445, 4
        %v1726 = vpop.permute.xlu0 %1725
        %1727 = vrot.lane.b32.xlu0 %v1513, 4
        %v1728 = vpop.permute.xlu0 %1727
        %vm1734 = vcmask 97280
        %v1735 = vsel %vm1734, %v622, %v1520
        %v1736 = vsel %vm1734, %v758, %v1522
        %v1737 = vsel %vm1734, %v894, %v1524
        %v1738 = vsel %vm1734, %v1030, %v1526
        %v1739 = vsel %vm1734, %v1166, %v1528
        %vm1740 = vcmask 195584
        %v1741 = vsel %vm1740, %v1735, %v1540
        %v1742 = vsel %vm1740, %v1736, %v1542
        %v1743 = vsel %vm1740, %v1737, %v1544
        %v1744 = vsel %vm1740, %v1738, %v1546
        %v1745 = vsel %vm1740, %v1739, %v1548
        %vm1746 = vcmask 293888
        %v1747 = vsel %vm1746, %v1741, %v1560
        %v1748 = vsel %vm1746, %v1742, %v1562
        %v1749 = vsel %vm1746, %v1743, %v1564
        %v1750 = vsel %vm1746, %v1744, %v1566
        %v1751 = vsel %vm1746, %v1745, %v1568
        %vm1752 = vcmask 392192
        %v1753 = vsel %vm1752, %v1747, %v1580
        %v1754 = vsel %vm1752, %v1748, %v1582
        %v1755 = vsel %vm1752, %v1749, %v1584
        %v1756 = vsel %vm1752, %v1750, %v1586
        %v1757 = vsel %vm1752, %v1751, %v1588
        %vm1758 = vcmask 490496
        %v1759 = vsel %vm1758, %v1753, %v1600
        %v1760 = vsel %vm1758, %v1754, %v1602
        %v1761 = vsel %vm1758, %v1755, %v1604
        %v1762 = vsel %vm1758, %v1756, %v1606
        %v1763 = vsel %vm1758, %v1757, %v1608
        %vm1764 = vcmask 588800
        %v1765 = vsel %vm1764, %v1759, %v1620
        %v1766 = vsel %vm1764, %v1760, %v1622
        %v1767 = vsel %vm1764, %v1761, %v1624
        %v1768 = vsel %vm1764, %v1762, %v1626
        %v1769 = vsel %vm1764, %v1763, %v1628
        %vm1770 = vcmask 687104
        %v1771 = vsel %vm1770, %v1765, %v1640
        %v1772 = vsel %vm1770, %v1766, %v1642
        %v1773 = vsel %vm1770, %v1767, %v1644
        %v1774 = vsel %vm1770, %v1768, %v1646
        %v1775 = vsel %vm1770, %v1769, %v1648
        %vm1776 = vcmask 785408
        %v1777 = vsel %vm1776, %v1771, %v1660
        %v1778 = vsel %vm1776, %v1772, %v1662
        %v1779 = vsel %vm1776, %v1773, %v1664
        %v1780 = vsel %vm1776, %v1774, %v1666
        %v1781 = vsel %vm1776, %v1775, %v1668
        %vm1782 = vcmask 883712
        %v1783 = vsel %vm1782, %v1777, %v1680
        %v1784 = vsel %vm1782, %v1778, %v1682
        %v1785 = vsel %vm1782, %v1779, %v1684
        %v1786 = vsel %vm1782, %v1780, %v1686
        %v1787 = vsel %vm1782, %v1781, %v1688
        %vm1788 = vcmask 982016
        %v1789 = vsel %vm1788, %v1783, %v1700
        %v1790 = vsel %vm1788, %v1784, %v1702
        %v1791 = vsel %vm1788, %v1785, %v1704
        %v1792 = vsel %vm1788, %v1786, %v1706
        %v1793 = vsel %vm1788, %v1787, %v1708
        %vm1794 = vcmask 31744
        %v1795 = vsel %vm1794, %v1700, %v1720
        %v1796 = vsel %vm1794, %v1702, %v1722
        %v1797 = vsel %vm1794, %v1704, %v1724
        %v1798 = vsel %vm1794, %v1706, %v1726
        %v1799 = vsel %vm1794, %v1708, %v1728
        %v1800 = vcombine.low 0.0, 0.0
        %v1802 = vunpack.c.l.s4 1983009808
        %v1803 = vunpack.c.0.s8 %v1802
        %v1804 = vlaneseq
        %v1805 = vshrl.u32 %v1804, 7
        %v1806 = vsub.s32 %v1803, %v1805
        %v1807 = vrot.slane %v1800, %v1806
        %v1808 = vcombine.low %v1807, %v1807
        %v1809 = vcombine.high %v1807, %v1807
        %v1811 = vunpack.c.l.s4 1934713408
        %v1812 = vunpack.c.0.s8 %v1811
        %v1813 = vlaneseq
        %v1814 = vshrl.u32 %v1813, 7
        %v1815 = vsub.s32 %v1812, %v1814
        %v1816 = vrot.slane %v1808, %v1815
        %v1818 = vunpack.c.l.s4 1934713408
        %v1819 = vunpack.c.0.s8 %v1818
        %v1820 = vlaneseq
        %v1821 = vshrl.u32 %v1820, 7
        %v1822 = vsub.s32 %v1819, %v1821
        %v1823 = vrot.slane %v1809, %v1822
        %v1824 = vcombine.low %v1816, %v1816
        %v1825 = vcombine.high %v1816, %v1816
        %v1826 = vcombine.low %v1823, %v1823
        %v1827 = vcombine.high %v1823, %v1823
        %1829 = vrot.lane.b32.xlu0 %v1825, 12
        %v1830 = vpop.permute.xlu0 %1829
        %1833 = vrot.lane.b32.xlu0 %v1826, 24
        %v1834 = vpop.permute.xlu0 %1833
        %1837 = vrot.lane.b32.xlu0 %v1827, 36
        %v1838 = vpop.permute.xlu0 %1837
        %1841 = vrot.lane.b32.xlu0 0.0, 48
        %v1842 = vpop.permute.xlu0 %1841
        %1844 = vrot.lane.b32.xlu0 0.0, 60
        %v1845 = vpop.permute.xlu0 %1844
        %1847 = vrot.lane.b32.xlu0 0.0, 72
        %v1848 = vpop.permute.xlu0 %1847
        %1850 = vrot.lane.b32.xlu0 0.0, 84
        %v1851 = vpop.permute.xlu0 %1850
        %1854 = vrot.lane.b32.xlu0 %v1824, 96
        %v1855 = vpop.permute.xlu0 %1854
        %1857 = vrot.lane.b32.xlu0 %v1825, 108
        %v1858 = vpop.permute.xlu0 %1857
        %1860 = vrot.lane.b32.xlu0 %v1826, 120
        %v1861 = vpop.permute.xlu0 %1860
        %1863 = vrot.lane.b32.xlu0 %v1827, 4
        %v1864 = vpop.permute.xlu0 %1863
        %v1866 = vsel %vm1734, %v1824, %v1830
        %v1867 = vsel %vm1740, %v1866, %v1834
        %v1868 = vsel %vm1746, %v1867, %v1838
        %v1869 = vsel %vm1752, %v1868, %v1842
        %v1870 = vsel %vm1758, %v1869, %v1845
        %v1871 = vsel %vm1764, %v1870, %v1848
        %v1872 = vsel %vm1770, %v1871, %v1851
        %v1873 = vsel %vm1776, %v1872, %v1855
        %v1874 = vsel %vm1782, %v1873, %v1858
        %v1875 = vsel %vm1788, %v1874, %v1861
        %v1876 = vsel %vm1794, %v1861, %v1864
        %vm1877 = vcmask 326656
        %v1879 = vsel %vm1877, %v269, 0
        %v1882 = vsel %vm1877, %v270, 0
        %v1885 = vsel %vm1877, %v271, 0
        %v1888 = vsel %vm1877, %v272, 0
        %1890 = vmatprep.subr.mxu0 %v1795
        %1891 = vmatpush1.msra.mxu0 %v1789
        %1892 = vmatprep.subr.mxu0 %v1796
        %1893 = vmatpush1.msra.mxu0 %v1790
        %1894 = vmatprep.subr.mxu0 %v1797
        %1895 = vmatpush1.msra.mxu0 %v1791
        %1896 = vmatprep.subr.mxu0 %v1798
        %1897 = vmatpush1.msra.mxu0 %v1792
        %1898 = vmatprep.subr.mxu0 %v1799
        %1899 = vmatpush1.msra.mxu0 %v1793
        %1900 = vmatprep.subr.mxu0 0.0
        %1901 = vmatpush1.msra.mxu0 0.0
        %1902 = vmatprep.subr.mxu0 0.0
        %1903 = vmatpush1.msra.mxu0 0.0
        %1904 = vmatprep.subr.mxu0 0.0
        %1905 = vmatpush1.msra.mxu0 0.0
        %1906 = vmatprep.subr.mxu0 0.0
        %1907 = vmatpush1.msra.mxu0 0.0
        %1908 = vmatprep.subr.mxu0 0.0
        %1909 = vmatpush1.msra.mxu0 0.0
        %1910 = vmatprep.subr.mxu0 0.0
        %1911 = vmatpush1.msra.mxu0 0.0
        %1912 = vmatprep.subr.mxu0 0.0
        %1913 = vmatpush1.msra.mxu0 0.0
        %1914 = vmatprep.subr.mxu0 0.0
        %1915 = vmatpush1.msra.mxu0 0.0
        %1916 = vmatprep.subr.mxu0 0.0
        %1917 = vmatpush1.msra.mxu0 0.0
        %1918 = vmatprep.subr.mxu0 0.0
        %1919 = vmatpush1.msra.mxu0 0.0
        %1920 = vmatprep.subr.mxu0 0.0
        %1921 = vmatpush1.msra.mxu0 0.0
        %1922 = vmatprep.subr.mxu0 0.0
        %1923 = vmatpush1.msra.mxu0 0.0
        %1924 = vmatprep.subr.mxu0 0.0
        %1925 = vmatpush1.msra.mxu0 0.0
        %1926 = vmatprep.subr.mxu0 0.0
        %1927 = vmatpush1.msra.mxu0 0.0
        %1928 = vmatprep.subr.mxu0 0.0
        %1929 = vmatpush1.msra.mxu0 0.0
        %1930 = vmatprep.subr.mxu0 0.0
        %1931 = vmatpush1.msra.mxu0 0.0
        %1932 = vmatprep.subr.mxu0 0.0
        %1933 = vmatpush1.msra.mxu0 0.0
        %1934 = vmatprep.subr.mxu0 0.0
        %1935 = vmatpush1.msra.mxu0 0.0
        %1936 = vmatprep.subr.mxu0 0.0
        %1937 = vmatpush1.msra.mxu0 0.0
        %1938 = vmatprep.subr.mxu0 0.0
        %1939 = vmatpush1.msra.mxu0 0.0
        %1940 = vmatprep.subr.mxu0 0.0
        %1941 = vmatpush1.msra.mxu0 0.0
        %1942 = vmatprep.subr.mxu0 0.0
        %1943 = vmatpush1.msra.mxu0 0.0
        %1944 = vmatprep.subr.mxu0 0.0
        %1945 = vmatpush1.msra.mxu0 0.0
        %1946 = vmatprep.subr.mxu0 0.0
        %1947 = vmatpush1.msra.mxu0 0.0
        %1948 = vmatprep.subr.mxu0 0.0
        %1949 = vmatpush1.msra.mxu0 0.0
        %1950 = vmatprep.subr.mxu0 0.0
        %1951 = vmatpush1.msra.mxu0 0.0
        %1952 = vmatprep.subr.mxu0 0.0
        %1953 = vmatpush1.msra.mxu0 0.0
        %1954 = vmatprep.mubr.f32.mxu0 0.0
        %1955 = vmatmul.mubr.f32.gmra.mrb[0].mxu0 %v1879
        %v1956 = vpop.f32.mrb[0].mxu0
        %v1957 = vadd.f32 %v1875, %v1956
        %v1958 = vpop.f32.mrb[0].mxu0
        %v1959 = vadd.f32 %v1876, %v1958
        %1960 = vmatprep.mubr.f32.mxu0 0.0
        %1961 = vmatmul.mubr.f32.gmra.mrb[0].mxu0 %v1882
        %v1962 = vpop.f32.mrb[0].mxu0
        %v1963 = vadd.f32 %v1875, %v1962
        %v1964 = vpop.f32.mrb[0].mxu0
        %v1965 = vadd.f32 %v1876, %v1964
        %1966 = vmatprep.mubr.f32.mxu0 0.0
        %1967 = vmatmul.mubr.f32.gmra.mrb[0].mxu0 %v1885
        %v1968 = vpop.f32.mrb[0].mxu0
        %v1969 = vadd.f32 %v1875, %v1968
        %v1970 = vpop.f32.mrb[0].mxu0
        %v1971 = vadd.f32 %v1876, %v1970
        %1972 = vmatprep.mubr.f32.mxu0 0.0
        %1973 = vmatmul.mubr.f32.gmra.mrb[0].mxu0 %v1888
        %v1974 = vpop.f32.mrb[0].mxu0
        %v1975 = vadd.f32 %v1875, %v1974
        %v1976 = vpop.f32.mrb[0].mxu0
        %v1977 = vadd.f32 %v1876, %v1976
        %1978 = vdwg.mxu0
        %1983 = vrot.lane.b32.xlu0 %v1957, 116
        %v1984 = vpop.permute.xlu0 %1983
        %1985 = vrot.lane.b32.xlu0 %v1963, 116
        %v1986 = vpop.permute.xlu0 %1985
        %1987 = vrot.lane.b32.xlu0 %v1969, 116
        %v1988 = vpop.permute.xlu0 %1987
        %1989 = vrot.lane.b32.xlu0 %v1975, 116
        %v1990 = vpop.permute.xlu0 %1989
        %1995 = vrot.lane.b32.xlu0 %v1957, 104
        %v1996 = vpop.permute.xlu0 %1995
        %1997 = vrot.lane.b32.xlu0 %v1963, 104
        %v1998 = vpop.permute.xlu0 %1997
        %1999 = vrot.lane.b32.xlu0 %v1969, 104
        %v2000 = vpop.permute.xlu0 %1999
        %2001 = vrot.lane.b32.xlu0 %v1975, 104
        %v2002 = vpop.permute.xlu0 %2001
        %2007 = vrot.lane.b32.xlu0 %v1957, 92
        %v2008 = vpop.permute.xlu0 %2007
        %2009 = vrot.lane.b32.xlu0 %v1963, 92
        %v2010 = vpop.permute.xlu0 %2009
        %2011 = vrot.lane.b32.xlu0 %v1969, 92
        %v2012 = vpop.permute.xlu0 %2011
        %2013 = vrot.lane.b32.xlu0 %v1975, 92
        %v2014 = vpop.permute.xlu0 %2013
        %2019 = vrot.lane.b32.xlu0 %v1957, 80
        %v2020 = vpop.permute.xlu0 %2019
        %2021 = vrot.lane.b32.xlu0 %v1963, 80
        %v2022 = vpop.permute.xlu0 %2021
        %2023 = vrot.lane.b32.xlu0 %v1969, 80
        %v2024 = vpop.permute.xlu0 %2023
        %2025 = vrot.lane.b32.xlu0 %v1975, 80
        %v2026 = vpop.permute.xlu0 %2025
        %2031 = vrot.lane.b32.xlu0 %v1957, 68
        %v2032 = vpop.permute.xlu0 %2031
        %2033 = vrot.lane.b32.xlu0 %v1963, 68
        %v2034 = vpop.permute.xlu0 %2033
        %2035 = vrot.lane.b32.xlu0 %v1969, 68
        %v2036 = vpop.permute.xlu0 %2035
        %2037 = vrot.lane.b32.xlu0 %v1975, 68
        %v2038 = vpop.permute.xlu0 %2037
        %2043 = vrot.lane.b32.xlu0 %v1957, 56
        %v2044 = vpop.permute.xlu0 %2043
        %2045 = vrot.lane.b32.xlu0 %v1963, 56
        %v2046 = vpop.permute.xlu0 %2045
        %2047 = vrot.lane.b32.xlu0 %v1969, 56
        %v2048 = vpop.permute.xlu0 %2047
        %2049 = vrot.lane.b32.xlu0 %v1975, 56
        %v2050 = vpop.permute.xlu0 %2049
        %2055 = vrot.lane.b32.xlu0 %v1957, 44
        %v2056 = vpop.permute.xlu0 %2055
        %2057 = vrot.lane.b32.xlu0 %v1963, 44
        %v2058 = vpop.permute.xlu0 %2057
        %2059 = vrot.lane.b32.xlu0 %v1969, 44
        %v2060 = vpop.permute.xlu0 %2059
        %2061 = vrot.lane.b32.xlu0 %v1975, 44
        %v2062 = vpop.permute.xlu0 %2061
        %2067 = vrot.lane.b32.xlu0 %v1957, 32
        %v2068 = vpop.permute.xlu0 %2067
        %2069 = vrot.lane.b32.xlu0 %v1963, 32
        %v2070 = vpop.permute.xlu0 %2069
        %2071 = vrot.lane.b32.xlu0 %v1969, 32
        %v2072 = vpop.permute.xlu0 %2071
        %2073 = vrot.lane.b32.xlu0 %v1975, 32
        %v2074 = vpop.permute.xlu0 %2073
        %2079 = vrot.lane.b32.xlu0 %v1957, 20
        %v2080 = vpop.permute.xlu0 %2079
        %2081 = vrot.lane.b32.xlu0 %v1963, 20
        %v2082 = vpop.permute.xlu0 %2081
        %2083 = vrot.lane.b32.xlu0 %v1969, 20
        %v2084 = vpop.permute.xlu0 %2083
        %2085 = vrot.lane.b32.xlu0 %v1975, 20
        %v2086 = vpop.permute.xlu0 %2085
        %2095 = vrot.lane.b32.xlu0 %v1957, 8
        %v2096 = vpop.permute.xlu0 %2095
        %2097 = vrot.lane.b32.xlu0 %v1959, 8
        %v2098 = vpop.permute.xlu0 %2097
        %2099 = vrot.lane.b32.xlu0 %v1963, 8
        %v2100 = vpop.permute.xlu0 %2099
        %2101 = vrot.lane.b32.xlu0 %v1965, 8
        %v2102 = vpop.permute.xlu0 %2101
        %2103 = vrot.lane.b32.xlu0 %v1969, 8
        %v2104 = vpop.permute.xlu0 %2103
        %2105 = vrot.lane.b32.xlu0 %v1971, 8
        %v2106 = vpop.permute.xlu0 %2105
        %2107 = vrot.lane.b32.xlu0 %v1975, 8
        %v2108 = vpop.permute.xlu0 %2107
        %2109 = vrot.lane.b32.xlu0 %v1977, 8
        %v2110 = vpop.permute.xlu0 %2109
        %vm2111 = vcmask 64512
        %v2112 = vsel %vm2111, %v2096, %v2098
        %v2113 = vsel %vm2111, %v2100, %v2102
        %v2114 = vsel %vm2111, %v2104, %v2106
        %v2115 = vsel %vm2111, %v2108, %v2110
        %2120 = vrot.lane.b32.xlu0 %v1959, 124
        %v2121 = vpop.permute.xlu0 %2120
        %2122 = vrot.lane.b32.xlu0 %v1965, 124
        %v2123 = vpop.permute.xlu0 %2122
        %2124 = vrot.lane.b32.xlu0 %v1971, 124
        %v2125 = vpop.permute.xlu0 %2124
        %2126 = vrot.lane.b32.xlu0 %v1977, 124
        %v2127 = vpop.permute.xlu0 %2126
        %v2132 = vcombine.low %v1957, %v1996
        %v2133 = vcombine.high %v1957, %v1996
        %v2135 = vunpack.c.l.s4 1983009808
        %v2136 = vunpack.c.0.s8 %v2135
        %v2137 = vlaneseq
        %v2138 = vshrl.u32 %v2137, 7
        %v2139 = vsub.s32 %v2136, %v2138
        %v2140 = vrot.slane %v2132, %v2139
        %v2142 = vunpack.c.l.s4 1983009808
        %v2143 = vunpack.c.0.s8 %v2142
        %v2144 = vlaneseq
        %v2145 = vshrl.u32 %v2144, 7
        %v2146 = vsub.s32 %v2143, %v2145
        %v2147 = vrot.slane %v2133, %v2146
        %v2148 = vcombine.low %v1984, %v2008
        %v2149 = vcombine.high %v1984, %v2008
        %v2151 = vunpack.c.l.s4 1983009808
        %v2152 = vunpack.c.0.s8 %v2151
        %v2153 = vlaneseq
        %v2154 = vshrl.u32 %v2153, 7
        %v2155 = vsub.s32 %v2152, %v2154
        %v2156 = vrot.slane %v2148, %v2155
        %v2158 = vunpack.c.l.s4 1983009808
        %v2159 = vunpack.c.0.s8 %v2158
        %v2160 = vlaneseq
        %v2161 = vshrl.u32 %v2160, 7
        %v2162 = vsub.s32 %v2159, %v2161
        %v2163 = vrot.slane %v2149, %v2162
        %v2164 = vcombine.low %v2020, %v2044
        %v2165 = vcombine.high %v2020, %v2044
        %v2167 = vunpack.c.l.s4 1983009808
        %v2168 = vunpack.c.0.s8 %v2167
        %v2169 = vlaneseq
        %v2170 = vshrl.u32 %v2169, 7
        %v2171 = vsub.s32 %v2168, %v2170
        %v2172 = vrot.slane %v2164, %v2171
        %v2174 = vunpack.c.l.s4 1983009808
        %v2175 = vunpack.c.0.s8 %v2174
        %v2176 = vlaneseq
        %v2177 = vshrl.u32 %v2176, 7
        %v2178 = vsub.s32 %v2175, %v2177
        %v2179 = vrot.slane %v2165, %v2178
        %v2180 = vcombine.low %v2032, %v2056
        %v2181 = vcombine.high %v2032, %v2056
        %v2183 = vunpack.c.l.s4 1983009808
        %v2184 = vunpack.c.0.s8 %v2183
        %v2185 = vlaneseq
        %v2186 = vshrl.u32 %v2185, 7
        %v2187 = vsub.s32 %v2184, %v2186
        %v2188 = vrot.slane %v2180, %v2187
        %v2190 = vunpack.c.l.s4 1983009808
        %v2191 = vunpack.c.0.s8 %v2190
        %v2192 = vlaneseq
        %v2193 = vshrl.u32 %v2192, 7
        %v2194 = vsub.s32 %v2191, %v2193
        %v2195 = vrot.slane %v2181, %v2194
        %v2196 = vcombine.low %v2140, %v2156
        %v2197 = vcombine.high %v2140, %v2156
        %v2199 = vunpack.c.l.s4 1934713408
        %v2200 = vunpack.c.0.s8 %v2199
        %v2201 = vlaneseq
        %v2202 = vshrl.u32 %v2201, 7
        %v2203 = vsub.s32 %v2200, %v2202
        %v2204 = vrot.slane %v2196, %v2203
        %v2206 = vunpack.c.l.s4 1934713408
        %v2207 = vunpack.c.0.s8 %v2206
        %v2208 = vlaneseq
        %v2209 = vshrl.u32 %v2208, 7
        %v2210 = vsub.s32 %v2207, %v2209
        %v2211 = vrot.slane %v2197, %v2210
        %v2212 = vcombine.low %v2147, %v2163
        %v2213 = vcombine.high %v2147, %v2163
        %v2215 = vunpack.c.l.s4 1934713408
        %v2216 = vunpack.c.0.s8 %v2215
        %v2217 = vlaneseq
        %v2218 = vshrl.u32 %v2217, 7
        %v2219 = vsub.s32 %v2216, %v2218
        %v2220 = vrot.slane %v2212, %v2219
        %v2222 = vunpack.c.l.s4 1934713408
        %v2223 = vunpack.c.0.s8 %v2222
        %v2224 = vlaneseq
        %v2225 = vshrl.u32 %v2224, 7
        %v2226 = vsub.s32 %v2223, %v2225
        %v2227 = vrot.slane %v2213, %v2226
        %v2228 = vcombine.low %v2172, %v2188
        %v2229 = vcombine.high %v2172, %v2188
        %v2231 = vunpack.c.l.s4 1934713408
        %v2232 = vunpack.c.0.s8 %v2231
        %v2233 = vlaneseq
        %v2234 = vshrl.u32 %v2233, 7
        %v2235 = vsub.s32 %v2232, %v2234
        %v2236 = vrot.slane %v2228, %v2235
        %v2238 = vunpack.c.l.s4 1934713408
        %v2239 = vunpack.c.0.s8 %v2238
        %v2240 = vlaneseq
        %v2241 = vshrl.u32 %v2240, 7
        %v2242 = vsub.s32 %v2239, %v2241
        %v2243 = vrot.slane %v2229, %v2242
        %v2244 = vcombine.low %v2179, %v2195
        %v2245 = vcombine.high %v2179, %v2195
        %v2247 = vunpack.c.l.s4 1934713408
        %v2248 = vunpack.c.0.s8 %v2247
        %v2249 = vlaneseq
        %v2250 = vshrl.u32 %v2249, 7
        %v2251 = vsub.s32 %v2248, %v2250
        %v2252 = vrot.slane %v2244, %v2251
        %v2254 = vunpack.c.l.s4 1934713408
        %v2255 = vunpack.c.0.s8 %v2254
        %v2256 = vlaneseq
        %v2257 = vshrl.u32 %v2256, 7
        %v2258 = vsub.s32 %v2255, %v2257
        %v2259 = vrot.slane %v2245, %v2258
        %v2260 = vcombine.low %v2204, %v2236
        %v2261 = vcombine.high %v2204, %v2236
        %v2262 = vcombine.low %v2211, %v2243
        %v2263 = vcombine.high %v2211, %v2243
        %v2264 = vcombine.low %v2220, %v2252
        %v2265 = vcombine.high %v2220, %v2252
        %v2266 = vcombine.low %v2227, %v2259
        %v2267 = vcombine.high %v2227, %v2259
        %v2268 = vcombine.low %v2068, %v2112
        %v2269 = vcombine.high %v2068, %v2112
        %v2271 = vunpack.c.l.s4 1983009808
        %v2272 = vunpack.c.0.s8 %v2271
        %v2273 = vlaneseq
        %v2274 = vshrl.u32 %v2273, 7
        %v2275 = vsub.s32 %v2272, %v2274
        %v2276 = vrot.slane %v2268, %v2275
        %v2278 = vunpack.c.l.s4 1983009808
        %v2279 = vunpack.c.0.s8 %v2278
        %v2280 = vlaneseq
        %v2281 = vshrl.u32 %v2280, 7
        %v2282 = vsub.s32 %v2279, %v2281
        %v2283 = vrot.slane %v2269, %v2282
        %v2284 = vcombine.low %v2080, %v2121
        %v2285 = vcombine.high %v2080, %v2121
        %v2287 = vunpack.c.l.s4 1983009808
        %v2288 = vunpack.c.0.s8 %v2287
        %v2289 = vlaneseq
        %v2290 = vshrl.u32 %v2289, 7
        %v2291 = vsub.s32 %v2288, %v2290
        %v2292 = vrot.slane %v2284, %v2291
        %v2294 = vunpack.c.l.s4 1983009808
        %v2295 = vunpack.c.0.s8 %v2294
        %v2296 = vlaneseq
        %v2297 = vshrl.u32 %v2296, 7
        %v2298 = vsub.s32 %v2295, %v2297
        %v2299 = vrot.slane %v2285, %v2298
        %v2300 = vcombine.low %v2276, %v2292
        %v2301 = vcombine.high %v2276, %v2292
        %v2303 = vunpack.c.l.s4 1934713408
        %v2304 = vunpack.c.0.s8 %v2303
        %v2305 = vlaneseq
        %v2306 = vshrl.u32 %v2305, 7
        %v2307 = vsub.s32 %v2304, %v2306
        %v2308 = vrot.slane %v2300, %v2307
        %v2310 = vunpack.c.l.s4 1934713408
        %v2311 = vunpack.c.0.s8 %v2310
        %v2312 = vlaneseq
        %v2313 = vshrl.u32 %v2312, 7
        %v2314 = vsub.s32 %v2311, %v2313
        %v2315 = vrot.slane %v2301, %v2314
        %v2316 = vcombine.low %v2283, %v2299
        %v2317 = vcombine.high %v2283, %v2299
        %v2319 = vunpack.c.l.s4 1934713408
        %v2320 = vunpack.c.0.s8 %v2319
        %v2321 = vlaneseq
        %v2322 = vshrl.u32 %v2321, 7
        %v2323 = vsub.s32 %v2320, %v2322
        %v2324 = vrot.slane %v2316, %v2323
        %v2326 = vunpack.c.l.s4 1934713408
        %v2327 = vunpack.c.0.s8 %v2326
        %v2328 = vlaneseq
        %v2329 = vshrl.u32 %v2328, 7
        %v2330 = vsub.s32 %v2327, %v2329
        %v2331 = vrot.slane %v2317, %v2330
        %v2332 = vcombine.high %v2308, 0.0
        %v2333 = vcombine.high %v2315, 0.0
        %v2334 = vcombine.high %v2324, 0.0
        %v2335 = vcombine.high %v2331, 0.0
        %v2336 = vcombine.low %v1963, %v1998
        %v2337 = vcombine.high %v1963, %v1998
        %v2339 = vunpack.c.l.s4 1983009808
        %v2340 = vunpack.c.0.s8 %v2339
        %v2341 = vlaneseq
        %v2342 = vshrl.u32 %v2341, 7
        %v2343 = vsub.s32 %v2340, %v2342
        %v2344 = vrot.slane %v2336, %v2343
        %v2346 = vunpack.c.l.s4 1983009808
        %v2347 = vunpack.c.0.s8 %v2346
        %v2348 = vlaneseq
        %v2349 = vshrl.u32 %v2348, 7
        %v2350 = vsub.s32 %v2347, %v2349
        %v2351 = vrot.slane %v2337, %v2350
        %v2352 = vcombine.low %v1986, %v2010
        %v2353 = vcombine.high %v1986, %v2010
        %v2355 = vunpack.c.l.s4 1983009808
        %v2356 = vunpack.c.0.s8 %v2355
        %v2357 = vlaneseq
        %v2358 = vshrl.u32 %v2357, 7
        %v2359 = vsub.s32 %v2356, %v2358
        %v2360 = vrot.slane %v2352, %v2359
        %v2362 = vunpack.c.l.s4 1983009808
        %v2363 = vunpack.c.0.s8 %v2362
        %v2364 = vlaneseq
        %v2365 = vshrl.u32 %v2364, 7
        %v2366 = vsub.s32 %v2363, %v2365
        %v2367 = vrot.slane %v2353, %v2366
        %v2368 = vcombine.low %v2022, %v2046
        %v2369 = vcombine.high %v2022, %v2046
        %v2371 = vunpack.c.l.s4 1983009808
        %v2372 = vunpack.c.0.s8 %v2371
        %v2373 = vlaneseq
        %v2374 = vshrl.u32 %v2373, 7
        %v2375 = vsub.s32 %v2372, %v2374
        %v2376 = vrot.slane %v2368, %v2375
        %v2378 = vunpack.c.l.s4 1983009808
        %v2379 = vunpack.c.0.s8 %v2378
        %v2380 = vlaneseq
        %v2381 = vshrl.u32 %v2380, 7
        %v2382 = vsub.s32 %v2379, %v2381
        %v2383 = vrot.slane %v2369, %v2382
        %v2384 = vcombine.low %v2034, %v2058
        %v2385 = vcombine.high %v2034, %v2058
        %v2387 = vunpack.c.l.s4 1983009808
        %v2388 = vunpack.c.0.s8 %v2387
        %v2389 = vlaneseq
        %v2390 = vshrl.u32 %v2389, 7
        %v2391 = vsub.s32 %v2388, %v2390
        %v2392 = vrot.slane %v2384, %v2391
        %v2394 = vunpack.c.l.s4 1983009808
        %v2395 = vunpack.c.0.s8 %v2394
        %v2396 = vlaneseq
        %v2397 = vshrl.u32 %v2396, 7
        %v2398 = vsub.s32 %v2395, %v2397
        %v2399 = vrot.slane %v2385, %v2398
        %v2400 = vcombine.low %v2344, %v2360
        %v2401 = vcombine.high %v2344, %v2360
        %v2403 = vunpack.c.l.s4 1934713408
        %v2404 = vunpack.c.0.s8 %v2403
        %v2405 = vlaneseq
        %v2406 = vshrl.u32 %v2405, 7
        %v2407 = vsub.s32 %v2404, %v2406
        %v2408 = vrot.slane %v2400, %v2407
        %v2410 = vunpack.c.l.s4 1934713408
        %v2411 = vunpack.c.0.s8 %v2410
        %v2412 = vlaneseq
        %v2413 = vshrl.u32 %v2412, 7
        %v2414 = vsub.s32 %v2411, %v2413
        %v2415 = vrot.slane %v2401, %v2414
        %v2416 = vcombine.low %v2351, %v2367
        %v2417 = vcombine.high %v2351, %v2367
        %v2419 = vunpack.c.l.s4 1934713408
        %v2420 = vunpack.c.0.s8 %v2419
        %v2421 = vlaneseq
        %v2422 = vshrl.u32 %v2421, 7
        %v2423 = vsub.s32 %v2420, %v2422
        %v2424 = vrot.slane %v2416, %v2423
        %v2426 = vunpack.c.l.s4 1934713408
        %v2427 = vunpack.c.0.s8 %v2426
        %v2428 = vlaneseq
        %v2429 = vshrl.u32 %v2428, 7
        %v2430 = vsub.s32 %v2427, %v2429
        %v2431 = vrot.slane %v2417, %v2430
        %v2432 = vcombine.low %v2376, %v2392
        %v2433 = vcombine.high %v2376, %v2392
        %v2435 = vunpack.c.l.s4 1934713408
        %v2436 = vunpack.c.0.s8 %v2435
        %v2437 = vlaneseq
        %v2438 = vshrl.u32 %v2437, 7
        %v2439 = vsub.s32 %v2436, %v2438
        %v2440 = vrot.slane %v2432, %v2439
        %v2442 = vunpack.c.l.s4 1934713408
        %v2443 = vunpack.c.0.s8 %v2442
        %v2444 = vlaneseq
        %v2445 = vshrl.u32 %v2444, 7
        %v2446 = vsub.s32 %v2443, %v2445
        %v2447 = vrot.slane %v2433, %v2446
        %v2448 = vcombine.low %v2383, %v2399
        %v2449 = vcombine.high %v2383, %v2399
        %v2451 = vunpack.c.l.s4 1934713408
        %v2452 = vunpack.c.0.s8 %v2451
        %v2453 = vlaneseq
        %v2454 = vshrl.u32 %v2453, 7
        %v2455 = vsub.s32 %v2452, %v2454
        %v2456 = vrot.slane %v2448, %v2455
        %v2458 = vunpack.c.l.s4 1934713408
        %v2459 = vunpack.c.0.s8 %v2458
        %v2460 = vlaneseq
        %v2461 = vshrl.u32 %v2460, 7
        %v2462 = vsub.s32 %v2459, %v2461
        %v2463 = vrot.slane %v2449, %v2462
        %v2464 = vcombine.low %v2408, %v2440
        %v2465 = vcombine.high %v2408, %v2440
        %v2466 = vcombine.low %v2415, %v2447
        %v2467 = vcombine.high %v2415, %v2447
        %v2468 = vcombine.low %v2424, %v2456
        %v2469 = vcombine.high %v2424, %v2456
        %v2470 = vcombine.low %v2431, %v2463
        %v2471 = vcombine.high %v2431, %v2463
        %v2472 = vcombine.low %v2070, %v2113
        %v2473 = vcombine.high %v2070, %v2113
        %v2475 = vunpack.c.l.s4 1983009808
        %v2476 = vunpack.c.0.s8 %v2475
        %v2477 = vlaneseq
        %v2478 = vshrl.u32 %v2477, 7
        %v2479 = vsub.s32 %v2476, %v2478
        %v2480 = vrot.slane %v2472, %v2479
        %v2482 = vunpack.c.l.s4 1983009808
        %v2483 = vunpack.c.0.s8 %v2482
        %v2484 = vlaneseq
        %v2485 = vshrl.u32 %v2484, 7
        %v2486 = vsub.s32 %v2483, %v2485
        %v2487 = vrot.slane %v2473, %v2486
        %v2488 = vcombine.low %v2082, %v2123
        %v2489 = vcombine.high %v2082, %v2123
        %v2491 = vunpack.c.l.s4 1983009808
        %v2492 = vunpack.c.0.s8 %v2491
        %v2493 = vlaneseq
        %v2494 = vshrl.u32 %v2493, 7
        %v2495 = vsub.s32 %v2492, %v2494
        %v2496 = vrot.slane %v2488, %v2495
        %v2498 = vunpack.c.l.s4 1983009808
        %v2499 = vunpack.c.0.s8 %v2498
        %v2500 = vlaneseq
        %v2501 = vshrl.u32 %v2500, 7
        %v2502 = vsub.s32 %v2499, %v2501
        %v2503 = vrot.slane %v2489, %v2502
        %v2504 = vcombine.low %v2480, %v2496
        %v2505 = vcombine.high %v2480, %v2496
        %v2507 = vunpack.c.l.s4 1934713408
        %v2508 = vunpack.c.0.s8 %v2507
        %v2509 = vlaneseq
        %v2510 = vshrl.u32 %v2509, 7
        %v2511 = vsub.s32 %v2508, %v2510
        %v2512 = vrot.slane %v2504, %v2511
        %v2514 = vunpack.c.l.s4 1934713408
        %v2515 = vunpack.c.0.s8 %v2514
        %v2516 = vlaneseq
        %v2517 = vshrl.u32 %v2516, 7
        %v2518 = vsub.s32 %v2515, %v2517
        %v2519 = vrot.slane %v2505, %v2518
        %v2520 = vcombine.low %v2487, %v2503
        %v2521 = vcombine.high %v2487, %v2503
        %v2523 = vunpack.c.l.s4 1934713408
        %v2524 = vunpack.c.0.s8 %v2523
        %v2525 = vlaneseq
        %v2526 = vshrl.u32 %v2525, 7
        %v2527 = vsub.s32 %v2524, %v2526
        %v2528 = vrot.slane %v2520, %v2527
        %v2530 = vunpack.c.l.s4 1934713408
        %v2531 = vunpack.c.0.s8 %v2530
        %v2532 = vlaneseq
        %v2533 = vshrl.u32 %v2532, 7
        %v2534 = vsub.s32 %v2531, %v2533
        %v2535 = vrot.slane %v2521, %v2534
        %v2536 = vcombine.high %v2512, 0.0
        %v2537 = vcombine.high %v2519, 0.0
        %v2538 = vcombine.high %v2528, 0.0
        %v2539 = vcombine.high %v2535, 0.0
        %v2540 = vcombine.low %v1969, %v2000
        %v2541 = vcombine.high %v1969, %v2000
        %v2543 = vunpack.c.l.s4 1983009808
        %v2544 = vunpack.c.0.s8 %v2543
        %v2545 = vlaneseq
        %v2546 = vshrl.u32 %v2545, 7
        %v2547 = vsub.s32 %v2544, %v2546
        %v2548 = vrot.slane %v2540, %v2547
        %v2550 = vunpack.c.l.s4 1983009808
        %v2551 = vunpack.c.0.s8 %v2550
        %v2552 = vlaneseq
        %v2553 = vshrl.u32 %v2552, 7
        %v2554 = vsub.s32 %v2551, %v2553
        %v2555 = vrot.slane %v2541, %v2554
        %v2556 = vcombine.low %v1988, %v2012
        %v2557 = vcombine.high %v1988, %v2012
        %v2559 = vunpack.c.l.s4 1983009808
        %v2560 = vunpack.c.0.s8 %v2559
        %v2561 = vlaneseq
        %v2562 = vshrl.u32 %v2561, 7
        %v2563 = vsub.s32 %v2560, %v2562
        %v2564 = vrot.slane %v2556, %v2563
        %v2566 = vunpack.c.l.s4 1983009808
        %v2567 = vunpack.c.0.s8 %v2566
        %v2568 = vlaneseq
        %v2569 = vshrl.u32 %v2568, 7
        %v2570 = vsub.s32 %v2567, %v2569
        %v2571 = vrot.slane %v2557, %v2570
        %v2572 = vcombine.low %v2024, %v2048
        %v2573 = vcombine.high %v2024, %v2048
        %v2575 = vunpack.c.l.s4 1983009808
        %v2576 = vunpack.c.0.s8 %v2575
        %v2577 = vlaneseq
        %v2578 = vshrl.u32 %v2577, 7
        %v2579 = vsub.s32 %v2576, %v2578
        %v2580 = vrot.slane %v2572, %v2579
        %v2582 = vunpack.c.l.s4 1983009808
        %v2583 = vunpack.c.0.s8 %v2582
        %v2584 = vlaneseq
        %v2585 = vshrl.u32 %v2584, 7
        %v2586 = vsub.s32 %v2583, %v2585
        %v2587 = vrot.slane %v2573, %v2586
        %v2588 = vcombine.low %v2036, %v2060
        %v2589 = vcombine.high %v2036, %v2060
        %v2591 = vunpack.c.l.s4 1983009808
        %v2592 = vunpack.c.0.s8 %v2591
        %v2593 = vlaneseq
        %v2594 = vshrl.u32 %v2593, 7
        %v2595 = vsub.s32 %v2592, %v2594
        %v2596 = vrot.slane %v2588, %v2595
        %v2598 = vunpack.c.l.s4 1983009808
        %v2599 = vunpack.c.0.s8 %v2598
        %v2600 = vlaneseq
        %v2601 = vshrl.u32 %v2600, 7
        %v2602 = vsub.s32 %v2599, %v2601
        %v2603 = vrot.slane %v2589, %v2602
        %v2604 = vcombine.low %v2548, %v2564
        %v2605 = vcombine.high %v2548, %v2564
        %v2607 = vunpack.c.l.s4 1934713408
        %v2608 = vunpack.c.0.s8 %v2607
        %v2609 = vlaneseq
        %v2610 = vshrl.u32 %v2609, 7
        %v2611 = vsub.s32 %v2608, %v2610
        %v2612 = vrot.slane %v2604, %v2611
        %v2614 = vunpack.c.l.s4 1934713408
        %v2615 = vunpack.c.0.s8 %v2614
        %v2616 = vlaneseq
        %v2617 = vshrl.u32 %v2616, 7
        %v2618 = vsub.s32 %v2615, %v2617
        %v2619 = vrot.slane %v2605, %v2618
        %v2620 = vcombine.low %v2555, %v2571
        %v2621 = vcombine.high %v2555, %v2571
        %v2623 = vunpack.c.l.s4 1934713408
        %v2624 = vunpack.c.0.s8 %v2623
        %v2625 = vlaneseq
        %v2626 = vshrl.u32 %v2625, 7
        %v2627 = vsub.s32 %v2624, %v2626
        %v2628 = vrot.slane %v2620, %v2627
        %v2630 = vunpack.c.l.s4 1934713408
        %v2631 = vunpack.c.0.s8 %v2630
        %v2632 = vlaneseq
        %v2633 = vshrl.u32 %v2632, 7
        %v2634 = vsub.s32 %v2631, %v2633
        %v2635 = vrot.slane %v2621, %v2634
        %v2636 = vcombine.low %v2580, %v2596
        %v2637 = vcombine.high %v2580, %v2596
        %v2639 = vunpack.c.l.s4 1934713408
        %v2640 = vunpack.c.0.s8 %v2639
        %v2641 = vlaneseq
        %v2642 = vshrl.u32 %v2641, 7
        %v2643 = vsub.s32 %v2640, %v2642
        %v2644 = vrot.slane %v2636, %v2643
        %v2646 = vunpack.c.l.s4 1934713408
        %v2647 = vunpack.c.0.s8 %v2646
        %v2648 = vlaneseq
        %v2649 = vshrl.u32 %v2648, 7
        %v2650 = vsub.s32 %v2647, %v2649
        %v2651 = vrot.slane %v2637, %v2650
        %v2652 = vcombine.low %v2587, %v2603
        %v2653 = vcombine.high %v2587, %v2603
        %v2655 = vunpack.c.l.s4 1934713408
        %v2656 = vunpack.c.0.s8 %v2655
        %v2657 = vlaneseq
        %v2658 = vshrl.u32 %v2657, 7
        %v2659 = vsub.s32 %v2656, %v2658
        %v2660 = vrot.slane %v2652, %v2659
        %v2662 = vunpack.c.l.s4 1934713408
        %v2663 = vunpack.c.0.s8 %v2662
        %v2664 = vlaneseq
        %v2665 = vshrl.u32 %v2664, 7
        %v2666 = vsub.s32 %v2663, %v2665
        %v2667 = vrot.slane %v2653, %v2666
        %v2668 = vcombine.low %v2612, %v2644
        %v2669 = vcombine.high %v2612, %v2644
        %v2670 = vcombine.low %v2619, %v2651
        %v2671 = vcombine.high %v2619, %v2651
        %v2672 = vcombine.low %v2628, %v2660
        %v2673 = vcombine.high %v2628, %v2660
        %v2674 = vcombine.low %v2635, %v2667
        %v2675 = vcombine.high %v2635, %v2667
        %v2676 = vcombine.low %v2072, %v2114
        %v2677 = vcombine.high %v2072, %v2114
        %v2679 = vunpack.c.l.s4 1983009808
        %v2680 = vunpack.c.0.s8 %v2679
        %v2681 = vlaneseq
        %v2682 = vshrl.u32 %v2681, 7
        %v2683 = vsub.s32 %v2680, %v2682
        %v2684 = vrot.slane %v2676, %v2683
        %v2686 = vunpack.c.l.s4 1983009808
        %v2687 = vunpack.c.0.s8 %v2686
        %v2688 = vlaneseq
        %v2689 = vshrl.u32 %v2688, 7
        %v2690 = vsub.s32 %v2687, %v2689
        %v2691 = vrot.slane %v2677, %v2690
        %v2692 = vcombine.low %v2084, %v2125
        %v2693 = vcombine.high %v2084, %v2125
        %v2695 = vunpack.c.l.s4 1983009808
        %v2696 = vunpack.c.0.s8 %v2695
        %v2697 = vlaneseq
        %v2698 = vshrl.u32 %v2697, 7
        %v2699 = vsub.s32 %v2696, %v2698
        %v2700 = vrot.slane %v2692, %v2699
        %v2702 = vunpack.c.l.s4 1983009808
        %v2703 = vunpack.c.0.s8 %v2702
        %v2704 = vlaneseq
        %v2705 = vshrl.u32 %v2704, 7
        %v2706 = vsub.s32 %v2703, %v2705
        %v2707 = vrot.slane %v2693, %v2706
        %v2708 = vcombine.low %v2684, %v2700
        %v2709 = vcombine.high %v2684, %v2700
        %v2711 = vunpack.c.l.s4 1934713408
        %v2712 = vunpack.c.0.s8 %v2711
        %v2713 = vlaneseq
        %v2714 = vshrl.u32 %v2713, 7
        %v2715 = vsub.s32 %v2712, %v2714
        %v2716 = vrot.slane %v2708, %v2715
        %v2718 = vunpack.c.l.s4 1934713408
        %v2719 = vunpack.c.0.s8 %v2718
        %v2720 = vlaneseq
        %v2721 = vshrl.u32 %v2720, 7
        %v2722 = vsub.s32 %v2719, %v2721
        %v2723 = vrot.slane %v2709, %v2722
        %v2724 = vcombine.low %v2691, %v2707
        %v2725 = vcombine.high %v2691, %v2707
        %v2727 = vunpack.c.l.s4 1934713408
        %v2728 = vunpack.c.0.s8 %v2727
        %v2729 = vlaneseq
        %v2730 = vshrl.u32 %v2729, 7
        %v2731 = vsub.s32 %v2728, %v2730
        %v2732 = vrot.slane %v2724, %v2731
        %v2734 = vunpack.c.l.s4 1934713408
        %v2735 = vunpack.c.0.s8 %v2734
        %v2736 = vlaneseq
        %v2737 = vshrl.u32 %v2736, 7
        %v2738 = vsub.s32 %v2735, %v2737
        %v2739 = vrot.slane %v2725, %v2738
        %v2740 = vcombine.high %v2716, 0.0
        %v2741 = vcombine.high %v2723, 0.0
        %v2742 = vcombine.high %v2732, 0.0
        %v2743 = vcombine.high %v2739, 0.0
        %v2744 = vcombine.low %v1975, %v2002
        %v2745 = vcombine.high %v1975, %v2002
        %v2747 = vunpack.c.l.s4 1983009808
        %v2748 = vunpack.c.0.s8 %v2747
        %v2749 = vlaneseq
        %v2750 = vshrl.u32 %v2749, 7
        %v2751 = vsub.s32 %v2748, %v2750
        %v2752 = vrot.slane %v2744, %v2751
        %v2754 = vunpack.c.l.s4 1983009808
        %v2755 = vunpack.c.0.s8 %v2754
        %v2756 = vlaneseq
        %v2757 = vshrl.u32 %v2756, 7
        %v2758 = vsub.s32 %v2755, %v2757
        %v2759 = vrot.slane %v2745, %v2758
        %v2760 = vcombine.low %v1990, %v2014
        %v2761 = vcombine.high %v1990, %v2014
        %v2763 = vunpack.c.l.s4 1983009808
        %v2764 = vunpack.c.0.s8 %v2763
        %v2765 = vlaneseq
        %v2766 = vshrl.u32 %v2765, 7
        %v2767 = vsub.s32 %v2764, %v2766
        %v2768 = vrot.slane %v2760, %v2767
        %v2770 = vunpack.c.l.s4 1983009808
        %v2771 = vunpack.c.0.s8 %v2770
        %v2772 = vlaneseq
        %v2773 = vshrl.u32 %v2772, 7
        %v2774 = vsub.s32 %v2771, %v2773
        %v2775 = vrot.slane %v2761, %v2774
        %v2776 = vcombine.low %v2026, %v2050
        %v2777 = vcombine.high %v2026, %v2050
        %v2779 = vunpack.c.l.s4 1983009808
        %v2780 = vunpack.c.0.s8 %v2779
        %v2781 = vlaneseq
        %v2782 = vshrl.u32 %v2781, 7
        %v2783 = vsub.s32 %v2780, %v2782
        %v2784 = vrot.slane %v2776, %v2783
        %v2786 = vunpack.c.l.s4 1983009808
        %v2787 = vunpack.c.0.s8 %v2786
        %v2788 = vlaneseq
        %v2789 = vshrl.u32 %v2788, 7
        %v2790 = vsub.s32 %v2787, %v2789
        %v2791 = vrot.slane %v2777, %v2790
        %v2792 = vcombine.low %v2038, %v2062
        %v2793 = vcombine.high %v2038, %v2062
        %v2795 = vunpack.c.l.s4 1983009808
        %v2796 = vunpack.c.0.s8 %v2795
        %v2797 = vlaneseq
        %v2798 = vshrl.u32 %v2797, 7
        %v2799 = vsub.s32 %v2796, %v2798
        %v2800 = vrot.slane %v2792, %v2799
        %v2802 = vunpack.c.l.s4 1983009808
        %v2803 = vunpack.c.0.s8 %v2802
        %v2804 = vlaneseq
        %v2805 = vshrl.u32 %v2804, 7
        %v2806 = vsub.s32 %v2803, %v2805
        %v2807 = vrot.slane %v2793, %v2806
        %v2808 = vcombine.low %v2752, %v2768
        %v2809 = vcombine.high %v2752, %v2768
        %v2811 = vunpack.c.l.s4 1934713408
        %v2812 = vunpack.c.0.s8 %v2811
        %v2813 = vlaneseq
        %v2814 = vshrl.u32 %v2813, 7
        %v2815 = vsub.s32 %v2812, %v2814
        %v2816 = vrot.slane %v2808, %v2815
        %v2818 = vunpack.c.l.s4 1934713408
        %v2819 = vunpack.c.0.s8 %v2818
        %v2820 = vlaneseq
        %v2821 = vshrl.u32 %v2820, 7
        %v2822 = vsub.s32 %v2819, %v2821
        %v2823 = vrot.slane %v2809, %v2822
        %v2824 = vcombine.low %v2759, %v2775
        %v2825 = vcombine.high %v2759, %v2775
        %v2827 = vunpack.c.l.s4 1934713408
        %v2828 = vunpack.c.0.s8 %v2827
        %v2829 = vlaneseq
        %v2830 = vshrl.u32 %v2829, 7
        %v2831 = vsub.s32 %v2828, %v2830
        %v2832 = vrot.slane %v2824, %v2831
        %v2834 = vunpack.c.l.s4 1934713408
        %v2835 = vunpack.c.0.s8 %v2834
        %v2836 = vlaneseq
        %v2837 = vshrl.u32 %v2836, 7
        %v2838 = vsub.s32 %v2835, %v2837
        %v2839 = vrot.slane %v2825, %v2838
        %v2840 = vcombine.low %v2784, %v2800
        %v2841 = vcombine.high %v2784, %v2800
        %v2843 = vunpack.c.l.s4 1934713408
        %v2844 = vunpack.c.0.s8 %v2843
        %v2845 = vlaneseq
        %v2846 = vshrl.u32 %v2845, 7
        %v2847 = vsub.s32 %v2844, %v2846
        %v2848 = vrot.slane %v2840, %v2847
        %v2850 = vunpack.c.l.s4 1934713408
        %v2851 = vunpack.c.0.s8 %v2850
        %v2852 = vlaneseq
        %v2853 = vshrl.u32 %v2852, 7
        %v2854 = vsub.s32 %v2851, %v2853
        %v2855 = vrot.slane %v2841, %v2854
        %v2856 = vcombine.low %v2791, %v2807
        %v2857 = vcombine.high %v2791, %v2807
        %v2859 = vunpack.c.l.s4 1934713408
        %v2860 = vunpack.c.0.s8 %v2859
        %v2861 = vlaneseq
        %v2862 = vshrl.u32 %v2861, 7
        %v2863 = vsub.s32 %v2860, %v2862
        %v2864 = vrot.slane %v2856, %v2863
        %v2866 = vunpack.c.l.s4 1934713408
        %v2867 = vunpack.c.0.s8 %v2866
        %v2868 = vlaneseq
        %v2869 = vshrl.u32 %v2868, 7
        %v2870 = vsub.s32 %v2867, %v2869
        %v2871 = vrot.slane %v2857, %v2870
        %v2872 = vcombine.low %v2816, %v2848
        %v2873 = vcombine.high %v2816, %v2848
        %v2874 = vcombine.low %v2823, %v2855
        %v2875 = vcombine.high %v2823, %v2855
        %v2876 = vcombine.low %v2832, %v2864
        %v2877 = vcombine.high %v2832, %v2864
        %v2878 = vcombine.low %v2839, %v2871
        %v2879 = vcombine.high %v2839, %v2871
        %v2880 = vcombine.low %v2074, %v2115
        %v2881 = vcombine.high %v2074, %v2115
        %v2883 = vunpack.c.l.s4 1983009808
        %v2884 = vunpack.c.0.s8 %v2883
        %v2885 = vlaneseq
        %v2886 = vshrl.u32 %v2885, 7
        %v2887 = vsub.s32 %v2884, %v2886
        %v2888 = vrot.slane %v2880, %v2887
        %v2890 = vunpack.c.l.s4 1983009808
        %v2891 = vunpack.c.0.s8 %v2890
        %v2892 = vlaneseq
        %v2893 = vshrl.u32 %v2892, 7
        %v2894 = vsub.s32 %v2891, %v2893
        %v2895 = vrot.slane %v2881, %v2894
        %v2896 = vcombine.low %v2086, %v2127
        %v2897 = vcombine.high %v2086, %v2127
        %v2899 = vunpack.c.l.s4 1983009808
        %v2900 = vunpack.c.0.s8 %v2899
        %v2901 = vlaneseq
        %v2902 = vshrl.u32 %v2901, 7
        %v2903 = vsub.s32 %v2900, %v2902
        %v2904 = vrot.slane %v2896, %v2903
        %v2906 = vunpack.c.l.s4 1983009808
        %v2907 = vunpack.c.0.s8 %v2906
        %v2908 = vlaneseq
        %v2909 = vshrl.u32 %v2908, 7
        %v2910 = vsub.s32 %v2907, %v2909
        %v2911 = vrot.slane %v2897, %v2910
        %v2912 = vcombine.low %v2888, %v2904
        %v2913 = vcombine.high %v2888, %v2904
        %v2915 = vunpack.c.l.s4 1934713408
        %v2916 = vunpack.c.0.s8 %v2915
        %v2917 = vlaneseq
        %v2918 = vshrl.u32 %v2917, 7
        %v2919 = vsub.s32 %v2916, %v2918
        %v2920 = vrot.slane %v2912, %v2919
        %v2922 = vunpack.c.l.s4 1934713408
        %v2923 = vunpack.c.0.s8 %v2922
        %v2924 = vlaneseq
        %v2925 = vshrl.u32 %v2924, 7
        %v2926 = vsub.s32 %v2923, %v2925
        %v2927 = vrot.slane %v2913, %v2926
        %v2928 = vcombine.low %v2895, %v2911
        %v2929 = vcombine.high %v2895, %v2911
        %v2931 = vunpack.c.l.s4 1934713408
        %v2932 = vunpack.c.0.s8 %v2931
        %v2933 = vlaneseq
        %v2934 = vshrl.u32 %v2933, 7
        %v2935 = vsub.s32 %v2932, %v2934
        %v2936 = vrot.slane %v2928, %v2935
        %v2938 = vunpack.c.l.s4 1934713408
        %v2939 = vunpack.c.0.s8 %v2938
        %v2940 = vlaneseq
        %v2941 = vshrl.u32 %v2940, 7
        %v2942 = vsub.s32 %v2939, %v2941
        %v2943 = vrot.slane %v2929, %v2942
        %v2944 = vcombine.high %v2920, 0.0
        %v2945 = vcombine.high %v2927, 0.0
        %v2946 = vcombine.high %v2936, 0.0
        %v2947 = vcombine.high %v2943, 0.0
        %v2948 = vmax.f32 %v2260, 0.0
        %v2949 = vmax.f32 %v2308, 0.0
        %v2950 = vmax.f32 %v2261, 0.0
        %v2951 = vmax.f32 %v2332, 0.0
        %v2952 = vmax.f32 %v2262, 0.0
        %v2953 = vmax.f32 %v2315, 0.0
        %v2954 = vmax.f32 %v2263, 0.0
        %v2955 = vmax.f32 %v2333, 0.0
        %v2956 = vmax.f32 %v2264, 0.0
        %v2957 = vmax.f32 %v2324, 0.0
        %v2958 = vmax.f32 %v2265, 0.0
        %v2959 = vmax.f32 %v2334, 0.0
        %v2960 = vmax.f32 %v2266, 0.0
        %v2961 = vmax.f32 %v2331, 0.0
        %v2962 = vmax.f32 %v2267, 0.0
        %v2963 = vmax.f32 %v2335, 0.0
        %v2964 = vmax.f32 %v2464, 0.0
        %v2965 = vmax.f32 %v2512, 0.0
        %v2966 = vmax.f32 %v2465, 0.0
        %v2967 = vmax.f32 %v2536, 0.0
        %v2968 = vmax.f32 %v2466, 0.0
        %v2969 = vmax.f32 %v2519, 0.0
        %v2970 = vmax.f32 %v2467, 0.0
        %v2971 = vmax.f32 %v2537, 0.0
        %v2972 = vmax.f32 %v2468, 0.0
        %v2973 = vmax.f32 %v2528, 0.0
        %v2974 = vmax.f32 %v2469, 0.0
        %v2975 = vmax.f32 %v2538, 0.0
        %v2976 = vmax.f32 %v2470, 0.0
        %v2977 = vmax.f32 %v2535, 0.0
        %v2978 = vmax.f32 %v2471, 0.0
        %v2979 = vmax.f32 %v2539, 0.0
        %v2980 = vmax.f32 %v2668, 0.0
        %v2981 = vmax.f32 %v2716, 0.0
        %v2982 = vmax.f32 %v2669, 0.0
        %v2983 = vmax.f32 %v2740, 0.0
        %v2984 = vmax.f32 %v2670, 0.0
        %v2985 = vmax.f32 %v2723, 0.0
        %v2986 = vmax.f32 %v2671, 0.0
        %v2987 = vmax.f32 %v2741, 0.0
        %v2988 = vmax.f32 %v2672, 0.0
        %v2989 = vmax.f32 %v2732, 0.0
        %v2990 = vmax.f32 %v2673, 0.0
        %v2991 = vmax.f32 %v2742, 0.0
        %v2992 = vmax.f32 %v2674, 0.0
        %v2993 = vmax.f32 %v2739, 0.0
        %v2994 = vmax.f32 %v2675, 0.0
        %v2995 = vmax.f32 %v2743, 0.0
        %v2996 = vmax.f32 %v2872, 0.0
        %v2997 = vmax.f32 %v2920, 0.0
        %v2998 = vmax.f32 %v2873, 0.0
        %v2999 = vmax.f32 %v2944, 0.0
        %v3000 = vmax.f32 %v2874, 0.0
        %v3001 = vmax.f32 %v2927, 0.0
        %v3002 = vmax.f32 %v2875, 0.0
        %v3003 = vmax.f32 %v2945, 0.0
        %v3004 = vmax.f32 %v2876, 0.0
        %v3005 = vmax.f32 %v2936, 0.0
        %v3006 = vmax.f32 %v2877, 0.0
        %v3007 = vmax.f32 %v2946, 0.0
        %v3008 = vmax.f32 %v2878, 0.0
        %v3009 = vmax.f32 %v2943, 0.0
        %v3010 = vmax.f32 %v2879, 0.0
        %v3011 = vmax.f32 %v2947, 0.0
        %v3012 = vld [vmem:[#allocation6] sm:$0xff]
        %v3013 = vcombine.low %v2948, %v2952
        %v3014 = vcombine.high %v2948, %v2952
        %v3016 = vunpack.c.l.s4 1983009808
        %v3017 = vunpack.c.0.s8 %v3016
        %v3018 = vlaneseq
        %v3019 = vshrl.u32 %v3018, 7
        %v3020 = vsub.s32 %v3017, %v3019
        %v3021 = vrot.slane %v3013, %v3020
        %v3023 = vunpack.c.l.s4 1983009808
        %v3024 = vunpack.c.0.s8 %v3023
        %v3025 = vlaneseq
        %v3026 = vshrl.u32 %v3025, 7
        %v3027 = vsub.s32 %v3024, %v3026
        %v3028 = vrot.slane %v3014, %v3027
        %v3029 = vcombine.low %v2950, %v2954
        %v3030 = vcombine.high %v2950, %v2954
        %v3032 = vunpack.c.l.s4 1983009808
        %v3033 = vunpack.c.0.s8 %v3032
        %v3034 = vlaneseq
        %v3035 = vshrl.u32 %v3034, 7
        %v3036 = vsub.s32 %v3033, %v3035
        %v3037 = vrot.slane %v3029, %v3036
        %v3039 = vunpack.c.l.s4 1983009808
        %v3040 = vunpack.c.0.s8 %v3039
        %v3041 = vlaneseq
        %v3042 = vshrl.u32 %v3041, 7
        %v3043 = vsub.s32 %v3040, %v3042
        %v3044 = vrot.slane %v3030, %v3043
        %v3045 = vcombine.low %v2956, %v2960
        %v3046 = vcombine.high %v2956, %v2960
        %v3048 = vunpack.c.l.s4 1983009808
        %v3049 = vunpack.c.0.s8 %v3048
        %v3050 = vlaneseq
        %v3051 = vshrl.u32 %v3050, 7
        %v3052 = vsub.s32 %v3049, %v3051
        %v3053 = vrot.slane %v3045, %v3052
        %v3055 = vunpack.c.l.s4 1983009808
        %v3056 = vunpack.c.0.s8 %v3055
        %v3057 = vlaneseq
        %v3058 = vshrl.u32 %v3057, 7
        %v3059 = vsub.s32 %v3056, %v3058
        %v3060 = vrot.slane %v3046, %v3059
        %v3061 = vcombine.low %v2958, %v2962
        %v3062 = vcombine.high %v2958, %v2962
        %v3064 = vunpack.c.l.s4 1983009808
        %v3065 = vunpack.c.0.s8 %v3064
        %v3066 = vlaneseq
        %v3067 = vshrl.u32 %v3066, 7
        %v3068 = vsub.s32 %v3065, %v3067
        %v3069 = vrot.slane %v3061, %v3068
        %v3071 = vunpack.c.l.s4 1983009808
        %v3072 = vunpack.c.0.s8 %v3071
        %v3073 = vlaneseq
        %v3074 = vshrl.u32 %v3073, 7
        %v3075 = vsub.s32 %v3072, %v3074
        %v3076 = vrot.slane %v3062, %v3075
        %v3077 = vcombine.low %v3021, %v3037
        %v3078 = vcombine.high %v3021, %v3037
        %v3080 = vunpack.c.l.s4 1934713408
        %v3081 = vunpack.c.0.s8 %v3080
        %v3082 = vlaneseq
        %v3083 = vshrl.u32 %v3082, 7
        %v3084 = vsub.s32 %v3081, %v3083
        %v3085 = vrot.slane %v3077, %v3084
        %v3087 = vunpack.c.l.s4 1934713408
        %v3088 = vunpack.c.0.s8 %v3087
        %v3089 = vlaneseq
        %v3090 = vshrl.u32 %v3089, 7
        %v3091 = vsub.s32 %v3088, %v3090
        %v3092 = vrot.slane %v3078, %v3091
        %v3093 = vcombine.low %v3028, %v3044
        %v3094 = vcombine.high %v3028, %v3044
        %v3096 = vunpack.c.l.s4 1934713408
        %v3097 = vunpack.c.0.s8 %v3096
        %v3098 = vlaneseq
        %v3099 = vshrl.u32 %v3098, 7
        %v3100 = vsub.s32 %v3097, %v3099
        %v3101 = vrot.slane %v3093, %v3100
        %v3103 = vunpack.c.l.s4 1934713408
        %v3104 = vunpack.c.0.s8 %v3103
        %v3105 = vlaneseq
        %v3106 = vshrl.u32 %v3105, 7
        %v3107 = vsub.s32 %v3104, %v3106
        %v3108 = vrot.slane %v3094, %v3107
        %v3109 = vcombine.low %v3053, %v3069
        %v3110 = vcombine.high %v3053, %v3069
        %v3112 = vunpack.c.l.s4 1934713408
        %v3113 = vunpack.c.0.s8 %v3112
        %v3114 = vlaneseq
        %v3115 = vshrl.u32 %v3114, 7
        %v3116 = vsub.s32 %v3113, %v3115
        %v3117 = vrot.slane %v3109, %v3116
        %v3119 = vunpack.c.l.s4 1934713408
        %v3120 = vunpack.c.0.s8 %v3119
        %v3121 = vlaneseq
        %v3122 = vshrl.u32 %v3121, 7
        %v3123 = vsub.s32 %v3120, %v3122
        %v3124 = vrot.slane %v3110, %v3123
        %v3125 = vcombine.low %v3060, %v3076
        %v3126 = vcombine.high %v3060, %v3076
        %v3128 = vunpack.c.l.s4 1934713408
        %v3129 = vunpack.c.0.s8 %v3128
        %v3130 = vlaneseq
        %v3131 = vshrl.u32 %v3130, 7
        %v3132 = vsub.s32 %v3129, %v3131
        %v3133 = vrot.slane %v3125, %v3132
        %v3135 = vunpack.c.l.s4 1934713408
        %v3136 = vunpack.c.0.s8 %v3135
        %v3137 = vlaneseq
        %v3138 = vshrl.u32 %v3137, 7
        %v3139 = vsub.s32 %v3136, %v3138
        %v3140 = vrot.slane %v3126, %v3139
        %v3141 = vcombine.low %v3085, %v3117
        %v3142 = vcombine.high %v3085, %v3117
        %v3143 = vcombine.low %v3092, %v3124
        %v3144 = vcombine.high %v3092, %v3124
        %v3145 = vcombine.low %v3101, %v3133
        %v3146 = vcombine.high %v3101, %v3133
        %v3147 = vcombine.low %v3108, %v3140
        %v3148 = vcombine.high %v3108, %v3140
        %v3149 = vcombine.low %v2964, %v2968
        %v3150 = vcombine.high %v2964, %v2968
        %v3152 = vunpack.c.l.s4 1983009808
        %v3153 = vunpack.c.0.s8 %v3152
        %v3154 = vlaneseq
        %v3155 = vshrl.u32 %v3154, 7
        %v3156 = vsub.s32 %v3153, %v3155
        %v3157 = vrot.slane %v3149, %v3156
        %v3159 = vunpack.c.l.s4 1983009808
        %v3160 = vunpack.c.0.s8 %v3159
        %v3161 = vlaneseq
        %v3162 = vshrl.u32 %v3161, 7
        %v3163 = vsub.s32 %v3160, %v3162
        %v3164 = vrot.slane %v3150, %v3163
        %v3165 = vcombine.low %v2966, %v2970
        %v3166 = vcombine.high %v2966, %v2970
        %v3168 = vunpack.c.l.s4 1983009808
        %v3169 = vunpack.c.0.s8 %v3168
        %v3170 = vlaneseq
        %v3171 = vshrl.u32 %v3170, 7
        %v3172 = vsub.s32 %v3169, %v3171
        %v3173 = vrot.slane %v3165, %v3172
        %v3175 = vunpack.c.l.s4 1983009808
        %v3176 = vunpack.c.0.s8 %v3175
        %v3177 = vlaneseq
        %v3178 = vshrl.u32 %v3177, 7
        %v3179 = vsub.s32 %v3176, %v3178
        %v3180 = vrot.slane %v3166, %v3179
        %v3181 = vcombine.low %v2972, %v2976
        %v3182 = vcombine.high %v2972, %v2976
        %v3184 = vunpack.c.l.s4 1983009808
        %v3185 = vunpack.c.0.s8 %v3184
        %v3186 = vlaneseq
        %v3187 = vshrl.u32 %v3186, 7
        %v3188 = vsub.s32 %v3185, %v3187
        %v3189 = vrot.slane %v3181, %v3188
        %v3191 = vunpack.c.l.s4 1983009808
        %v3192 = vunpack.c.0.s8 %v3191
        %v3193 = vlaneseq
        %v3194 = vshrl.u32 %v3193, 7
        %v3195 = vsub.s32 %v3192, %v3194
        %v3196 = vrot.slane %v3182, %v3195
        %v3197 = vcombine.low %v2974, %v2978
        %v3198 = vcombine.high %v2974, %v2978
        %v3200 = vunpack.c.l.s4 1983009808
        %v3201 = vunpack.c.0.s8 %v3200
        %v3202 = vlaneseq
        %v3203 = vshrl.u32 %v3202, 7
        %v3204 = vsub.s32 %v3201, %v3203
        %v3205 = vrot.slane %v3197, %v3204
        %v3207 = vunpack.c.l.s4 1983009808
        %v3208 = vunpack.c.0.s8 %v3207
        %v3209 = vlaneseq
        %v3210 = vshrl.u32 %v3209, 7
        %v3211 = vsub.s32 %v3208, %v3210
        %v3212 = vrot.slane %v3198, %v3211
        %v3213 = vcombine.low %v3157, %v3173
        %v3214 = vcombine.high %v3157, %v3173
        %v3216 = vunpack.c.l.s4 1934713408
        %v3217 = vunpack.c.0.s8 %v3216
        %v3218 = vlaneseq
        %v3219 = vshrl.u32 %v3218, 7
        %v3220 = vsub.s32 %v3217, %v3219
        %v3221 = vrot.slane %v3213, %v3220
        %v3223 = vunpack.c.l.s4 1934713408
        %v3224 = vunpack.c.0.s8 %v3223
        %v3225 = vlaneseq
        %v3226 = vshrl.u32 %v3225, 7
        %v3227 = vsub.s32 %v3224, %v3226
        %v3228 = vrot.slane %v3214, %v3227
        %v3229 = vcombine.low %v3164, %v3180
        %v3230 = vcombine.high %v3164, %v3180
        %v3232 = vunpack.c.l.s4 1934713408
        %v3233 = vunpack.c.0.s8 %v3232
        %v3234 = vlaneseq
        %v3235 = vshrl.u32 %v3234, 7
        %v3236 = vsub.s32 %v3233, %v3235
        %v3237 = vrot.slane %v3229, %v3236
        %v3239 = vunpack.c.l.s4 1934713408
        %v3240 = vunpack.c.0.s8 %v3239
        %v3241 = vlaneseq
        %v3242 = vshrl.u32 %v3241, 7
        %v3243 = vsub.s32 %v3240, %v3242
        %v3244 = vrot.slane %v3230, %v3243
        %v3245 = vcombine.low %v3189, %v3205
        %v3246 = vcombine.high %v3189, %v3205
        %v3248 = vunpack.c.l.s4 1934713408
        %v3249 = vunpack.c.0.s8 %v3248
        %v3250 = vlaneseq
        %v3251 = vshrl.u32 %v3250, 7
        %v3252 = vsub.s32 %v3249, %v3251
        %v3253 = vrot.slane %v3245, %v3252
        %v3255 = vunpack.c.l.s4 1934713408
        %v3256 = vunpack.c.0.s8 %v3255
        %v3257 = vlaneseq
        %v3258 = vshrl.u32 %v3257, 7
        %v3259 = vsub.s32 %v3256, %v3258
        %v3260 = vrot.slane %v3246, %v3259
        %v3261 = vcombine.low %v3196, %v3212
        %v3262 = vcombine.high %v3196, %v3212
        %v3264 = vunpack.c.l.s4 1934713408
        %v3265 = vunpack.c.0.s8 %v3264
        %v3266 = vlaneseq
        %v3267 = vshrl.u32 %v3266, 7
        %v3268 = vsub.s32 %v3265, %v3267
        %v3269 = vrot.slane %v3261, %v3268
        %v3271 = vunpack.c.l.s4 1934713408
        %v3272 = vunpack.c.0.s8 %v3271
        %v3273 = vlaneseq
        %v3274 = vshrl.u32 %v3273, 7
        %v3275 = vsub.s32 %v3272, %v3274
        %v3276 = vrot.slane %v3262, %v3275
        %v3277 = vcombine.low %v3221, %v3253
        %v3278 = vcombine.high %v3221, %v3253
        %v3279 = vcombine.low %v3228, %v3260
        %v3280 = vcombine.high %v3228, %v3260
        %v3281 = vcombine.low %v3237, %v3269
        %v3282 = vcombine.high %v3237, %v3269
        %v3283 = vcombine.low %v3244, %v3276
        %v3284 = vcombine.high %v3244, %v3276
        %v3285 = vcombine.low %v2980, %v2984
        %v3286 = vcombine.high %v2980, %v2984
        %v3288 = vunpack.c.l.s4 1983009808
        %v3289 = vunpack.c.0.s8 %v3288
        %v3290 = vlaneseq
        %v3291 = vshrl.u32 %v3290, 7
        %v3292 = vsub.s32 %v3289, %v3291
        %v3293 = vrot.slane %v3285, %v3292
        %v3295 = vunpack.c.l.s4 1983009808
        %v3296 = vunpack.c.0.s8 %v3295
        %v3297 = vlaneseq
        %v3298 = vshrl.u32 %v3297, 7
        %v3299 = vsub.s32 %v3296, %v3298
        %v3300 = vrot.slane %v3286, %v3299
        %v3301 = vcombine.low %v2982, %v2986
        %v3302 = vcombine.high %v2982, %v2986
        %v3304 = vunpack.c.l.s4 1983009808
        %v3305 = vunpack.c.0.s8 %v3304
        %v3306 = vlaneseq
        %v3307 = vshrl.u32 %v3306, 7
        %v3308 = vsub.s32 %v3305, %v3307
        %v3309 = vrot.slane %v3301, %v3308
        %v3311 = vunpack.c.l.s4 1983009808
        %v3312 = vunpack.c.0.s8 %v3311
        %v3313 = vlaneseq
        %v3314 = vshrl.u32 %v3313, 7
        %v3315 = vsub.s32 %v3312, %v3314
        %v3316 = vrot.slane %v3302, %v3315
        %v3317 = vcombine.low %v2988, %v2992
        %v3318 = vcombine.high %v2988, %v2992
        %v3320 = vunpack.c.l.s4 1983009808
        %v3321 = vunpack.c.0.s8 %v3320
        %v3322 = vlaneseq
        %v3323 = vshrl.u32 %v3322, 7
        %v3324 = vsub.s32 %v3321, %v3323
        %v3325 = vrot.slane %v3317, %v3324
        %v3327 = vunpack.c.l.s4 1983009808
        %v3328 = vunpack.c.0.s8 %v3327
        %v3329 = vlaneseq
        %v3330 = vshrl.u32 %v3329, 7
        %v3331 = vsub.s32 %v3328, %v3330
        %v3332 = vrot.slane %v3318, %v3331
        %v3333 = vcombine.low %v2990, %v2994
        %v3334 = vcombine.high %v2990, %v2994
        %v3336 = vunpack.c.l.s4 1983009808
        %v3337 = vunpack.c.0.s8 %v3336
        %v3338 = vlaneseq
        %v3339 = vshrl.u32 %v3338, 7
        %v3340 = vsub.s32 %v3337, %v3339
        %v3341 = vrot.slane %v3333, %v3340
        %v3343 = vunpack.c.l.s4 1983009808
        %v3344 = vunpack.c.0.s8 %v3343
        %v3345 = vlaneseq
        %v3346 = vshrl.u32 %v3345, 7
        %v3347 = vsub.s32 %v3344, %v3346
        %v3348 = vrot.slane %v3334, %v3347
        %v3349 = vcombine.low %v3293, %v3309
        %v3350 = vcombine.high %v3293, %v3309
        %v3352 = vunpack.c.l.s4 1934713408
        %v3353 = vunpack.c.0.s8 %v3352
        %v3354 = vlaneseq
        %v3355 = vshrl.u32 %v3354, 7
        %v3356 = vsub.s32 %v3353, %v3355
        %v3357 = vrot.slane %v3349, %v3356
        %v3359 = vunpack.c.l.s4 1934713408
        %v3360 = vunpack.c.0.s8 %v3359
        %v3361 = vlaneseq
        %v3362 = vshrl.u32 %v3361, 7
        %v3363 = vsub.s32 %v3360, %v3362
        %v3364 = vrot.slane %v3350, %v3363
        %v3365 = vcombine.low %v3300, %v3316
        %v3366 = vcombine.high %v3300, %v3316
        %v3368 = vunpack.c.l.s4 1934713408
        %v3369 = vunpack.c.0.s8 %v3368
        %v3370 = vlaneseq
        %v3371 = vshrl.u32 %v3370, 7
        %v3372 = vsub.s32 %v3369, %v3371
        %v3373 = vrot.slane %v3365, %v3372
        %v3375 = vunpack.c.l.s4 1934713408
        %v3376 = vunpack.c.0.s8 %v3375
        %v3377 = vlaneseq
        %v3378 = vshrl.u32 %v3377, 7
        %v3379 = vsub.s32 %v3376, %v3378
        %v3380 = vrot.slane %v3366, %v3379
        %v3381 = vcombine.low %v3325, %v3341
        %v3382 = vcombine.high %v3325, %v3341
        %v3384 = vunpack.c.l.s4 1934713408
        %v3385 = vunpack.c.0.s8 %v3384
        %v3386 = vlaneseq
        %v3387 = vshrl.u32 %v3386, 7
        %v3388 = vsub.s32 %v3385, %v3387
        %v3389 = vrot.slane %v3381, %v3388
        %v3391 = vunpack.c.l.s4 1934713408
        %v3392 = vunpack.c.0.s8 %v3391
        %v3393 = vlaneseq
        %v3394 = vshrl.u32 %v3393, 7
        %v3395 = vsub.s32 %v3392, %v3394
        %v3396 = vrot.slane %v3382, %v3395
        %v3397 = vcombine.low %v3332, %v3348
        %v3398 = vcombine.high %v3332, %v3348
        %v3400 = vunpack.c.l.s4 1934713408
        %v3401 = vunpack.c.0.s8 %v3400
        %v3402 = vlaneseq
        %v3403 = vshrl.u32 %v3402, 7
        %v3404 = vsub.s32 %v3401, %v3403
        %v3405 = vrot.slane %v3397, %v3404
        %v3407 = vunpack.c.l.s4 1934713408
        %v3408 = vunpack.c.0.s8 %v3407
        %v3409 = vlaneseq
        %v3410 = vshrl.u32 %v3409, 7
        %v3411 = vsub.s32 %v3408, %v3410
        %v3412 = vrot.slane %v3398, %v3411
        %v3413 = vcombine.low %v3357, %v3389
        %v3414 = vcombine.high %v3357, %v3389
        %v3415 = vcombine.low %v3364, %v3396
        %v3416 = vcombine.high %v3364, %v3396
        %v3417 = vcombine.low %v3373, %v3405
        %v3418 = vcombine.high %v3373, %v3405
        %v3419 = vcombine.low %v3380, %v3412
        %v3420 = vcombine.high %v3380, %v3412
        %v3421 = vcombine.low %v2996, %v3000
        %v3422 = vcombine.high %v2996, %v3000
        %v3424 = vunpack.c.l.s4 1983009808
        %v3425 = vunpack.c.0.s8 %v3424
        %v3426 = vlaneseq
        %v3427 = vshrl.u32 %v3426, 7
        %v3428 = vsub.s32 %v3425, %v3427
        %v3429 = vrot.slane %v3421, %v3428
        %v3431 = vunpack.c.l.s4 1983009808
        %v3432 = vunpack.c.0.s8 %v3431
        %v3433 = vlaneseq
        %v3434 = vshrl.u32 %v3433, 7
        %v3435 = vsub.s32 %v3432, %v3434
        %v3436 = vrot.slane %v3422, %v3435
        %v3437 = vcombine.low %v2998, %v3002
        %v3438 = vcombine.high %v2998, %v3002
        %v3440 = vunpack.c.l.s4 1983009808
        %v3441 = vunpack.c.0.s8 %v3440
        %v3442 = vlaneseq
        %v3443 = vshrl.u32 %v3442, 7
        %v3444 = vsub.s32 %v3441, %v3443
        %v3445 = vrot.slane %v3437, %v3444
        %v3447 = vunpack.c.l.s4 1983009808
        %v3448 = vunpack.c.0.s8 %v3447
        %v3449 = vlaneseq
        %v3450 = vshrl.u32 %v3449, 7
        %v3451 = vsub.s32 %v3448, %v3450
        %v3452 = vrot.slane %v3438, %v3451
        %v3453 = vcombine.low %v3004, %v3008
        %v3454 = vcombine.high %v3004, %v3008
        %v3456 = vunpack.c.l.s4 1983009808
        %v3457 = vunpack.c.0.s8 %v3456
        %v3458 = vlaneseq
        %v3459 = vshrl.u32 %v3458, 7
        %v3460 = vsub.s32 %v3457, %v3459
        %v3461 = vrot.slane %v3453, %v3460
        %v3463 = vunpack.c.l.s4 1983009808
        %v3464 = vunpack.c.0.s8 %v3463
        %v3465 = vlaneseq
        %v3466 = vshrl.u32 %v3465, 7
        %v3467 = vsub.s32 %v3464, %v3466
        %v3468 = vrot.slane %v3454, %v3467
        %v3469 = vcombine.low %v3006, %v3010
        %v3470 = vcombine.high %v3006, %v3010
        %v3472 = vunpack.c.l.s4 1983009808
        %v3473 = vunpack.c.0.s8 %v3472
        %v3474 = vlaneseq
        %v3475 = vshrl.u32 %v3474, 7
        %v3476 = vsub.s32 %v3473, %v3475
        %v3477 = vrot.slane %v3469, %v3476
        %v3479 = vunpack.c.l.s4 1983009808
        %v3480 = vunpack.c.0.s8 %v3479
        %v3481 = vlaneseq
        %v3482 = vshrl.u32 %v3481, 7
        %v3483 = vsub.s32 %v3480, %v3482
        %v3484 = vrot.slane %v3470, %v3483
        %v3485 = vcombine.low %v3429, %v3445
        %v3486 = vcombine.high %v3429, %v3445
        %v3488 = vunpack.c.l.s4 1934713408
        %v3489 = vunpack.c.0.s8 %v3488
        %v3490 = vlaneseq
        %v3491 = vshrl.u32 %v3490, 7
        %v3492 = vsub.s32 %v3489, %v3491
        %v3493 = vrot.slane %v3485, %v3492
        %v3495 = vunpack.c.l.s4 1934713408
        %v3496 = vunpack.c.0.s8 %v3495
        %v3497 = vlaneseq
        %v3498 = vshrl.u32 %v3497, 7
        %v3499 = vsub.s32 %v3496, %v3498
        %v3500 = vrot.slane %v3486, %v3499
        %v3501 = vcombine.low %v3436, %v3452
        %v3502 = vcombine.high %v3436, %v3452
        %v3504 = vunpack.c.l.s4 1934713408
        %v3505 = vunpack.c.0.s8 %v3504
        %v3506 = vlaneseq
        %v3507 = vshrl.u32 %v3506, 7
        %v3508 = vsub.s32 %v3505, %v3507
        %v3509 = vrot.slane %v3501, %v3508
        %v3511 = vunpack.c.l.s4 1934713408
        %v3512 = vunpack.c.0.s8 %v3511
        %v3513 = vlaneseq
        %v3514 = vshrl.u32 %v3513, 7
        %v3515 = vsub.s32 %v3512, %v3514
        %v3516 = vrot.slane %v3502, %v3515
        %v3517 = vcombine.low %v3461, %v3477
        %v3518 = vcombine.high %v3461, %v3477
        %v3520 = vunpack.c.l.s4 1934713408
        %v3521 = vunpack.c.0.s8 %v3520
        %v3522 = vlaneseq
        %v3523 = vshrl.u32 %v3522, 7
        %v3524 = vsub.s32 %v3521, %v3523
        %v3525 = vrot.slane %v3517, %v3524
        %v3527 = vunpack.c.l.s4 1934713408
        %v3528 = vunpack.c.0.s8 %v3527
        %v3529 = vlaneseq
        %v3530 = vshrl.u32 %v3529, 7
        %v3531 = vsub.s32 %v3528, %v3530
        %v3532 = vrot.slane %v3518, %v3531
        %v3533 = vcombine.low %v3468, %v3484
        %v3534 = vcombine.high %v3468, %v3484
        %v3536 = vunpack.c.l.s4 1934713408
        %v3537 = vunpack.c.0.s8 %v3536
        %v3538 = vlaneseq
        %v3539 = vshrl.u32 %v3538, 7
        %v3540 = vsub.s32 %v3537, %v3539
        %v3541 = vrot.slane %v3533, %v3540
        %v3543 = vunpack.c.l.s4 1934713408
        %v3544 = vunpack.c.0.s8 %v3543
        %v3545 = vlaneseq
        %v3546 = vshrl.u32 %v3545, 7
        %v3547 = vsub.s32 %v3544, %v3546
        %v3548 = vrot.slane %v3534, %v3547
        %v3549 = vcombine.low %v3493, %v3525
        %v3550 = vcombine.high %v3493, %v3525
        %v3551 = vcombine.low %v3500, %v3532
        %v3552 = vcombine.high %v3500, %v3532
        %v3553 = vcombine.low %v3509, %v3541
        %v3554 = vcombine.high %v3509, %v3541
        %v3555 = vcombine.low %v3516, %v3548
        %v3556 = vcombine.high %v3516, %v3548
        %v3557 = vcombine.low %v2949, %v2953
        %v3559 = vunpack.c.l.s4 1983009808
        %v3560 = vunpack.c.0.s8 %v3559
        %v3561 = vlaneseq
        %v3562 = vshrl.u32 %v3561, 7
        %v3563 = vsub.s32 %v3560, %v3562
        %v3564 = vrot.slane %v3557, %v3563
        %v3565 = vcombine.low %v2951, %v2955
        %v3567 = vunpack.c.l.s4 1983009808
        %v3568 = vunpack.c.0.s8 %v3567
        %v3569 = vlaneseq
        %v3570 = vshrl.u32 %v3569, 7
        %v3571 = vsub.s32 %v3568, %v3570
        %v3572 = vrot.slane %v3565, %v3571
        %v3573 = vcombine.low %v2957, %v2961
        %v3575 = vunpack.c.l.s4 1983009808
        %v3576 = vunpack.c.0.s8 %v3575
        %v3577 = vlaneseq
        %v3578 = vshrl.u32 %v3577, 7
        %v3579 = vsub.s32 %v3576, %v3578
        %v3580 = vrot.slane %v3573, %v3579
        %v3581 = vcombine.low %v2959, %v2963
        %v3583 = vunpack.c.l.s4 1983009808
        %v3584 = vunpack.c.0.s8 %v3583
        %v3585 = vlaneseq
        %v3586 = vshrl.u32 %v3585, 7
        %v3587 = vsub.s32 %v3584, %v3586
        %v3588 = vrot.slane %v3581, %v3587
        %v3589 = vcombine.low %v3564, %v3572
        %v3590 = vcombine.high %v3564, %v3572
        %v3592 = vunpack.c.l.s4 1934713408
        %v3593 = vunpack.c.0.s8 %v3592
        %v3594 = vlaneseq
        %v3595 = vshrl.u32 %v3594, 7
        %v3596 = vsub.s32 %v3593, %v3595
        %v3597 = vrot.slane %v3589, %v3596
        %v3599 = vunpack.c.l.s4 1934713408
        %v3600 = vunpack.c.0.s8 %v3599
        %v3601 = vlaneseq
        %v3602 = vshrl.u32 %v3601, 7
        %v3603 = vsub.s32 %v3600, %v3602
        %v3604 = vrot.slane %v3590, %v3603
        %v3605 = vcombine.low %v3580, %v3588
        %v3606 = vcombine.high %v3580, %v3588
        %v3608 = vunpack.c.l.s4 1934713408
        %v3609 = vunpack.c.0.s8 %v3608
        %v3610 = vlaneseq
        %v3611 = vshrl.u32 %v3610, 7
        %v3612 = vsub.s32 %v3609, %v3611
        %v3613 = vrot.slane %v3605, %v3612
        %v3615 = vunpack.c.l.s4 1934713408
        %v3616 = vunpack.c.0.s8 %v3615
        %v3617 = vlaneseq
        %v3618 = vshrl.u32 %v3617, 7
        %v3619 = vsub.s32 %v3616, %v3618
        %v3620 = vrot.slane %v3606, %v3619
        %v3621 = vcombine.low %v3597, %v3613
        %v3622 = vcombine.high %v3597, %v3613
        %v3623 = vcombine.low %v3604, %v3620
        %v3624 = vcombine.high %v3604, %v3620
        %v3625 = vcombine.low %v2965, %v2969
        %v3627 = vunpack.c.l.s4 1983009808
        %v3628 = vunpack.c.0.s8 %v3627
        %v3629 = vlaneseq
        %v3630 = vshrl.u32 %v3629, 7
        %v3631 = vsub.s32 %v3628, %v3630
        %v3632 = vrot.slane %v3625, %v3631
        %v3633 = vcombine.low %v2967, %v2971
        %v3635 = vunpack.c.l.s4 1983009808
        %v3636 = vunpack.c.0.s8 %v3635
        %v3637 = vlaneseq
        %v3638 = vshrl.u32 %v3637, 7
        %v3639 = vsub.s32 %v3636, %v3638
        %v3640 = vrot.slane %v3633, %v3639
        %v3641 = vcombine.low %v2973, %v2977
        %v3643 = vunpack.c.l.s4 1983009808
        %v3644 = vunpack.c.0.s8 %v3643
        %v3645 = vlaneseq
        %v3646 = vshrl.u32 %v3645, 7
        %v3647 = vsub.s32 %v3644, %v3646
        %v3648 = vrot.slane %v3641, %v3647
        %v3649 = vcombine.low %v2975, %v2979
        %v3651 = vunpack.c.l.s4 1983009808
        %v3652 = vunpack.c.0.s8 %v3651
        %v3653 = vlaneseq
        %v3654 = vshrl.u32 %v3653, 7
        %v3655 = vsub.s32 %v3652, %v3654
        %v3656 = vrot.slane %v3649, %v3655
        %v3657 = vcombine.low %v3632, %v3640
        %v3658 = vcombine.high %v3632, %v3640
        %v3660 = vunpack.c.l.s4 1934713408
        %v3661 = vunpack.c.0.s8 %v3660
        %v3662 = vlaneseq
        %v3663 = vshrl.u32 %v3662, 7
        %v3664 = vsub.s32 %v3661, %v3663
        %v3665 = vrot.slane %v3657, %v3664
        %v3667 = vunpack.c.l.s4 1934713408
        %v3668 = vunpack.c.0.s8 %v3667
        %v3669 = vlaneseq
        %v3670 = vshrl.u32 %v3669, 7
        %v3671 = vsub.s32 %v3668, %v3670
        %v3672 = vrot.slane %v3658, %v3671
        %v3673 = vcombine.low %v3648, %v3656
        %v3674 = vcombine.high %v3648, %v3656
        %v3676 = vunpack.c.l.s4 1934713408
        %v3677 = vunpack.c.0.s8 %v3676
        %v3678 = vlaneseq
        %v3679 = vshrl.u32 %v3678, 7
        %v3680 = vsub.s32 %v3677, %v3679
        %v3681 = vrot.slane %v3673, %v3680
        %v3683 = vunpack.c.l.s4 1934713408
        %v3684 = vunpack.c.0.s8 %v3683
        %v3685 = vlaneseq
        %v3686 = vshrl.u32 %v3685, 7
        %v3687 = vsub.s32 %v3684, %v3686
        %v3688 = vrot.slane %v3674, %v3687
        %v3689 = vcombine.low %v3665, %v3681
        %v3690 = vcombine.high %v3665, %v3681
        %v3691 = vcombine.low %v3672, %v3688
        %v3692 = vcombine.high %v3672, %v3688
        %v3693 = vcombine.low %v2981, %v2985
        %v3695 = vunpack.c.l.s4 1983009808
        %v3696 = vunpack.c.0.s8 %v3695
        %v3697 = vlaneseq
        %v3698 = vshrl.u32 %v3697, 7
        %v3699 = vsub.s32 %v3696, %v3698
        %v3700 = vrot.slane %v3693, %v3699
        %v3701 = vcombine.low %v2983, %v2987
        %v3703 = vunpack.c.l.s4 1983009808
        %v3704 = vunpack.c.0.s8 %v3703
        %v3705 = vlaneseq
        %v3706 = vshrl.u32 %v3705, 7
        %v3707 = vsub.s32 %v3704, %v3706
        %v3708 = vrot.slane %v3701, %v3707
        %v3709 = vcombine.low %v2989, %v2993
        %v3711 = vunpack.c.l.s4 1983009808
        %v3712 = vunpack.c.0.s8 %v3711
        %v3713 = vlaneseq
        %v3714 = vshrl.u32 %v3713, 7
        %v3715 = vsub.s32 %v3712, %v3714
        %v3716 = vrot.slane %v3709, %v3715
        %v3717 = vcombine.low %v2991, %v2995
        %v3719 = vunpack.c.l.s4 1983009808
        %v3720 = vunpack.c.0.s8 %v3719
        %v3721 = vlaneseq
        %v3722 = vshrl.u32 %v3721, 7
        %v3723 = vsub.s32 %v3720, %v3722
        %v3724 = vrot.slane %v3717, %v3723
        %v3725 = vcombine.low %v3700, %v3708
        %v3726 = vcombine.high %v3700, %v3708
        %v3728 = vunpack.c.l.s4 1934713408
        %v3729 = vunpack.c.0.s8 %v3728
        %v3730 = vlaneseq
        %v3731 = vshrl.u32 %v3730, 7
        %v3732 = vsub.s32 %v3729, %v3731
        %v3733 = vrot.slane %v3725, %v3732
        %v3735 = vunpack.c.l.s4 1934713408
        %v3736 = vunpack.c.0.s8 %v3735
        %v3737 = vlaneseq
        %v3738 = vshrl.u32 %v3737, 7
        %v3739 = vsub.s32 %v3736, %v3738
        %v3740 = vrot.slane %v3726, %v3739
        %v3741 = vcombine.low %v3716, %v3724
        %v3742 = vcombine.high %v3716, %v3724
        %v3744 = vunpack.c.l.s4 1934713408
        %v3745 = vunpack.c.0.s8 %v3744
        %v3746 = vlaneseq
        %v3747 = vshrl.u32 %v3746, 7
        %v3748 = vsub.s32 %v3745, %v3747
        %v3749 = vrot.slane %v3741, %v3748
        %v3751 = vunpack.c.l.s4 1934713408
        %v3752 = vunpack.c.0.s8 %v3751
        %v3753 = vlaneseq
        %v3754 = vshrl.u32 %v3753, 7
        %v3755 = vsub.s32 %v3752, %v3754
        %v3756 = vrot.slane %v3742, %v3755
        %v3757 = vcombine.low %v3733, %v3749
        %v3758 = vcombine.high %v3733, %v3749
        %v3759 = vcombine.low %v3740, %v3756
        %v3760 = vcombine.high %v3740, %v3756
        %v3761 = vcombine.low %v2997, %v3001
        %v3763 = vunpack.c.l.s4 1983009808
        %v3764 = vunpack.c.0.s8 %v3763
        %v3765 = vlaneseq
        %v3766 = vshrl.u32 %v3765, 7
        %v3767 = vsub.s32 %v3764, %v3766
        %v3768 = vrot.slane %v3761, %v3767
        %v3769 = vcombine.low %v2999, %v3003
        %v3771 = vunpack.c.l.s4 1983009808
        %v3772 = vunpack.c.0.s8 %v3771
        %v3773 = vlaneseq
        %v3774 = vshrl.u32 %v3773, 7
        %v3775 = vsub.s32 %v3772, %v3774
        %v3776 = vrot.slane %v3769, %v3775
        %v3777 = vcombine.low %v3005, %v3009
        %v3779 = vunpack.c.l.s4 1983009808
        %v3780 = vunpack.c.0.s8 %v3779
        %v3781 = vlaneseq
        %v3782 = vshrl.u32 %v3781, 7
        %v3783 = vsub.s32 %v3780, %v3782
        %v3784 = vrot.slane %v3777, %v3783
        %v3785 = vcombine.low %v3007, %v3011
        %v3787 = vunpack.c.l.s4 1983009808
        %v3788 = vunpack.c.0.s8 %v3787
        %v3789 = vlaneseq
        %v3790 = vshrl.u32 %v3789, 7
        %v3791 = vsub.s32 %v3788, %v3790
        %v3792 = vrot.slane %v3785, %v3791
        %v3793 = vcombine.low %v3768, %v3776
        %v3794 = vcombine.high %v3768, %v3776
        %v3796 = vunpack.c.l.s4 1934713408
        %v3797 = vunpack.c.0.s8 %v3796
        %v3798 = vlaneseq
        %v3799 = vshrl.u32 %v3798, 7
        %v3800 = vsub.s32 %v3797, %v3799
        %v3801 = vrot.slane %v3793, %v3800
        %v3803 = vunpack.c.l.s4 1934713408
        %v3804 = vunpack.c.0.s8 %v3803
        %v3805 = vlaneseq
        %v3806 = vshrl.u32 %v3805, 7
        %v3807 = vsub.s32 %v3804, %v3806
        %v3808 = vrot.slane %v3794, %v3807
        %v3809 = vcombine.low %v3784, %v3792
        %v3810 = vcombine.high %v3784, %v3792
        %v3812 = vunpack.c.l.s4 1934713408
        %v3813 = vunpack.c.0.s8 %v3812
        %v3814 = vlaneseq
        %v3815 = vshrl.u32 %v3814, 7
        %v3816 = vsub.s32 %v3813, %v3815
        %v3817 = vrot.slane %v3809, %v3816
        %v3819 = vunpack.c.l.s4 1934713408
        %v3820 = vunpack.c.0.s8 %v3819
        %v3821 = vlaneseq
        %v3822 = vshrl.u32 %v3821, 7
        %v3823 = vsub.s32 %v3820, %v3822
        %v3824 = vrot.slane %v3810, %v3823
        %v3825 = vcombine.low %v3801, %v3817
        %v3826 = vcombine.high %v3801, %v3817
        %v3827 = vcombine.low %v3808, %v3824
        %v3828 = vcombine.high %v3808, %v3824
        %3833 = vrot.lane.b32.xlu0 %v3142, 12
        %v3834 = vpop.permute.xlu0 %3833
        %3835 = vrot.lane.b32.xlu0 %v3278, 12
        %v3836 = vpop.permute.xlu0 %3835
        %3837 = vrot.lane.b32.xlu0 %v3414, 12
        %v3838 = vpop.permute.xlu0 %3837
        %3839 = vrot.lane.b32.xlu0 %v3550, 12
        %v3840 = vpop.permute.xlu0 %3839
        %3849 = vrot.lane.b32.xlu0 %v3143, 24
        %v3850 = vpop.permute.xlu0 %3849
        %3851 = vrot.lane.b32.xlu0 %v3279, 24
        %v3852 = vpop.permute.xlu0 %3851
        %3853 = vrot.lane.b32.xlu0 %v3415, 24
        %v3854 = vpop.permute.xlu0 %3853
        %3855 = vrot.lane.b32.xlu0 %v3551, 24
        %v3856 = vpop.permute.xlu0 %3855
        %3865 = vrot.lane.b32.xlu0 %v3144, 36
        %v3866 = vpop.permute.xlu0 %3865
        %3867 = vrot.lane.b32.xlu0 %v3280, 36
        %v3868 = vpop.permute.xlu0 %3867
        %3869 = vrot.lane.b32.xlu0 %v3416, 36
        %v3870 = vpop.permute.xlu0 %3869
        %3871 = vrot.lane.b32.xlu0 %v3552, 36
        %v3872 = vpop.permute.xlu0 %3871
        %3881 = vrot.lane.b32.xlu0 %v3145, 48
        %v3882 = vpop.permute.xlu0 %3881
        %3883 = vrot.lane.b32.xlu0 %v3281, 48
        %v3884 = vpop.permute.xlu0 %3883
        %3885 = vrot.lane.b32.xlu0 %v3417, 48
        %v3886 = vpop.permute.xlu0 %3885
        %3887 = vrot.lane.b32.xlu0 %v3553, 48
        %v3888 = vpop.permute.xlu0 %3887
        %3897 = vrot.lane.b32.xlu0 %v3146, 60
        %v3898 = vpop.permute.xlu0 %3897
        %3899 = vrot.lane.b32.xlu0 %v3282, 60
        %v3900 = vpop.permute.xlu0 %3899
        %3901 = vrot.lane.b32.xlu0 %v3418, 60
        %v3902 = vpop.permute.xlu0 %3901
        %3903 = vrot.lane.b32.xlu0 %v3554, 60
        %v3904 = vpop.permute.xlu0 %3903
        %3913 = vrot.lane.b32.xlu0 %v3147, 72
        %v3914 = vpop.permute.xlu0 %3913
        %3915 = vrot.lane.b32.xlu0 %v3283, 72
        %v3916 = vpop.permute.xlu0 %3915
        %3917 = vrot.lane.b32.xlu0 %v3419, 72
        %v3918 = vpop.permute.xlu0 %3917
        %3919 = vrot.lane.b32.xlu0 %v3555, 72
        %v3920 = vpop.permute.xlu0 %3919
        %3929 = vrot.lane.b32.xlu0 %v3148, 84
        %v3930 = vpop.permute.xlu0 %3929
        %3931 = vrot.lane.b32.xlu0 %v3284, 84
        %v3932 = vpop.permute.xlu0 %3931
        %3933 = vrot.lane.b32.xlu0 %v3420, 84
        %v3934 = vpop.permute.xlu0 %3933
        %3935 = vrot.lane.b32.xlu0 %v3556, 84
        %v3936 = vpop.permute.xlu0 %3935
        %3945 = vrot.lane.b32.xlu0 %v3621, 96
        %v3946 = vpop.permute.xlu0 %3945
        %3947 = vrot.lane.b32.xlu0 %v3689, 96
        %v3948 = vpop.permute.xlu0 %3947
        %3949 = vrot.lane.b32.xlu0 %v3757, 96
        %v3950 = vpop.permute.xlu0 %3949
        %3951 = vrot.lane.b32.xlu0 %v3825, 96
        %v3952 = vpop.permute.xlu0 %3951
        %3961 = vrot.lane.b32.xlu0 %v3622, 108
        %v3962 = vpop.permute.xlu0 %3961
        %3963 = vrot.lane.b32.xlu0 %v3690, 108
        %v3964 = vpop.permute.xlu0 %3963
        %3965 = vrot.lane.b32.xlu0 %v3758, 108
        %v3966 = vpop.permute.xlu0 %3965
        %3967 = vrot.lane.b32.xlu0 %v3826, 108
        %v3968 = vpop.permute.xlu0 %3967
        %3977 = vrot.lane.b32.xlu0 %v3623, 120
        %v3978 = vpop.permute.xlu0 %3977
        %3979 = vrot.lane.b32.xlu0 %v3691, 120
        %v3980 = vpop.permute.xlu0 %3979
        %3981 = vrot.lane.b32.xlu0 %v3759, 120
        %v3982 = vpop.permute.xlu0 %3981
        %3983 = vrot.lane.b32.xlu0 %v3827, 120
        %v3984 = vpop.permute.xlu0 %3983
        %3993 = vrot.lane.b32.xlu0 %v3624, 4
        %v3994 = vpop.permute.xlu0 %3993
        %3995 = vrot.lane.b32.xlu0 %v3692, 4
        %v3996 = vpop.permute.xlu0 %3995
        %3997 = vrot.lane.b32.xlu0 %v3760, 4
        %v3998 = vpop.permute.xlu0 %3997
        %3999 = vrot.lane.b32.xlu0 %v3828, 4
        %v4000 = vpop.permute.xlu0 %3999
        %v4005 = vsel %vm1734, %v3141, %v3834
        %v4006 = vsel %vm1734, %v3277, %v3836
        %v4007 = vsel %vm1734, %v3413, %v3838
        %v4008 = vsel %vm1734, %v3549, %v3840
        %v4009 = vsel %vm1740, %v4005, %v3850
        %v4010 = vsel %vm1740, %v4006, %v3852
        %v4011 = vsel %vm1740, %v4007, %v3854
        %v4012 = vsel %vm1740, %v4008, %v3856
        %v4013 = vsel %vm1746, %v4009, %v3866
        %v4014 = vsel %vm1746, %v4010, %v3868
        %v4015 = vsel %vm1746, %v4011, %v3870
        %v4016 = vsel %vm1746, %v4012, %v3872
        %v4017 = vsel %vm1752, %v4013, %v3882
        %v4018 = vsel %vm1752, %v4014, %v3884
        %v4019 = vsel %vm1752, %v4015, %v3886
        %v4020 = vsel %vm1752, %v4016, %v3888
        %v4021 = vsel %vm1758, %v4017, %v3898
        %v4022 = vsel %vm1758, %v4018, %v3900
        %v4023 = vsel %vm1758, %v4019, %v3902
        %v4024 = vsel %vm1758, %v4020, %v3904
        %v4025 = vsel %vm1764, %v4021, %v3914
        %v4026 = vsel %vm1764, %v4022, %v3916
        %v4027 = vsel %vm1764, %v4023, %v3918
        %v4028 = vsel %vm1764, %v4024, %v3920
        %v4029 = vsel %vm1770, %v4025, %v3930
        %v4030 = vsel %vm1770, %v4026, %v3932
        %v4031 = vsel %vm1770, %v4027, %v3934
        %v4032 = vsel %vm1770, %v4028, %v3936
        %v4033 = vsel %vm1776, %v4029, %v3946
        %v4034 = vsel %vm1776, %v4030, %v3948
        %v4035 = vsel %vm1776, %v4031, %v3950
        %v4036 = vsel %vm1776, %v4032, %v3952
        %v4037 = vsel %vm1782, %v4033, %v3962
        %v4038 = vsel %vm1782, %v4034, %v3964
        %v4039 = vsel %vm1782, %v4035, %v3966
        %v4040 = vsel %vm1782, %v4036, %v3968
        %v4041 = vsel %vm1788, %v4037, %v3978
        %v4042 = vsel %vm1788, %v4038, %v3980
        %v4043 = vsel %vm1788, %v4039, %v3982
        %v4044 = vsel %vm1788, %v4040, %v3984
        %v4045 = vsel %vm1794, %v3978, %v3994
        %v4046 = vsel %vm1794, %v3980, %v3996
        %v4047 = vsel %vm1794, %v3982, %v3998
        %v4048 = vsel %vm1794, %v3984, %v4000
        %vm4049 = vcmask 261120
        %v4051 = vsel %vm4049, %v3012, 0
        %4053 = vmatprep.subr.mxu0 %v4045
        %4054 = vmatpush1.msra.mxu0 %v4041
        %4055 = vmatprep.subr.mxu0 %v4046
        %4056 = vmatpush1.msra.mxu0 %v4042
        %4057 = vmatprep.subr.mxu0 %v4047
        %4058 = vmatpush1.msra.mxu0 %v4043
        %4059 = vmatprep.subr.mxu0 %v4048
        %4060 = vmatpush1.msra.mxu0 %v4044
        %4061 = vmatprep.subr.mxu0 0.0
        %4062 = vmatpush1.msra.mxu0 0.0
        %4063 = vmatprep.subr.mxu0 0.0
        %4064 = vmatpush1.msra.mxu0 0.0
        %4065 = vmatprep.subr.mxu0 0.0
        %4066 = vmatpush1.msra.mxu0 0.0
        %4067 = vmatprep.subr.mxu0 0.0
        %4068 = vmatpush1.msra.mxu0 0.0
        %4069 = vmatprep.subr.mxu0 0.0
        %4070 = vmatpush1.msra.mxu0 0.0
        %4071 = vmatprep.subr.mxu0 0.0
        %4072 = vmatpush1.msra.mxu0 0.0
        %4073 = vmatprep.subr.mxu0 0.0
        %4074 = vmatpush1.msra.mxu0 0.0
        %4075 = vmatprep.subr.mxu0 0.0
        %4076 = vmatpush1.msra.mxu0 0.0
        %4077 = vmatprep.subr.mxu0 0.0
        %4078 = vmatpush1.msra.mxu0 0.0
        %4079 = vmatprep.subr.mxu0 0.0
        %4080 = vmatpush1.msra.mxu0 0.0
        %4081 = vmatprep.subr.mxu0 0.0
        %4082 = vmatpush1.msra.mxu0 0.0
        %4083 = vmatprep.subr.mxu0 0.0
        %4084 = vmatpush1.msra.mxu0 0.0
        %4085 = vmatprep.subr.mxu0 0.0
        %4086 = vmatpush1.msra.mxu0 0.0
        %4087 = vmatprep.subr.mxu0 0.0
        %4088 = vmatpush1.msra.mxu0 0.0
        %4089 = vmatprep.subr.mxu0 0.0
        %4090 = vmatpush1.msra.mxu0 0.0
        %4091 = vmatprep.subr.mxu0 0.0
        %4092 = vmatpush1.msra.mxu0 0.0
        %4093 = vmatprep.subr.mxu0 0.0
        %4094 = vmatpush1.msra.mxu0 0.0
        %4095 = vmatprep.subr.mxu0 0.0
        %4096 = vmatpush1.msra.mxu0 0.0
        %4097 = vmatprep.subr.mxu0 0.0
        %4098 = vmatpush1.msra.mxu0 0.0
        %4099 = vmatprep.subr.mxu0 0.0
        %4100 = vmatpush1.msra.mxu0 0.0
        %4101 = vmatprep.subr.mxu0 0.0
        %4102 = vmatpush1.msra.mxu0 0.0
        %4103 = vmatprep.subr.mxu0 0.0
        %4104 = vmatpush1.msra.mxu0 0.0
        %4105 = vmatprep.subr.mxu0 0.0
        %4106 = vmatpush1.msra.mxu0 0.0
        %4107 = vmatprep.subr.mxu0 0.0
        %4108 = vmatpush1.msra.mxu0 0.0
        %4109 = vmatprep.subr.mxu0 0.0
        %4110 = vmatpush1.msra.mxu0 0.0
        %4111 = vmatprep.subr.mxu0 0.0
        %4112 = vmatpush1.msra.mxu0 0.0
        %4113 = vmatprep.subr.mxu0 0.0
        %4114 = vmatpush1.msra.mxu0 0.0
        %4115 = vmatprep.subr.mxu0 0.0
        %4116 = vmatpush1.msra.mxu0 0.0
        %4117 = vmatprep.mubr.f32.mxu0 0.0
        %4118 = vmatmul.mubr.f32.gmra.mrb[0].mxu0 %v4051
        %v4119 = vpop.f32.mrb[0].mxu0
        %v4120 = vadd.f32 %v1875, %v4119
        %v4121 = vpop.f32.mrb[0].mxu0
        %v4122 = vadd.f32 %v1876, %v4121
        %4123 = vdwg.mxu0
        %4125 = vrot.lane.b32.xlu0 %v4120, 116
        %v4126 = vpop.permute.xlu0 %4125
        %4128 = vrot.lane.b32.xlu0 %v4120, 104
        %v4129 = vpop.permute.xlu0 %4128
        %4131 = vrot.lane.b32.xlu0 %v4120, 92
        %v4132 = vpop.permute.xlu0 %4131
        %4134 = vrot.lane.b32.xlu0 %v4120, 80
        %v4135 = vpop.permute.xlu0 %4134
        %4137 = vrot.lane.b32.xlu0 %v4120, 68
        %v4138 = vpop.permute.xlu0 %4137
        %4140 = vrot.lane.b32.xlu0 %v4120, 56
        %v4141 = vpop.permute.xlu0 %4140
        %4143 = vrot.lane.b32.xlu0 %v4120, 44
        %v4144 = vpop.permute.xlu0 %4143
        %4146 = vrot.lane.b32.xlu0 %v4120, 32
        %v4147 = vpop.permute.xlu0 %4146
        %4149 = vrot.lane.b32.xlu0 %v4120, 20
        %v4150 = vpop.permute.xlu0 %4149
        %4153 = vrot.lane.b32.xlu0 %v4120, 8
        %v4154 = vpop.permute.xlu0 %4153
        %4155 = vrot.lane.b32.xlu0 %v4122, 8
        %v4156 = vpop.permute.xlu0 %4155
        %v4157 = vsel %vm2111, %v4154, %v4156
        %4159 = vrot.lane.b32.xlu0 %v4122, 124
        %v4160 = vpop.permute.xlu0 %4159
        %v4162 = vcombine.low %v4120, %v4129
        %v4163 = vcombine.high %v4120, %v4129
        %v4165 = vunpack.c.l.s4 1983009808
        %v4166 = vunpack.c.0.s8 %v4165
        %v4167 = vlaneseq
        %v4168 = vshrl.u32 %v4167, 7
        %v4169 = vsub.s32 %v4166, %v4168
        %v4170 = vrot.slane %v4162, %v4169
        %v4172 = vunpack.c.l.s4 1983009808
        %v4173 = vunpack.c.0.s8 %v4172
        %v4174 = vlaneseq
        %v4175 = vshrl.u32 %v4174, 7
        %v4176 = vsub.s32 %v4173, %v4175
        %v4177 = vrot.slane %v4163, %v4176
        %v4178 = vcombine.low %v4126, %v4132
        %v4179 = vcombine.high %v4126, %v4132
        %v4181 = vunpack.c.l.s4 1983009808
        %v4182 = vunpack.c.0.s8 %v4181
        %v4183 = vlaneseq
        %v4184 = vshrl.u32 %v4183, 7
        %v4185 = vsub.s32 %v4182, %v4184
        %v4186 = vrot.slane %v4178, %v4185
        %v4188 = vunpack.c.l.s4 1983009808
        %v4189 = vunpack.c.0.s8 %v4188
        %v4190 = vlaneseq
        %v4191 = vshrl.u32 %v4190, 7
        %v4192 = vsub.s32 %v4189, %v4191
        %v4193 = vrot.slane %v4179, %v4192
        %v4194 = vcombine.low %v4135, %v4141
        %v4195 = vcombine.high %v4135, %v4141
        %v4197 = vunpack.c.l.s4 1983009808
        %v4198 = vunpack.c.0.s8 %v4197
        %v4199 = vlaneseq
        %v4200 = vshrl.u32 %v4199, 7
        %v4201 = vsub.s32 %v4198, %v4200
        %v4202 = vrot.slane %v4194, %v4201
        %v4204 = vunpack.c.l.s4 1983009808
        %v4205 = vunpack.c.0.s8 %v4204
        %v4206 = vlaneseq
        %v4207 = vshrl.u32 %v4206, 7
        %v4208 = vsub.s32 %v4205, %v4207
        %v4209 = vrot.slane %v4195, %v4208
        %v4210 = vcombine.low %v4138, %v4144
        %v4211 = vcombine.high %v4138, %v4144
        %v4213 = vunpack.c.l.s4 1983009808
        %v4214 = vunpack.c.0.s8 %v4213
        %v4215 = vlaneseq
        %v4216 = vshrl.u32 %v4215, 7
        %v4217 = vsub.s32 %v4214, %v4216
        %v4218 = vrot.slane %v4210, %v4217
        %v4220 = vunpack.c.l.s4 1983009808
        %v4221 = vunpack.c.0.s8 %v4220
        %v4222 = vlaneseq
        %v4223 = vshrl.u32 %v4222, 7
        %v4224 = vsub.s32 %v4221, %v4223
        %v4225 = vrot.slane %v4211, %v4224
        %v4226 = vcombine.low %v4170, %v4186
        %v4227 = vcombine.high %v4170, %v4186
        %v4229 = vunpack.c.l.s4 1934713408
        %v4230 = vunpack.c.0.s8 %v4229
        %v4231 = vlaneseq
        %v4232 = vshrl.u32 %v4231, 7
        %v4233 = vsub.s32 %v4230, %v4232
        %v4234 = vrot.slane %v4226, %v4233
        %v4236 = vunpack.c.l.s4 1934713408
        %v4237 = vunpack.c.0.s8 %v4236
        %v4238 = vlaneseq
        %v4239 = vshrl.u32 %v4238, 7
        %v4240 = vsub.s32 %v4237, %v4239
        %v4241 = vrot.slane %v4227, %v4240
        %v4242 = vcombine.low %v4177, %v4193
        %v4243 = vcombine.high %v4177, %v4193
        %v4245 = vunpack.c.l.s4 1934713408
        %v4246 = vunpack.c.0.s8 %v4245
        %v4247 = vlaneseq
        %v4248 = vshrl.u32 %v4247, 7
        %v4249 = vsub.s32 %v4246, %v4248
        %v4250 = vrot.slane %v4242, %v4249
        %v4252 = vunpack.c.l.s4 1934713408
        %v4253 = vunpack.c.0.s8 %v4252
        %v4254 = vlaneseq
        %v4255 = vshrl.u32 %v4254, 7
        %v4256 = vsub.s32 %v4253, %v4255
        %v4257 = vrot.slane %v4243, %v4256
        %v4258 = vcombine.low %v4202, %v4218
        %v4259 = vcombine.high %v4202, %v4218
        %v4261 = vunpack.c.l.s4 1934713408
        %v4262 = vunpack.c.0.s8 %v4261
        %v4263 = vlaneseq
        %v4264 = vshrl.u32 %v4263, 7
        %v4265 = vsub.s32 %v4262, %v4264
        %v4266 = vrot.slane %v4258, %v4265
        %v4268 = vunpack.c.l.s4 1934713408
        %v4269 = vunpack.c.0.s8 %v4268
        %v4270 = vlaneseq
        %v4271 = vshrl.u32 %v4270, 7
        %v4272 = vsub.s32 %v4269, %v4271
        %v4273 = vrot.slane %v4259, %v4272
        %v4274 = vcombine.low %v4209, %v4225
        %v4275 = vcombine.high %v4209, %v4225
        %v4277 = vunpack.c.l.s4 1934713408
        %v4278 = vunpack.c.0.s8 %v4277
        %v4279 = vlaneseq
        %v4280 = vshrl.u32 %v4279, 7
        %v4281 = vsub.s32 %v4278, %v4280
        %v4282 = vrot.slane %v4274, %v4281
        %v4284 = vunpack.c.l.s4 1934713408
        %v4285 = vunpack.c.0.s8 %v4284
        %v4286 = vlaneseq
        %v4287 = vshrl.u32 %v4286, 7
        %v4288 = vsub.s32 %v4285, %v4287
        %v4289 = vrot.slane %v4275, %v4288
        %v4290 = vcombine.low %v4234, %v4266
        %v4291 = vcombine.high %v4234, %v4266
        %v4292 = vcombine.low %v4241, %v4273
        %v4293 = vcombine.high %v4241, %v4273
        %v4294 = vcombine.low %v4250, %v4282
        %v4295 = vcombine.high %v4250, %v4282
        %v4296 = vcombine.low %v4257, %v4289
        %v4297 = vcombine.high %v4257, %v4289
        %v4298 = vcombine.low %v4147, %v4157
        %v4299 = vcombine.high %v4147, %v4157
        %v4301 = vunpack.c.l.s4 1983009808
        %v4302 = vunpack.c.0.s8 %v4301
        %v4303 = vlaneseq
        %v4304 = vshrl.u32 %v4303, 7
        %v4305 = vsub.s32 %v4302, %v4304
        %v4306 = vrot.slane %v4298, %v4305
        %v4308 = vunpack.c.l.s4 1983009808
        %v4309 = vunpack.c.0.s8 %v4308
        %v4310 = vlaneseq
        %v4311 = vshrl.u32 %v4310, 7
        %v4312 = vsub.s32 %v4309, %v4311
        %v4313 = vrot.slane %v4299, %v4312
        %v4314 = vcombine.low %v4150, %v4160
        %v4315 = vcombine.high %v4150, %v4160
        %v4317 = vunpack.c.l.s4 1983009808
        %v4318 = vunpack.c.0.s8 %v4317
        %v4319 = vlaneseq
        %v4320 = vshrl.u32 %v4319, 7
        %v4321 = vsub.s32 %v4318, %v4320
        %v4322 = vrot.slane %v4314, %v4321
        %v4324 = vunpack.c.l.s4 1983009808
        %v4325 = vunpack.c.0.s8 %v4324
        %v4326 = vlaneseq
        %v4327 = vshrl.u32 %v4326, 7
        %v4328 = vsub.s32 %v4325, %v4327
        %v4329 = vrot.slane %v4315, %v4328
        %v4330 = vcombine.low %v4306, %v4322
        %v4331 = vcombine.high %v4306, %v4322
        %v4333 = vunpack.c.l.s4 1934713408
        %v4334 = vunpack.c.0.s8 %v4333
        %v4335 = vlaneseq
        %v4336 = vshrl.u32 %v4335, 7
        %v4337 = vsub.s32 %v4334, %v4336
        %v4338 = vrot.slane %v4330, %v4337
        %v4340 = vunpack.c.l.s4 1934713408
        %v4341 = vunpack.c.0.s8 %v4340
        %v4342 = vlaneseq
        %v4343 = vshrl.u32 %v4342, 7
        %v4344 = vsub.s32 %v4341, %v4343
        %v4345 = vrot.slane %v4331, %v4344
        %v4346 = vcombine.low %v4313, %v4329
        %v4347 = vcombine.high %v4313, %v4329
        %v4349 = vunpack.c.l.s4 1934713408
        %v4350 = vunpack.c.0.s8 %v4349
        %v4351 = vlaneseq
        %v4352 = vshrl.u32 %v4351, 7
        %v4353 = vsub.s32 %v4350, %v4352
        %v4354 = vrot.slane %v4346, %v4353
        %v4356 = vunpack.c.l.s4 1934713408
        %v4357 = vunpack.c.0.s8 %v4356
        %v4358 = vlaneseq
        %v4359 = vshrl.u32 %v4358, 7
        %v4360 = vsub.s32 %v4357, %v4359
        %v4361 = vrot.slane %v4347, %v4360
        %v4362 = vcombine.high %v4338, 0.0
        %v4363 = vcombine.high %v4345, 0.0
        %v4364 = vcombine.high %v4354, 0.0
        %v4365 = vcombine.high %v4361, 0.0
        %v4366 = vmax.f32 %v4290, 0.0
        %v4367 = vmax.f32 %v4338, 0.0
        %v4368 = vmax.f32 %v4291, 0.0
        %v4369 = vmax.f32 %v4362, 0.0
        %v4370 = vmax.f32 %v4292, 0.0
        %v4371 = vmax.f32 %v4345, 0.0
        %v4372 = vmax.f32 %v4293, 0.0
        %v4373 = vmax.f32 %v4363, 0.0
        %v4374 = vmax.f32 %v4294, 0.0
        %v4375 = vmax.f32 %v4354, 0.0
        %v4376 = vmax.f32 %v4295, 0.0
        %v4377 = vmax.f32 %v4364, 0.0
        %v4378 = vmax.f32 %v4296, 0.0
        %v4379 = vmax.f32 %v4361, 0.0
        %v4380 = vmax.f32 %v4297, 0.0
        %v4381 = vmax.f32 %v4365, 0.0
        %v4382 = vld [vmem:[%s3] sm:$0x7]
        %4391 = vrot.lane.b32.xlu0 %v4366, 127
        %v4392 = vpop.permute.xlu0 %4391
        %4393 = vrot.lane.b32.xlu0 %v4368, 127
        %v4394 = vpop.permute.xlu0 %4393
        %4395 = vrot.lane.b32.xlu0 %v4370, 127
        %v4396 = vpop.permute.xlu0 %4395
        %4397 = vrot.lane.b32.xlu0 %v4372, 127
        %v4398 = vpop.permute.xlu0 %4397
        %4399 = vrot.lane.b32.xlu0 %v4374, 127
        %v4400 = vpop.permute.xlu0 %4399
        %4401 = vrot.lane.b32.xlu0 %v4376, 127
        %v4402 = vpop.permute.xlu0 %4401
        %4403 = vrot.lane.b32.xlu0 %v4378, 127
        %v4404 = vpop.permute.xlu0 %4403
        %4405 = vrot.lane.b32.xlu0 %v4380, 127
        %v4406 = vpop.permute.xlu0 %4405
        %4415 = vrot.lane.b32.xlu0 %v4366, 126
        %v4416 = vpop.permute.xlu0 %4415
        %4417 = vrot.lane.b32.xlu0 %v4368, 126
        %v4418 = vpop.permute.xlu0 %4417
        %4419 = vrot.lane.b32.xlu0 %v4370, 126
        %v4420 = vpop.permute.xlu0 %4419
        %4421 = vrot.lane.b32.xlu0 %v4372, 126
        %v4422 = vpop.permute.xlu0 %4421
        %4423 = vrot.lane.b32.xlu0 %v4374, 126
        %v4424 = vpop.permute.xlu0 %4423
        %4425 = vrot.lane.b32.xlu0 %v4376, 126
        %v4426 = vpop.permute.xlu0 %4425
        %4427 = vrot.lane.b32.xlu0 %v4378, 126
        %v4428 = vpop.permute.xlu0 %4427
        %4429 = vrot.lane.b32.xlu0 %v4380, 126
        %v4430 = vpop.permute.xlu0 %4429
        %v4447 = vrot.slane %v4366, 4
        %v4448 = vrot.slane %v4367, 4
        %v4449 = vsel %vm377, %v4447, %v4448
        %v4450 = vrot.slane %v4368, 4
        %v4451 = vrot.slane %v4369, 4
        %v4452 = vsel %vm377, %v4450, %v4451
        %v4453 = vrot.slane %v4370, 4
        %v4454 = vrot.slane %v4371, 4
        %v4455 = vsel %vm377, %v4453, %v4454
        %v4456 = vrot.slane %v4372, 4
        %v4457 = vrot.slane %v4373, 4
        %v4458 = vsel %vm377, %v4456, %v4457
        %v4459 = vrot.slane %v4374, 4
        %v4460 = vrot.slane %v4375, 4
        %v4461 = vsel %vm377, %v4459, %v4460
        %v4462 = vrot.slane %v4376, 4
        %v4463 = vrot.slane %v4377, 4
        %v4464 = vsel %vm377, %v4462, %v4463
        %v4465 = vrot.slane %v4378, 4
        %v4466 = vrot.slane %v4379, 4
        %v4467 = vsel %vm377, %v4465, %v4466
        %v4468 = vrot.slane %v4380, 4
        %v4469 = vrot.slane %v4381, 4
        %v4470 = vsel %vm377, %v4468, %v4469
        %4479 = vrot.lane.b32.xlu0 %v4449, 127
        %v4480 = vpop.permute.xlu0 %4479
        %4481 = vrot.lane.b32.xlu0 %v4452, 127
        %v4482 = vpop.permute.xlu0 %4481
        %4483 = vrot.lane.b32.xlu0 %v4455, 127
        %v4484 = vpop.permute.xlu0 %4483
        %4485 = vrot.lane.b32.xlu0 %v4458, 127
        %v4486 = vpop.permute.xlu0 %4485
        %4487 = vrot.lane.b32.xlu0 %v4461, 127
        %v4488 = vpop.permute.xlu0 %4487
        %4489 = vrot.lane.b32.xlu0 %v4464, 127
        %v4490 = vpop.permute.xlu0 %4489
        %4491 = vrot.lane.b32.xlu0 %v4467, 127
        %v4492 = vpop.permute.xlu0 %4491
        %4493 = vrot.lane.b32.xlu0 %v4470, 127
        %v4494 = vpop.permute.xlu0 %4493
        %4503 = vrot.lane.b32.xlu0 %v4449, 126
        %v4504 = vpop.permute.xlu0 %4503
        %4505 = vrot.lane.b32.xlu0 %v4452, 126
        %v4506 = vpop.permute.xlu0 %4505
        %4507 = vrot.lane.b32.xlu0 %v4455, 126
        %v4508 = vpop.permute.xlu0 %4507
        %4509 = vrot.lane.b32.xlu0 %v4458, 126
        %v4510 = vpop.permute.xlu0 %4509
        %4511 = vrot.lane.b32.xlu0 %v4461, 126
        %v4512 = vpop.permute.xlu0 %4511
        %4513 = vrot.lane.b32.xlu0 %v4464, 126
        %v4514 = vpop.permute.xlu0 %4513
        %4515 = vrot.lane.b32.xlu0 %v4467, 126
        %v4516 = vpop.permute.xlu0 %4515
        %4517 = vrot.lane.b32.xlu0 %v4470, 126
        %v4518 = vpop.permute.xlu0 %4517
        %v4527 = vcombine.low %v4366, %v4370
        %v4528 = vcombine.high %v4366, %v4370
        %v4530 = vunpack.c.l.s4 1983009808
        %v4531 = vunpack.c.0.s8 %v4530
        %v4532 = vlaneseq
        %v4533 = vshrl.u32 %v4532, 7
        %v4534 = vsub.s32 %v4531, %v4533
        %v4535 = vrot.slane %v4527, %v4534
        %v4537 = vunpack.c.l.s4 1983009808
        %v4538 = vunpack.c.0.s8 %v4537
        %v4539 = vlaneseq
        %v4540 = vshrl.u32 %v4539, 7
        %v4541 = vsub.s32 %v4538, %v4540
        %v4542 = vrot.slane %v4528, %v4541
        %v4543 = vcombine.low %v4368, %v4372
        %v4544 = vcombine.high %v4368, %v4372
        %v4546 = vunpack.c.l.s4 1983009808
        %v4547 = vunpack.c.0.s8 %v4546
        %v4548 = vlaneseq
        %v4549 = vshrl.u32 %v4548, 7
        %v4550 = vsub.s32 %v4547, %v4549
        %v4551 = vrot.slane %v4543, %v4550
        %v4553 = vunpack.c.l.s4 1983009808
        %v4554 = vunpack.c.0.s8 %v4553
        %v4555 = vlaneseq
        %v4556 = vshrl.u32 %v4555, 7
        %v4557 = vsub.s32 %v4554, %v4556
        %v4558 = vrot.slane %v4544, %v4557
        %v4559 = vcombine.low %v4374, %v4378
        %v4560 = vcombine.high %v4374, %v4378
        %v4562 = vunpack.c.l.s4 1983009808
        %v4563 = vunpack.c.0.s8 %v4562
        %v4564 = vlaneseq
        %v4565 = vshrl.u32 %v4564, 7
        %v4566 = vsub.s32 %v4563, %v4565
        %v4567 = vrot.slane %v4559, %v4566
        %v4569 = vunpack.c.l.s4 1983009808
        %v4570 = vunpack.c.0.s8 %v4569
        %v4571 = vlaneseq
        %v4572 = vshrl.u32 %v4571, 7
        %v4573 = vsub.s32 %v4570, %v4572
        %v4574 = vrot.slane %v4560, %v4573
        %v4575 = vcombine.low %v4376, %v4380
        %v4576 = vcombine.high %v4376, %v4380
        %v4578 = vunpack.c.l.s4 1983009808
        %v4579 = vunpack.c.0.s8 %v4578
        %v4580 = vlaneseq
        %v4581 = vshrl.u32 %v4580, 7
        %v4582 = vsub.s32 %v4579, %v4581
        %v4583 = vrot.slane %v4575, %v4582
        %v4585 = vunpack.c.l.s4 1983009808
        %v4586 = vunpack.c.0.s8 %v4585
        %v4587 = vlaneseq
        %v4588 = vshrl.u32 %v4587, 7
        %v4589 = vsub.s32 %v4586, %v4588
        %v4590 = vrot.slane %v4576, %v4589
        %v4591 = vcombine.low %v4535, %v4551
        %v4592 = vcombine.high %v4535, %v4551
        %v4594 = vunpack.c.l.s4 1934713408
        %v4595 = vunpack.c.0.s8 %v4594
        %v4596 = vlaneseq
        %v4597 = vshrl.u32 %v4596, 7
        %v4598 = vsub.s32 %v4595, %v4597
        %v4599 = vrot.slane %v4591, %v4598
        %v4601 = vunpack.c.l.s4 1934713408
        %v4602 = vunpack.c.0.s8 %v4601
        %v4603 = vlaneseq
        %v4604 = vshrl.u32 %v4603, 7
        %v4605 = vsub.s32 %v4602, %v4604
        %v4606 = vrot.slane %v4592, %v4605
        %v4607 = vcombine.low %v4542, %v4558
        %v4608 = vcombine.high %v4542, %v4558
        %v4610 = vunpack.c.l.s4 1934713408
        %v4611 = vunpack.c.0.s8 %v4610
        %v4612 = vlaneseq
        %v4613 = vshrl.u32 %v4612, 7
        %v4614 = vsub.s32 %v4611, %v4613
        %v4615 = vrot.slane %v4607, %v4614
        %v4617 = vunpack.c.l.s4 1934713408
        %v4618 = vunpack.c.0.s8 %v4617
        %v4619 = vlaneseq
        %v4620 = vshrl.u32 %v4619, 7
        %v4621 = vsub.s32 %v4618, %v4620
        %v4622 = vrot.slane %v4608, %v4621
        %v4623 = vcombine.low %v4567, %v4583
        %v4624 = vcombine.high %v4567, %v4583
        %v4626 = vunpack.c.l.s4 1934713408
        %v4627 = vunpack.c.0.s8 %v4626
        %v4628 = vlaneseq
        %v4629 = vshrl.u32 %v4628, 7
        %v4630 = vsub.s32 %v4627, %v4629
        %v4631 = vrot.slane %v4623, %v4630
        %v4633 = vunpack.c.l.s4 1934713408
        %v4634 = vunpack.c.0.s8 %v4633
        %v4635 = vlaneseq
        %v4636 = vshrl.u32 %v4635, 7
        %v4637 = vsub.s32 %v4634, %v4636
        %v4638 = vrot.slane %v4624, %v4637
        %v4639 = vcombine.low %v4574, %v4590
        %v4640 = vcombine.high %v4574, %v4590
        %v4642 = vunpack.c.l.s4 1934713408
        %v4643 = vunpack.c.0.s8 %v4642
        %v4644 = vlaneseq
        %v4645 = vshrl.u32 %v4644, 7
        %v4646 = vsub.s32 %v4643, %v4645
        %v4647 = vrot.slane %v4639, %v4646
        %v4649 = vunpack.c.l.s4 1934713408
        %v4650 = vunpack.c.0.s8 %v4649
        %v4651 = vlaneseq
        %v4652 = vshrl.u32 %v4651, 7
        %v4653 = vsub.s32 %v4650, %v4652
        %v4654 = vrot.slane %v4640, %v4653
        %v4655 = vcombine.low %v4599, %v4631
        %v4656 = vcombine.high %v4599, %v4631
        %v4657 = vcombine.low %v4606, %v4638
        %v4658 = vcombine.high %v4606, %v4638
        %v4659 = vcombine.low %v4615, %v4647
        %v4660 = vcombine.high %v4615, %v4647
        %v4661 = vcombine.low %v4622, %v4654
        %v4662 = vcombine.high %v4622, %v4654
        %v4663 = vcombine.low %v4392, %v4396
        %v4664 = vcombine.high %v4392, %v4396
        %v4666 = vunpack.c.l.s4 1983009808
        %v4667 = vunpack.c.0.s8 %v4666
        %v4668 = vlaneseq
        %v4669 = vshrl.u32 %v4668, 7
        %v4670 = vsub.s32 %v4667, %v4669
        %v4671 = vrot.slane %v4663, %v4670
        %v4673 = vunpack.c.l.s4 1983009808
        %v4674 = vunpack.c.0.s8 %v4673
        %v4675 = vlaneseq
        %v4676 = vshrl.u32 %v4675, 7
        %v4677 = vsub.s32 %v4674, %v4676
        %v4678 = vrot.slane %v4664, %v4677
        %v4679 = vcombine.low %v4394, %v4398
        %v4680 = vcombine.high %v4394, %v4398
        %v4682 = vunpack.c.l.s4 1983009808
        %v4683 = vunpack.c.0.s8 %v4682
        %v4684 = vlaneseq
        %v4685 = vshrl.u32 %v4684, 7
        %v4686 = vsub.s32 %v4683, %v4685
        %v4687 = vrot.slane %v4679, %v4686
        %v4689 = vunpack.c.l.s4 1983009808
        %v4690 = vunpack.c.0.s8 %v4689
        %v4691 = vlaneseq
        %v4692 = vshrl.u32 %v4691, 7
        %v4693 = vsub.s32 %v4690, %v4692
        %v4694 = vrot.slane %v4680, %v4693
        %v4695 = vcombine.low %v4400, %v4404
        %v4696 = vcombine.high %v4400, %v4404
        %v4698 = vunpack.c.l.s4 1983009808
        %v4699 = vunpack.c.0.s8 %v4698
        %v4700 = vlaneseq
        %v4701 = vshrl.u32 %v4700, 7
        %v4702 = vsub.s32 %v4699, %v4701
        %v4703 = vrot.slane %v4695, %v4702
        %v4705 = vunpack.c.l.s4 1983009808
        %v4706 = vunpack.c.0.s8 %v4705
        %v4707 = vlaneseq
        %v4708 = vshrl.u32 %v4707, 7
        %v4709 = vsub.s32 %v4706, %v4708
        %v4710 = vrot.slane %v4696, %v4709
        %v4711 = vcombine.low %v4402, %v4406
        %v4712 = vcombine.high %v4402, %v4406
        %v4714 = vunpack.c.l.s4 1983009808
        %v4715 = vunpack.c.0.s8 %v4714
        %v4716 = vlaneseq
        %v4717 = vshrl.u32 %v4716, 7
        %v4718 = vsub.s32 %v4715, %v4717
        %v4719 = vrot.slane %v4711, %v4718
        %v4721 = vunpack.c.l.s4 1983009808
        %v4722 = vunpack.c.0.s8 %v4721
        %v4723 = vlaneseq
        %v4724 = vshrl.u32 %v4723, 7
        %v4725 = vsub.s32 %v4722, %v4724
        %v4726 = vrot.slane %v4712, %v4725
        %v4727 = vcombine.low %v4671, %v4687
        %v4728 = vcombine.high %v4671, %v4687
        %v4730 = vunpack.c.l.s4 1934713408
        %v4731 = vunpack.c.0.s8 %v4730
        %v4732 = vlaneseq
        %v4733 = vshrl.u32 %v4732, 7
        %v4734 = vsub.s32 %v4731, %v4733
        %v4735 = vrot.slane %v4727, %v4734
        %v4737 = vunpack.c.l.s4 1934713408
        %v4738 = vunpack.c.0.s8 %v4737
        %v4739 = vlaneseq
        %v4740 = vshrl.u32 %v4739, 7
        %v4741 = vsub.s32 %v4738, %v4740
        %v4742 = vrot.slane %v4728, %v4741
        %v4743 = vcombine.low %v4678, %v4694
        %v4744 = vcombine.high %v4678, %v4694
        %v4746 = vunpack.c.l.s4 1934713408
        %v4747 = vunpack.c.0.s8 %v4746
        %v4748 = vlaneseq
        %v4749 = vshrl.u32 %v4748, 7
        %v4750 = vsub.s32 %v4747, %v4749
        %v4751 = vrot.slane %v4743, %v4750
        %v4753 = vunpack.c.l.s4 1934713408
        %v4754 = vunpack.c.0.s8 %v4753
        %v4755 = vlaneseq
        %v4756 = vshrl.u32 %v4755, 7
        %v4757 = vsub.s32 %v4754, %v4756
        %v4758 = vrot.slane %v4744, %v4757
        %v4759 = vcombine.low %v4703, %v4719
        %v4760 = vcombine.high %v4703, %v4719
        %v4762 = vunpack.c.l.s4 1934713408
        %v4763 = vunpack.c.0.s8 %v4762
        %v4764 = vlaneseq
        %v4765 = vshrl.u32 %v4764, 7
        %v4766 = vsub.s32 %v4763, %v4765
        %v4767 = vrot.slane %v4759, %v4766
        %v4769 = vunpack.c.l.s4 1934713408
        %v4770 = vunpack.c.0.s8 %v4769
        %v4771 = vlaneseq
        %v4772 = vshrl.u32 %v4771, 7
        %v4773 = vsub.s32 %v4770, %v4772
        %v4774 = vrot.slane %v4760, %v4773
        %v4775 = vcombine.low %v4710, %v4726
        %v4776 = vcombine.high %v4710, %v4726
        %v4778 = vunpack.c.l.s4 1934713408
        %v4779 = vunpack.c.0.s8 %v4778
        %v4780 = vlaneseq
        %v4781 = vshrl.u32 %v4780, 7
        %v4782 = vsub.s32 %v4779, %v4781
        %v4783 = vrot.slane %v4775, %v4782
        %v4785 = vunpack.c.l.s4 1934713408
        %v4786 = vunpack.c.0.s8 %v4785
        %v4787 = vlaneseq
        %v4788 = vshrl.u32 %v4787, 7
        %v4789 = vsub.s32 %v4786, %v4788
        %v4790 = vrot.slane %v4776, %v4789
        %v4791 = vcombine.low %v4735, %v4767
        %v4792 = vcombine.high %v4735, %v4767
        %v4793 = vcombine.low %v4742, %v4774
        %v4794 = vcombine.high %v4742, %v4774
        %v4795 = vcombine.low %v4751, %v4783
        %v4796 = vcombine.high %v4751, %v4783
        %v4797 = vcombine.low %v4758, %v4790
        %v4798 = vcombine.high %v4758, %v4790
        %v4799 = vcombine.low %v4416, %v4420
        %v4800 = vcombine.high %v4416, %v4420
        %v4802 = vunpack.c.l.s4 1983009808
        %v4803 = vunpack.c.0.s8 %v4802
        %v4804 = vlaneseq
        %v4805 = vshrl.u32 %v4804, 7
        %v4806 = vsub.s32 %v4803, %v4805
        %v4807 = vrot.slane %v4799, %v4806
        %v4809 = vunpack.c.l.s4 1983009808
        %v4810 = vunpack.c.0.s8 %v4809
        %v4811 = vlaneseq
        %v4812 = vshrl.u32 %v4811, 7
        %v4813 = vsub.s32 %v4810, %v4812
        %v4814 = vrot.slane %v4800, %v4813
        %v4815 = vcombine.low %v4418, %v4422
        %v4816 = vcombine.high %v4418, %v4422
        %v4818 = vunpack.c.l.s4 1983009808
        %v4819 = vunpack.c.0.s8 %v4818
        %v4820 = vlaneseq
        %v4821 = vshrl.u32 %v4820, 7
        %v4822 = vsub.s32 %v4819, %v4821
        %v4823 = vrot.slane %v4815, %v4822
        %v4825 = vunpack.c.l.s4 1983009808
        %v4826 = vunpack.c.0.s8 %v4825
        %v4827 = vlaneseq
        %v4828 = vshrl.u32 %v4827, 7
        %v4829 = vsub.s32 %v4826, %v4828
        %v4830 = vrot.slane %v4816, %v4829
        %v4831 = vcombine.low %v4424, %v4428
        %v4832 = vcombine.high %v4424, %v4428
        %v4834 = vunpack.c.l.s4 1983009808
        %v4835 = vunpack.c.0.s8 %v4834
        %v4836 = vlaneseq
        %v4837 = vshrl.u32 %v4836, 7
        %v4838 = vsub.s32 %v4835, %v4837
        %v4839 = vrot.slane %v4831, %v4838
        %v4841 = vunpack.c.l.s4 1983009808
        %v4842 = vunpack.c.0.s8 %v4841
        %v4843 = vlaneseq
        %v4844 = vshrl.u32 %v4843, 7
        %v4845 = vsub.s32 %v4842, %v4844
        %v4846 = vrot.slane %v4832, %v4845
        %v4847 = vcombine.low %v4426, %v4430
        %v4848 = vcombine.high %v4426, %v4430
        %v4850 = vunpack.c.l.s4 1983009808
        %v4851 = vunpack.c.0.s8 %v4850
        %v4852 = vlaneseq
        %v4853 = vshrl.u32 %v4852, 7
        %v4854 = vsub.s32 %v4851, %v4853
        %v4855 = vrot.slane %v4847, %v4854
        %v4857 = vunpack.c.l.s4 1983009808
        %v4858 = vunpack.c.0.s8 %v4857
        %v4859 = vlaneseq
        %v4860 = vshrl.u32 %v4859, 7
        %v4861 = vsub.s32 %v4858, %v4860
        %v4862 = vrot.slane %v4848, %v4861
        %v4863 = vcombine.low %v4807, %v4823
        %v4864 = vcombine.high %v4807, %v4823
        %v4866 = vunpack.c.l.s4 1934713408
        %v4867 = vunpack.c.0.s8 %v4866
        %v4868 = vlaneseq
        %v4869 = vshrl.u32 %v4868, 7
        %v4870 = vsub.s32 %v4867, %v4869
        %v4871 = vrot.slane %v4863, %v4870
        %v4873 = vunpack.c.l.s4 1934713408
        %v4874 = vunpack.c.0.s8 %v4873
        %v4875 = vlaneseq
        %v4876 = vshrl.u32 %v4875, 7
        %v4877 = vsub.s32 %v4874, %v4876
        %v4878 = vrot.slane %v4864, %v4877
        %v4879 = vcombine.low %v4814, %v4830
        %v4880 = vcombine.high %v4814, %v4830
        %v4882 = vunpack.c.l.s4 1934713408
        %v4883 = vunpack.c.0.s8 %v4882
        %v4884 = vlaneseq
        %v4885 = vshrl.u32 %v4884, 7
        %v4886 = vsub.s32 %v4883, %v4885
        %v4887 = vrot.slane %v4879, %v4886
        %v4889 = vunpack.c.l.s4 1934713408
        %v4890 = vunpack.c.0.s8 %v4889
        %v4891 = vlaneseq
        %v4892 = vshrl.u32 %v4891, 7
        %v4893 = vsub.s32 %v4890, %v4892
        %v4894 = vrot.slane %v4880, %v4893
        %v4895 = vcombine.low %v4839, %v4855
        %v4896 = vcombine.high %v4839, %v4855
        %v4898 = vunpack.c.l.s4 1934713408
        %v4899 = vunpack.c.0.s8 %v4898
        %v4900 = vlaneseq
        %v4901 = vshrl.u32 %v4900, 7
        %v4902 = vsub.s32 %v4899, %v4901
        %v4903 = vrot.slane %v4895, %v4902
        %v4905 = vunpack.c.l.s4 1934713408
        %v4906 = vunpack.c.0.s8 %v4905
        %v4907 = vlaneseq
        %v4908 = vshrl.u32 %v4907, 7
        %v4909 = vsub.s32 %v4906, %v4908
        %v4910 = vrot.slane %v4896, %v4909
        %v4911 = vcombine.low %v4846, %v4862
        %v4912 = vcombine.high %v4846, %v4862
        %v4914 = vunpack.c.l.s4 1934713408
        %v4915 = vunpack.c.0.s8 %v4914
        %v4916 = vlaneseq
        %v4917 = vshrl.u32 %v4916, 7
        %v4918 = vsub.s32 %v4915, %v4917
        %v4919 = vrot.slane %v4911, %v4918
        %v4921 = vunpack.c.l.s4 1934713408
        %v4922 = vunpack.c.0.s8 %v4921
        %v4923 = vlaneseq
        %v4924 = vshrl.u32 %v4923, 7
        %v4925 = vsub.s32 %v4922, %v4924
        %v4926 = vrot.slane %v4912, %v4925
        %v4927 = vcombine.low %v4871, %v4903
        %v4928 = vcombine.high %v4871, %v4903
        %v4929 = vcombine.low %v4878, %v4910
        %v4930 = vcombine.high %v4878, %v4910
        %v4931 = vcombine.low %v4887, %v4919
        %v4932 = vcombine.high %v4887, %v4919
        %v4933 = vcombine.low %v4894, %v4926
        %v4934 = vcombine.high %v4894, %v4926
        %v4935 = vcombine.low %v4449, %v4455
        %v4936 = vcombine.high %v4449, %v4455
        %v4938 = vunpack.c.l.s4 1983009808
        %v4939 = vunpack.c.0.s8 %v4938
        %v4940 = vlaneseq
        %v4941 = vshrl.u32 %v4940, 7
        %v4942 = vsub.s32 %v4939, %v4941
        %v4943 = vrot.slane %v4935, %v4942
        %v4945 = vunpack.c.l.s4 1983009808
        %v4946 = vunpack.c.0.s8 %v4945
        %v4947 = vlaneseq
        %v4948 = vshrl.u32 %v4947, 7
        %v4949 = vsub.s32 %v4946, %v4948
        %v4950 = vrot.slane %v4936, %v4949
        %v4951 = vcombine.low %v4452, %v4458
        %v4952 = vcombine.high %v4452, %v4458
        %v4954 = vunpack.c.l.s4 1983009808
        %v4955 = vunpack.c.0.s8 %v4954
        %v4956 = vlaneseq
        %v4957 = vshrl.u32 %v4956, 7
        %v4958 = vsub.s32 %v4955, %v4957
        %v4959 = vrot.slane %v4951, %v4958
        %v4961 = vunpack.c.l.s4 1983009808
        %v4962 = vunpack.c.0.s8 %v4961
        %v4963 = vlaneseq
        %v4964 = vshrl.u32 %v4963, 7
        %v4965 = vsub.s32 %v4962, %v4964
        %v4966 = vrot.slane %v4952, %v4965
        %v4967 = vcombine.low %v4461, %v4467
        %v4968 = vcombine.high %v4461, %v4467
        %v4970 = vunpack.c.l.s4 1983009808
        %v4971 = vunpack.c.0.s8 %v4970
        %v4972 = vlaneseq
        %v4973 = vshrl.u32 %v4972, 7
        %v4974 = vsub.s32 %v4971, %v4973
        %v4975 = vrot.slane %v4967, %v4974
        %v4977 = vunpack.c.l.s4 1983009808
        %v4978 = vunpack.c.0.s8 %v4977
        %v4979 = vlaneseq
        %v4980 = vshrl.u32 %v4979, 7
        %v4981 = vsub.s32 %v4978, %v4980
        %v4982 = vrot.slane %v4968, %v4981
        %v4983 = vcombine.low %v4464, %v4470
        %v4984 = vcombine.high %v4464, %v4470
        %v4986 = vunpack.c.l.s4 1983009808
        %v4987 = vunpack.c.0.s8 %v4986
        %v4988 = vlaneseq
        %v4989 = vshrl.u32 %v4988, 7
        %v4990 = vsub.s32 %v4987, %v4989
        %v4991 = vrot.slane %v4983, %v4990
        %v4993 = vunpack.c.l.s4 1983009808
        %v4994 = vunpack.c.0.s8 %v4993
        %v4995 = vlaneseq
        %v4996 = vshrl.u32 %v4995, 7
        %v4997 = vsub.s32 %v4994, %v4996
        %v4998 = vrot.slane %v4984, %v4997
        %v4999 = vcombine.low %v4943, %v4959
        %v5000 = vcombine.high %v4943, %v4959
        %v5002 = vunpack.c.l.s4 1934713408
        %v5003 = vunpack.c.0.s8 %v5002
        %v5004 = vlaneseq
        %v5005 = vshrl.u32 %v5004, 7
        %v5006 = vsub.s32 %v5003, %v5005
        %v5007 = vrot.slane %v4999, %v5006
        %v5009 = vunpack.c.l.s4 1934713408
        %v5010 = vunpack.c.0.s8 %v5009
        %v5011 = vlaneseq
        %v5012 = vshrl.u32 %v5011, 7
        %v5013 = vsub.s32 %v5010, %v5012
        %v5014 = vrot.slane %v5000, %v5013
        %v5015 = vcombine.low %v4950, %v4966
        %v5016 = vcombine.high %v4950, %v4966
        %v5018 = vunpack.c.l.s4 1934713408
        %v5019 = vunpack.c.0.s8 %v5018
        %v5020 = vlaneseq
        %v5021 = vshrl.u32 %v5020, 7
        %v5022 = vsub.s32 %v5019, %v5021
        %v5023 = vrot.slane %v5015, %v5022
        %v5025 = vunpack.c.l.s4 1934713408
        %v5026 = vunpack.c.0.s8 %v5025
        %v5027 = vlaneseq
        %v5028 = vshrl.u32 %v5027, 7
        %v5029 = vsub.s32 %v5026, %v5028
        %v5030 = vrot.slane %v5016, %v5029
        %v5031 = vcombine.low %v4975, %v4991
        %v5032 = vcombine.high %v4975, %v4991
        %v5034 = vunpack.c.l.s4 1934713408
        %v5035 = vunpack.c.0.s8 %v5034
        %v5036 = vlaneseq
        %v5037 = vshrl.u32 %v5036, 7
        %v5038 = vsub.s32 %v5035, %v5037
        %v5039 = vrot.slane %v5031, %v5038
        %v5041 = vunpack.c.l.s4 1934713408
        %v5042 = vunpack.c.0.s8 %v5041
        %v5043 = vlaneseq
        %v5044 = vshrl.u32 %v5043, 7
        %v5045 = vsub.s32 %v5042, %v5044
        %v5046 = vrot.slane %v5032, %v5045
        %v5047 = vcombine.low %v4982, %v4998
        %v5048 = vcombine.high %v4982, %v4998
        %v5050 = vunpack.c.l.s4 1934713408
        %v5051 = vunpack.c.0.s8 %v5050
        %v5052 = vlaneseq
        %v5053 = vshrl.u32 %v5052, 7
        %v5054 = vsub.s32 %v5051, %v5053
        %v5055 = vrot.slane %v5047, %v5054
        %v5057 = vunpack.c.l.s4 1934713408
        %v5058 = vunpack.c.0.s8 %v5057
        %v5059 = vlaneseq
        %v5060 = vshrl.u32 %v5059, 7
        %v5061 = vsub.s32 %v5058, %v5060
        %v5062 = vrot.slane %v5048, %v5061
        %v5063 = vcombine.low %v5007, %v5039
        %v5064 = vcombine.high %v5007, %v5039
        %v5065 = vcombine.low %v5014, %v5046
        %v5066 = vcombine.high %v5014, %v5046
        %v5067 = vcombine.low %v5023, %v5055
        %v5068 = vcombine.high %v5023, %v5055
        %v5069 = vcombine.low %v5030, %v5062
        %v5070 = vcombine.high %v5030, %v5062
        %v5071 = vcombine.low %v4480, %v4484
        %v5072 = vcombine.high %v4480, %v4484
        %v5074 = vunpack.c.l.s4 1983009808
        %v5075 = vunpack.c.0.s8 %v5074
        %v5076 = vlaneseq
        %v5077 = vshrl.u32 %v5076, 7
        %v5078 = vsub.s32 %v5075, %v5077
        %v5079 = vrot.slane %v5071, %v5078
        %v5081 = vunpack.c.l.s4 1983009808
        %v5082 = vunpack.c.0.s8 %v5081
        %v5083 = vlaneseq
        %v5084 = vshrl.u32 %v5083, 7
        %v5085 = vsub.s32 %v5082, %v5084
        %v5086 = vrot.slane %v5072, %v5085
        %v5087 = vcombine.low %v4482, %v4486
        %v5088 = vcombine.high %v4482, %v4486
        %v5090 = vunpack.c.l.s4 1983009808
        %v5091 = vunpack.c.0.s8 %v5090
        %v5092 = vlaneseq
        %v5093 = vshrl.u32 %v5092, 7
        %v5094 = vsub.s32 %v5091, %v5093
        %v5095 = vrot.slane %v5087, %v5094
        %v5097 = vunpack.c.l.s4 1983009808
        %v5098 = vunpack.c.0.s8 %v5097
        %v5099 = vlaneseq
        %v5100 = vshrl.u32 %v5099, 7
        %v5101 = vsub.s32 %v5098, %v5100
        %v5102 = vrot.slane %v5088, %v5101
        %v5103 = vcombine.low %v4488, %v4492
        %v5104 = vcombine.high %v4488, %v4492
        %v5106 = vunpack.c.l.s4 1983009808
        %v5107 = vunpack.c.0.s8 %v5106
        %v5108 = vlaneseq
        %v5109 = vshrl.u32 %v5108, 7
        %v5110 = vsub.s32 %v5107, %v5109
        %v5111 = vrot.slane %v5103, %v5110
        %v5113 = vunpack.c.l.s4 1983009808
        %v5114 = vunpack.c.0.s8 %v5113
        %v5115 = vlaneseq
        %v5116 = vshrl.u32 %v5115, 7
        %v5117 = vsub.s32 %v5114, %v5116
        %v5118 = vrot.slane %v5104, %v5117
        %v5119 = vcombine.low %v4490, %v4494
        %v5120 = vcombine.high %v4490, %v4494
        %v5122 = vunpack.c.l.s4 1983009808
        %v5123 = vunpack.c.0.s8 %v5122
        %v5124 = vlaneseq
        %v5125 = vshrl.u32 %v5124, 7
        %v5126 = vsub.s32 %v5123, %v5125
        %v5127 = vrot.slane %v5119, %v5126
        %v5129 = vunpack.c.l.s4 1983009808
        %v5130 = vunpack.c.0.s8 %v5129
        %v5131 = vlaneseq
        %v5132 = vshrl.u32 %v5131, 7
        %v5133 = vsub.s32 %v5130, %v5132
        %v5134 = vrot.slane %v5120, %v5133
        %v5135 = vcombine.low %v5079, %v5095
        %v5136 = vcombine.high %v5079, %v5095
        %v5138 = vunpack.c.l.s4 1934713408
        %v5139 = vunpack.c.0.s8 %v5138
        %v5140 = vlaneseq
        %v5141 = vshrl.u32 %v5140, 7
        %v5142 = vsub.s32 %v5139, %v5141
        %v5143 = vrot.slane %v5135, %v5142
        %v5145 = vunpack.c.l.s4 1934713408
        %v5146 = vunpack.c.0.s8 %v5145
        %v5147 = vlaneseq
        %v5148 = vshrl.u32 %v5147, 7
        %v5149 = vsub.s32 %v5146, %v5148
        %v5150 = vrot.slane %v5136, %v5149
        %v5151 = vcombine.low %v5086, %v5102
        %v5152 = vcombine.high %v5086, %v5102
        %v5154 = vunpack.c.l.s4 1934713408
        %v5155 = vunpack.c.0.s8 %v5154
        %v5156 = vlaneseq
        %v5157 = vshrl.u32 %v5156, 7
        %v5158 = vsub.s32 %v5155, %v5157
        %v5159 = vrot.slane %v5151, %v5158
        %v5161 = vunpack.c.l.s4 1934713408
        %v5162 = vunpack.c.0.s8 %v5161
        %v5163 = vlaneseq
        %v5164 = vshrl.u32 %v5163, 7
        %v5165 = vsub.s32 %v5162, %v5164
        %v5166 = vrot.slane %v5152, %v5165
        %v5167 = vcombine.low %v5111, %v5127
        %v5168 = vcombine.high %v5111, %v5127
        %v5170 = vunpack.c.l.s4 1934713408
        %v5171 = vunpack.c.0.s8 %v5170
        %v5172 = vlaneseq
        %v5173 = vshrl.u32 %v5172, 7
        %v5174 = vsub.s32 %v5171, %v5173
        %v5175 = vrot.slane %v5167, %v5174
        %v5177 = vunpack.c.l.s4 1934713408
        %v5178 = vunpack.c.0.s8 %v5177
        %v5179 = vlaneseq
        %v5180 = vshrl.u32 %v5179, 7
        %v5181 = vsub.s32 %v5178, %v5180
        %v5182 = vrot.slane %v5168, %v5181
        %v5183 = vcombine.low %v5118, %v5134
        %v5184 = vcombine.high %v5118, %v5134
        %v5186 = vunpack.c.l.s4 1934713408
        %v5187 = vunpack.c.0.s8 %v5186
        %v5188 = vlaneseq
        %v5189 = vshrl.u32 %v5188, 7
        %v5190 = vsub.s32 %v5187, %v5189
        %v5191 = vrot.slane %v5183, %v5190
        %v5193 = vunpack.c.l.s4 1934713408
        %v5194 = vunpack.c.0.s8 %v5193
        %v5195 = vlaneseq
        %v5196 = vshrl.u32 %v5195, 7
        %v5197 = vsub.s32 %v5194, %v5196
        %v5198 = vrot.slane %v5184, %v5197
        %v5199 = vcombine.low %v5143, %v5175
        %v5200 = vcombine.high %v5143, %v5175
        %v5201 = vcombine.low %v5150, %v5182
        %v5202 = vcombine.high %v5150, %v5182
        %v5203 = vcombine.low %v5159, %v5191
        %v5204 = vcombine.high %v5159, %v5191
        %v5205 = vcombine.low %v5166, %v5198
        %v5206 = vcombine.high %v5166, %v5198
        %v5207 = vcombine.low %v4504, %v4508
        %v5208 = vcombine.high %v4504, %v4508
        %v5210 = vunpack.c.l.s4 1983009808
        %v5211 = vunpack.c.0.s8 %v5210
        %v5212 = vlaneseq
        %v5213 = vshrl.u32 %v5212, 7
        %v5214 = vsub.s32 %v5211, %v5213
        %v5215 = vrot.slane %v5207, %v5214
        %v5217 = vunpack.c.l.s4 1983009808
        %v5218 = vunpack.c.0.s8 %v5217
        %v5219 = vlaneseq
        %v5220 = vshrl.u32 %v5219, 7
        %v5221 = vsub.s32 %v5218, %v5220
        %v5222 = vrot.slane %v5208, %v5221
        %v5223 = vcombine.low %v4506, %v4510
        %v5224 = vcombine.high %v4506, %v4510
        %v5226 = vunpack.c.l.s4 1983009808
        %v5227 = vunpack.c.0.s8 %v5226
        %v5228 = vlaneseq
        %v5229 = vshrl.u32 %v5228, 7
        %v5230 = vsub.s32 %v5227, %v5229
        %v5231 = vrot.slane %v5223, %v5230
        %v5233 = vunpack.c.l.s4 1983009808
        %v5234 = vunpack.c.0.s8 %v5233
        %v5235 = vlaneseq
        %v5236 = vshrl.u32 %v5235, 7
        %v5237 = vsub.s32 %v5234, %v5236
        %v5238 = vrot.slane %v5224, %v5237
        %v5239 = vcombine.low %v4512, %v4516
        %v5240 = vcombine.high %v4512, %v4516
        %v5242 = vunpack.c.l.s4 1983009808
        %v5243 = vunpack.c.0.s8 %v5242
        %v5244 = vlaneseq
        %v5245 = vshrl.u32 %v5244, 7
        %v5246 = vsub.s32 %v5243, %v5245
        %v5247 = vrot.slane %v5239, %v5246
        %v5249 = vunpack.c.l.s4 1983009808
        %v5250 = vunpack.c.0.s8 %v5249
        %v5251 = vlaneseq
        %v5252 = vshrl.u32 %v5251, 7
        %v5253 = vsub.s32 %v5250, %v5252
        %v5254 = vrot.slane %v5240, %v5253
        %v5255 = vcombine.low %v4514, %v4518
        %v5256 = vcombine.high %v4514, %v4518
        %v5258 = vunpack.c.l.s4 1983009808
        %v5259 = vunpack.c.0.s8 %v5258
        %v5260 = vlaneseq
        %v5261 = vshrl.u32 %v5260, 7
        %v5262 = vsub.s32 %v5259, %v5261
        %v5263 = vrot.slane %v5255, %v5262
        %v5265 = vunpack.c.l.s4 1983009808
        %v5266 = vunpack.c.0.s8 %v5265
        %v5267 = vlaneseq
        %v5268 = vshrl.u32 %v5267, 7
        %v5269 = vsub.s32 %v5266, %v5268
        %v5270 = vrot.slane %v5256, %v5269
        %v5271 = vcombine.low %v5215, %v5231
        %v5272 = vcombine.high %v5215, %v5231
        %v5274 = vunpack.c.l.s4 1934713408
        %v5275 = vunpack.c.0.s8 %v5274
        %v5276 = vlaneseq
        %v5277 = vshrl.u32 %v5276, 7
        %v5278 = vsub.s32 %v5275, %v5277
        %v5279 = vrot.slane %v5271, %v5278
        %v5281 = vunpack.c.l.s4 1934713408
        %v5282 = vunpack.c.0.s8 %v5281
        %v5283 = vlaneseq
        %v5284 = vshrl.u32 %v5283, 7
        %v5285 = vsub.s32 %v5282, %v5284
        %v5286 = vrot.slane %v5272, %v5285
        %v5287 = vcombine.low %v5222, %v5238
        %v5288 = vcombine.high %v5222, %v5238
        %v5290 = vunpack.c.l.s4 1934713408
        %v5291 = vunpack.c.0.s8 %v5290
        %v5292 = vlaneseq
        %v5293 = vshrl.u32 %v5292, 7
        %v5294 = vsub.s32 %v5291, %v5293
        %v5295 = vrot.slane %v5287, %v5294
        %v5297 = vunpack.c.l.s4 1934713408
        %v5298 = vunpack.c.0.s8 %v5297
        %v5299 = vlaneseq
        %v5300 = vshrl.u32 %v5299, 7
        %v5301 = vsub.s32 %v5298, %v5300
        %v5302 = vrot.slane %v5288, %v5301
        %v5303 = vcombine.low %v5247, %v5263
        %v5304 = vcombine.high %v5247, %v5263
        %v5306 = vunpack.c.l.s4 1934713408
        %v5307 = vunpack.c.0.s8 %v5306
        %v5308 = vlaneseq
        %v5309 = vshrl.u32 %v5308, 7
        %v5310 = vsub.s32 %v5307, %v5309
        %v5311 = vrot.slane %v5303, %v5310
        %v5313 = vunpack.c.l.s4 1934713408
        %v5314 = vunpack.c.0.s8 %v5313
        %v5315 = vlaneseq
        %v5316 = vshrl.u32 %v5315, 7
        %v5317 = vsub.s32 %v5314, %v5316
        %v5318 = vrot.slane %v5304, %v5317
        %v5319 = vcombine.low %v5254, %v5270
        %v5320 = vcombine.high %v5254, %v5270
        %v5322 = vunpack.c.l.s4 1934713408
        %v5323 = vunpack.c.0.s8 %v5322
        %v5324 = vlaneseq
        %v5325 = vshrl.u32 %v5324, 7
        %v5326 = vsub.s32 %v5323, %v5325
        %v5327 = vrot.slane %v5319, %v5326
        %v5329 = vunpack.c.l.s4 1934713408
        %v5330 = vunpack.c.0.s8 %v5329
        %v5331 = vlaneseq
        %v5332 = vshrl.u32 %v5331, 7
        %v5333 = vsub.s32 %v5330, %v5332
        %v5334 = vrot.slane %v5320, %v5333
        %v5335 = vcombine.low %v5279, %v5311
        %v5336 = vcombine.high %v5279, %v5311
        %v5337 = vcombine.low %v5286, %v5318
        %v5338 = vcombine.high %v5286, %v5318
        %v5339 = vcombine.low %v5295, %v5327
        %v5340 = vcombine.high %v5295, %v5327
        %v5341 = vcombine.low %v5302, %v5334
        %v5342 = vcombine.high %v5302, %v5334
        %5349 = vrot.lane.b32.xlu0 %v4656, 10
        %v5350 = vpop.permute.xlu0 %5349
        %5351 = vrot.lane.b32.xlu0 %v4792, 10
        %v5352 = vpop.permute.xlu0 %5351
        %5353 = vrot.lane.b32.xlu0 %v4928, 10
        %v5354 = vpop.permute.xlu0 %5353
        %5355 = vrot.lane.b32.xlu0 %v5064, 10
        %v5356 = vpop.permute.xlu0 %5355
        %5357 = vrot.lane.b32.xlu0 %v5200, 10
        %v5358 = vpop.permute.xlu0 %5357
        %5359 = vrot.lane.b32.xlu0 %v5336, 10
        %v5360 = vpop.permute.xlu0 %5359
        %5373 = vrot.lane.b32.xlu0 %v4657, 20
        %v5374 = vpop.permute.xlu0 %5373
        %5375 = vrot.lane.b32.xlu0 %v4793, 20
        %v5376 = vpop.permute.xlu0 %5375
        %5377 = vrot.lane.b32.xlu0 %v4929, 20
        %v5378 = vpop.permute.xlu0 %5377
        %5379 = vrot.lane.b32.xlu0 %v5065, 20
        %v5380 = vpop.permute.xlu0 %5379
        %5381 = vrot.lane.b32.xlu0 %v5201, 20
        %v5382 = vpop.permute.xlu0 %5381
        %5383 = vrot.lane.b32.xlu0 %v5337, 20
        %v5384 = vpop.permute.xlu0 %5383
        %5397 = vrot.lane.b32.xlu0 %v4658, 30
        %v5398 = vpop.permute.xlu0 %5397
        %5399 = vrot.lane.b32.xlu0 %v4794, 30
        %v5400 = vpop.permute.xlu0 %5399
        %5401 = vrot.lane.b32.xlu0 %v4930, 30
        %v5402 = vpop.permute.xlu0 %5401
        %5403 = vrot.lane.b32.xlu0 %v5066, 30
        %v5404 = vpop.permute.xlu0 %5403
        %5405 = vrot.lane.b32.xlu0 %v5202, 30
        %v5406 = vpop.permute.xlu0 %5405
        %5407 = vrot.lane.b32.xlu0 %v5338, 30
        %v5408 = vpop.permute.xlu0 %5407
        %5421 = vrot.lane.b32.xlu0 %v4659, 40
        %v5422 = vpop.permute.xlu0 %5421
        %5423 = vrot.lane.b32.xlu0 %v4795, 40
        %v5424 = vpop.permute.xlu0 %5423
        %5425 = vrot.lane.b32.xlu0 %v4931, 40
        %v5426 = vpop.permute.xlu0 %5425
        %5427 = vrot.lane.b32.xlu0 %v5067, 40
        %v5428 = vpop.permute.xlu0 %5427
        %5429 = vrot.lane.b32.xlu0 %v5203, 40
        %v5430 = vpop.permute.xlu0 %5429
        %5431 = vrot.lane.b32.xlu0 %v5339, 40
        %v5432 = vpop.permute.xlu0 %5431
        %5445 = vrot.lane.b32.xlu0 %v4660, 50
        %v5446 = vpop.permute.xlu0 %5445
        %5447 = vrot.lane.b32.xlu0 %v4796, 50
        %v5448 = vpop.permute.xlu0 %5447
        %5449 = vrot.lane.b32.xlu0 %v4932, 50
        %v5450 = vpop.permute.xlu0 %5449
        %5451 = vrot.lane.b32.xlu0 %v5068, 50
        %v5452 = vpop.permute.xlu0 %5451
        %5453 = vrot.lane.b32.xlu0 %v5204, 50
        %v5454 = vpop.permute.xlu0 %5453
        %5455 = vrot.lane.b32.xlu0 %v5340, 50
        %v5456 = vpop.permute.xlu0 %5455
        %5469 = vrot.lane.b32.xlu0 %v4661, 60
        %v5470 = vpop.permute.xlu0 %5469
        %5471 = vrot.lane.b32.xlu0 %v4797, 60
        %v5472 = vpop.permute.xlu0 %5471
        %5473 = vrot.lane.b32.xlu0 %v4933, 60
        %v5474 = vpop.permute.xlu0 %5473
        %5475 = vrot.lane.b32.xlu0 %v5069, 60
        %v5476 = vpop.permute.xlu0 %5475
        %5477 = vrot.lane.b32.xlu0 %v5205, 60
        %v5478 = vpop.permute.xlu0 %5477
        %5479 = vrot.lane.b32.xlu0 %v5341, 60
        %v5480 = vpop.permute.xlu0 %5479
        %5493 = vrot.lane.b32.xlu0 %v4662, 70
        %v5494 = vpop.permute.xlu0 %5493
        %5495 = vrot.lane.b32.xlu0 %v4798, 70
        %v5496 = vpop.permute.xlu0 %5495
        %5497 = vrot.lane.b32.xlu0 %v4934, 70
        %v5498 = vpop.permute.xlu0 %5497
        %5499 = vrot.lane.b32.xlu0 %v5070, 70
        %v5500 = vpop.permute.xlu0 %5499
        %5501 = vrot.lane.b32.xlu0 %v5206, 70
        %v5502 = vpop.permute.xlu0 %5501
        %5503 = vrot.lane.b32.xlu0 %v5342, 70
        %v5504 = vpop.permute.xlu0 %5503
        %vm5511 = vcmask 80896
        %v5512 = vsel %vm5511, %v4655, %v5350
        %v5513 = vsel %vm5511, %v4791, %v5352
        %v5514 = vsel %vm5511, %v4927, %v5354
        %v5515 = vsel %vm5511, %v5063, %v5356
        %v5516 = vsel %vm5511, %v5199, %v5358
        %v5517 = vsel %vm5511, %v5335, %v5360
        %vm5518 = vcmask 162816
        %v5519 = vsel %vm5518, %v5512, %v5374
        %v5520 = vsel %vm5518, %v5513, %v5376
        %v5521 = vsel %vm5518, %v5514, %v5378
        %v5522 = vsel %vm5518, %v5515, %v5380
        %v5523 = vsel %vm5518, %v5516, %v5382
        %v5524 = vsel %vm5518, %v5517, %v5384
        %vm5525 = vcmask 244736
        %v5526 = vsel %vm5525, %v5519, %v5398
        %v5527 = vsel %vm5525, %v5520, %v5400
        %v5528 = vsel %vm5525, %v5521, %v5402
        %v5529 = vsel %vm5525, %v5522, %v5404
        %v5530 = vsel %vm5525, %v5523, %v5406
        %v5531 = vsel %vm5525, %v5524, %v5408
        %v5532 = vsel %vm1877, %v5526, %v5422
        %v5533 = vsel %vm1877, %v5527, %v5424
        %v5534 = vsel %vm1877, %v5528, %v5426
        %v5535 = vsel %vm1877, %v5529, %v5428
        %v5536 = vsel %vm1877, %v5530, %v5430
        %v5537 = vsel %vm1877, %v5531, %v5432
        %vm5538 = vcmask 408576
        %v5539 = vsel %vm5538, %v5532, %v5446
        %v5540 = vsel %vm5538, %v5533, %v5448
        %v5541 = vsel %vm5538, %v5534, %v5450
        %v5542 = vsel %vm5538, %v5535, %v5452
        %v5543 = vsel %vm5538, %v5536, %v5454
        %v5544 = vsel %vm5538, %v5537, %v5456
        %v5545 = vsel %vm1758, %v5539, %v5470
        %v5546 = vsel %vm1758, %v5540, %v5472
        %v5547 = vsel %vm1758, %v5541, %v5474
        %v5548 = vsel %vm1758, %v5542, %v5476
        %v5549 = vsel %vm1758, %v5543, %v5478
        %v5550 = vsel %vm1758, %v5544, %v5480
        %vm5551 = vcmask 572416
        %v5552 = vsel %vm5551, %v5545, %v5494
        %v5553 = vsel %vm5551, %v5546, %v5496
        %v5554 = vsel %vm5551, %v5547, %v5498
        %v5555 = vsel %vm5551, %v5548, %v5500
        %v5556 = vsel %vm5551, %v5549, %v5502
        %v5557 = vsel %vm5551, %v5550, %v5504
        %v5558 = vcombine.high 0.0, 0.0
        %v5560 = vunpack.c.l.s4 1983009808
        %v5561 = vunpack.c.0.s8 %v5560
        %v5562 = vlaneseq
        %v5563 = vshrl.u32 %v5562, 7
        %v5564 = vsub.s32 %v5561, %v5563
        %v5565 = vrot.slane %v5558, %v5564
        %v5567 = vunpack.c.l.s4 1983009808
        %v5568 = vunpack.c.0.s8 %v5567
        %v5569 = vlaneseq
        %v5570 = vshrl.u32 %v5569, 7
        %v5571 = vsub.s32 %v5568, %v5570
        %v5572 = vcombine.low %v1807, 0.0
        %v5573 = vcombine.high %v1807, 0.0
        %v5575 = vunpack.c.l.s4 1934713408
        %v5576 = vunpack.c.0.s8 %v5575
        %v5577 = vlaneseq
        %v5578 = vshrl.u32 %v5577, 7
        %v5579 = vsub.s32 %v5576, %v5578
        %v5580 = vrot.slane %v5572, %v5579
        %v5582 = vunpack.c.l.s4 1934713408
        %v5583 = vunpack.c.0.s8 %v5582
        %v5584 = vlaneseq
        %v5585 = vshrl.u32 %v5584, 7
        %v5586 = vsub.s32 %v5583, %v5585
        %v5587 = vrot.slane %v5573, %v5586
        %v5588 = vcombine.low %v5565, %v5565
        %v5589 = vcombine.high %v5565, %v5565
        %v5591 = vunpack.c.l.s4 1934713408
        %v5592 = vunpack.c.0.s8 %v5591
        %v5593 = vlaneseq
        %v5594 = vshrl.u32 %v5593, 7
        %v5595 = vsub.s32 %v5592, %v5594
        %v5596 = vrot.slane %v5588, %v5595
        %v5598 = vunpack.c.l.s4 1934713408
        %v5599 = vunpack.c.0.s8 %v5598
        %v5600 = vlaneseq
        %v5601 = vshrl.u32 %v5600, 7
        %v5602 = vsub.s32 %v5599, %v5601
        %v5603 = vrot.slane %v5589, %v5602
        %v5604 = vcombine.high %v5580, 0.0
        %v5605 = vcombine.high %v5587, 0.0
        %v5606 = vcombine.high %v5596, 0.0
        %v5607 = vcombine.high %v5603, 0.0
        %5609 = vrot.lane.b32.xlu0 %v5604, 10
        %v5610 = vpop.permute.xlu0 %5609
        %5613 = vrot.lane.b32.xlu0 %v5587, 20
        %v5614 = vpop.permute.xlu0 %5613
        %5617 = vrot.lane.b32.xlu0 %v5605, 30
        %v5618 = vpop.permute.xlu0 %5617
        %5621 = vrot.lane.b32.xlu0 %v5596, 40
        %v5622 = vpop.permute.xlu0 %5621
        %5625 = vrot.lane.b32.xlu0 %v5606, 50
        %v5626 = vpop.permute.xlu0 %5625
        %5629 = vrot.lane.b32.xlu0 %v5603, 60
        %v5630 = vpop.permute.xlu0 %5629
        %5633 = vrot.lane.b32.xlu0 %v5607, 70
        %v5634 = vpop.permute.xlu0 %5633
        %v5636 = vsel %vm5511, %v5580, %v5610
        %v5637 = vsel %vm5518, %v5636, %v5614
        %v5638 = vsel %vm5525, %v5637, %v5618
        %v5639 = vsel %vm1877, %v5638, %v5622
        %v5640 = vsel %vm5538, %v5639, %v5626
        %v5641 = vsel %vm1758, %v5640, %v5630
        %v5642 = vsel %vm5551, %v5641, %v5634
        %v5644 = vsel %vm1752, %v4382, 0
        %5646 = vmatprep.subr.mxu0 0.0
        %5647 = vmatpush1.msra.mxu0 %v5552
        %5648 = vmatprep.subr.mxu0 0.0
        %5649 = vmatpush1.msra.mxu0 %v5553
        %5650 = vmatprep.subr.mxu0 0.0
        %5651 = vmatpush1.msra.mxu0 %v5554
        %5652 = vmatprep.subr.mxu0 0.0
        %5653 = vmatpush1.msra.mxu0 %v5555
        %5654 = vmatprep.subr.mxu0 0.0
        %5655 = vmatpush1.msra.mxu0 %v5556
        %5656 = vmatprep.subr.mxu0 0.0
        %5657 = vmatpush1.msra.mxu0 %v5557
        %5658 = vmatprep.subr.mxu0 0.0
        %5659 = vmatpush1.msra.mxu0 0.0
        %5660 = vmatprep.subr.mxu0 0.0
        %5661 = vmatpush1.msra.mxu0 0.0
        %5662 = vmatprep.subr.mxu0 0.0
        %5663 = vmatpush1.msra.mxu0 0.0
        %5664 = vmatprep.subr.mxu0 0.0
        %5665 = vmatpush1.msra.mxu0 0.0
        %5666 = vmatprep.subr.mxu0 0.0
        %5667 = vmatpush1.msra.mxu0 0.0
        %5668 = vmatprep.subr.mxu0 0.0
        %5669 = vmatpush1.msra.mxu0 0.0
        %5670 = vmatprep.subr.mxu0 0.0
        %5671 = vmatpush1.msra.mxu0 0.0
        %5672 = vmatprep.subr.mxu0 0.0
        %5673 = vmatpush1.msra.mxu0 0.0
        %5674 = vmatprep.subr.mxu0 0.0
        %5675 = vmatpush1.msra.mxu0 0.0
        %5676 = vmatprep.subr.mxu0 0.0
        %5677 = vmatpush1.msra.mxu0 0.0
        %5678 = vmatprep.subr.mxu0 0.0
        %5679 = vmatpush1.msra.mxu0 0.0
        %5680 = vmatprep.subr.mxu0 0.0
        %5681 = vmatpush1.msra.mxu0 0.0
        %5682 = vmatprep.subr.mxu0 0.0
        %5683 = vmatpush1.msra.mxu0 0.0
        %5684 = vmatprep.subr.mxu0 0.0
        %5685 = vmatpush1.msra.mxu0 0.0
        %5686 = vmatprep.subr.mxu0 0.0
        %5687 = vmatpush1.msra.mxu0 0.0
        %5688 = vmatprep.subr.mxu0 0.0
        %5689 = vmatpush1.msra.mxu0 0.0
        %5690 = vmatprep.subr.mxu0 0.0
        %5691 = vmatpush1.msra.mxu0 0.0
        %5692 = vmatprep.subr.mxu0 0.0
        %5693 = vmatpush1.msra.mxu0 0.0
        %5694 = vmatprep.subr.mxu0 0.0
        %5695 = vmatpush1.msra.mxu0 0.0
        %5696 = vmatprep.subr.mxu0 0.0
        %5697 = vmatpush1.msra.mxu0 0.0
        %5698 = vmatprep.subr.mxu0 0.0
        %5699 = vmatpush1.msra.mxu0 0.0
        %5700 = vmatprep.subr.mxu0 0.0
        %5701 = vmatpush1.msra.mxu0 0.0
        %5702 = vmatprep.subr.mxu0 0.0
        %5703 = vmatpush1.msra.mxu0 0.0
        %5704 = vmatprep.subr.mxu0 0.0
        %5705 = vmatpush1.msra.mxu0 0.0
        %5706 = vmatprep.subr.mxu0 0.0
        %5707 = vmatpush1.msra.mxu0 0.0
        %5708 = vmatprep.subr.mxu0 0.0
        %5709 = vmatpush1.msra.mxu0 0.0
        %5710 = vmatprep.mubr.f32.mxu0 0.0
        %5711 = vmatmul.mubr.f32.gmra.mrb[0].mxu0 %v5644
        %v5712 = vpop.f32.mrb[0].mxu0
        %v5713 = vadd.f32 %v5642, %v5712
        %v5714 = vpop.f32.mrb[0].mxu0
        %5715 = vdwg.mxu0
        %5717 = vrot.lane.b32.xlu0 %v5713, 118
        %v5718 = vpop.permute.xlu0 %5717
        %5720 = vrot.lane.b32.xlu0 %v5713, 108
        %v5721 = vpop.permute.xlu0 %5720
        %5723 = vrot.lane.b32.xlu0 %v5713, 98
        %v5724 = vpop.permute.xlu0 %5723
        %5726 = vrot.lane.b32.xlu0 %v5713, 88
        %v5727 = vpop.permute.xlu0 %5726
        %5729 = vrot.lane.b32.xlu0 %v5713, 78
        %v5730 = vpop.permute.xlu0 %5729
        %5732 = vrot.lane.b32.xlu0 %v5713, 68
        %v5733 = vpop.permute.xlu0 %5732
        %5735 = vrot.lane.b32.xlu0 %v5713, 58
        %v5736 = vpop.permute.xlu0 %5735
        %v5738 = vcombine.low %v5713, %v5721
        %v5740 = vunpack.c.l.s4 1983009808
        %v5741 = vunpack.c.0.s8 %v5740
        %v5742 = vlaneseq
        %v5743 = vshrl.u32 %v5742, 7
        %v5744 = vsub.s32 %v5741, %v5743
        %v5745 = vrot.slane %v5738, %v5744
        %v5746 = vcombine.low %v5718, %v5724
        %v5748 = vunpack.c.l.s4 1983009808
        %v5749 = vunpack.c.0.s8 %v5748
        %v5750 = vlaneseq
        %v5751 = vshrl.u32 %v5750, 7
        %v5752 = vsub.s32 %v5749, %v5751
        %v5753 = vrot.slane %v5746, %v5752
        %v5754 = vcombine.low %v5727, %v5733
        %v5756 = vunpack.c.l.s4 1983009808
        %v5757 = vunpack.c.0.s8 %v5756
        %v5758 = vlaneseq
        %v5759 = vshrl.u32 %v5758, 7
        %v5760 = vsub.s32 %v5757, %v5759
        %v5761 = vrot.slane %v5754, %v5760
        %v5762 = vcombine.low %v5730, %v5736
        %v5764 = vunpack.c.l.s4 1983009808
        %v5765 = vunpack.c.0.s8 %v5764
        %v5766 = vlaneseq
        %v5767 = vshrl.u32 %v5766, 7
        %v5768 = vsub.s32 %v5765, %v5767
        %v5769 = vrot.slane %v5762, %v5768
        %v5770 = vcombine.low %v5745, %v5753
        %v5771 = vcombine.high %v5745, %v5753
        %v5773 = vunpack.c.l.s4 1934713408
        %v5774 = vunpack.c.0.s8 %v5773
        %v5775 = vlaneseq
        %v5776 = vshrl.u32 %v5775, 7
        %v5777 = vsub.s32 %v5774, %v5776
        %v5778 = vrot.slane %v5770, %v5777
        %v5780 = vunpack.c.l.s4 1934713408
        %v5781 = vunpack.c.0.s8 %v5780
        %v5782 = vlaneseq
        %v5783 = vshrl.u32 %v5782, 7
        %v5784 = vsub.s32 %v5781, %v5783
        %v5785 = vrot.slane %v5771, %v5784
        %v5786 = vcombine.low %v5761, %v5769
        %v5787 = vcombine.high %v5761, %v5769
        %v5789 = vunpack.c.l.s4 1934713408
        %v5790 = vunpack.c.0.s8 %v5789
        %v5791 = vlaneseq
        %v5792 = vshrl.u32 %v5791, 7
        %v5793 = vsub.s32 %v5790, %v5792
        %v5794 = vrot.slane %v5786, %v5793
        %v5796 = vunpack.c.l.s4 1934713408
        %v5797 = vunpack.c.0.s8 %v5796
        %v5798 = vlaneseq
        %v5799 = vshrl.u32 %v5798, 7
        %v5800 = vsub.s32 %v5797, %v5799
        %v5801 = vrot.slane %v5787, %v5800
        %v5802 = vcombine.low %v5778, %v5794
        %v5803 = vcombine.high %v5778, %v5794
        %v5804 = vcombine.low %v5785, %v5801
        %5805 = vst.msk [vmem:[%s258] sm:$0xff] %vm5511, %v5802
        %5806 = vst.msk [vmem:[%s258 + $0x8] sm:$0xff] %vm5511, %v5803
        %5807 = vst.msk [vmem:[%s258 + $0x10] sm:$0xff] %vm5511, %v5804
        %s5808 = sand.u32 %s134, 1
        %s5809 = sand.u32 %s134, 1
        %s5810 = smul.addr %s5809, 24
        %s5811 = scalar_lea.vmem [#allocation7], %s5810
        // Predicated region
        $region49: #{tpu_custom_call.1} parent=35 // pred_check
          %p5812 = pneg %p144
        $region50: #{tpu_custom_call.1} parent=35 // pred_check_branch
          %5814 = sbr.rel (%p5812) target = $region52
        $region51: #{tpu_custom_call.1} parent=35 // pred_region
          %s5815 = smul.addr %s23, 9
          %s5816 = sadd.s32 %s24, %s5815
          %s5817 = smul.addr %s5816, 8
          %s5818 = scalar_lea.vmem %s4, %s5817
          // Predicated region
          $region53: #{tpu_custom_call.1} parent=51 // pred_check
            _
          $region54: #{tpu_custom_call.1} parent=51 // pred_check_branch
            %5820 = sbr.rel (0) target = $region56
          $region55: #{tpu_custom_call.1} parent=51 // pred_region
            // Predicated region
            $region57: #{tpu_custom_call.1} parent=55 // pred_check
              _
            $region58: #{tpu_custom_call.1} parent=55 // pred_check_branch
              %5822 = sbr.rel (0) target = $region60
            $region59: #{tpu_custom_call.1} parent=55 // pred_region
              // Predicated region
              $region72: #{tpu_custom_call.1} parent=59 // pred_check
                _
              $region73: #{tpu_custom_call.1} parent=59 // pred_check_branch
                %5841 = sbr.rel (0) target = $region75
              $region74: #{tpu_custom_call.1} parent=59 // pred_region
                loop: start=0, step=1, limit=1
                $region76: #{tpu_custom_call.1} parent=74 // loop_pre_header
                  _
                $region77: #{tpu_custom_call.1} parent=74 // loop_header
                  %s5843 = sphi 0, %s5847
                  %p5844 = scmp.ge.s32.totalorder %s5843, 1
                  %s5848 = sphi %s5811, %s5811
                  %s5849 = sphi %s5818, %s5818
                $region78: #{tpu_custom_call.1} parent=74 // loop_header_branch
                  %5846 = sbr.rel (%p5844) target = $region82
                $region79: #{tpu_custom_call.1} parent=74 // loop_body
                  %v5850 = vld [vmem:[%s5848] sm:$0xff]
                  %5851 = vst [vmem:[%s5849] sm:$0xff] %v5850
                  %v5852 = vld [vmem:[%s5848 + $0x8] sm:$0xff]
                  %5853 = vst [vmem:[%s5849 + $0x18] sm:$0xff] %v5852
                  %v5854 = vld [vmem:[%s5848 + $0x10] sm:$0xff]
                  %5855 = vst [vmem:[%s5849 + $0x30] sm:$0xff] %v5854
                $region80: #{tpu_custom_call.1} parent=74 // loop_footer
                  %s5847 = sadd.s32 1, %s5843
                $region81: #{tpu_custom_call.1} parent=74 // loop_footer_branch
                  %5842 = sbr.rel target = $region77
                $region82: #{tpu_custom_call.1} parent=74 // loop_exit
                  _
              $region75: #{tpu_custom_call.1} parent=59 // pred_fallthru
                _
              // Predicated region
              $region83: #{tpu_custom_call.1} parent=59 // pred_check
                _
              $region84: #{tpu_custom_call.1} parent=59 // pred_check_branch
                %5857 = sbr.rel target = $region86
              $region85: #{tpu_custom_call.1} parent=59 // pred_region
                _
              $region86: #{tpu_custom_call.1} parent=59 // pred_fallthru
                _
            $region60: #{tpu_custom_call.1} parent=55 // pred_fallthru
              _
            // Predicated region
            $region61: #{tpu_custom_call.1} parent=55 // pred_check
              _
            $region62: #{tpu_custom_call.1} parent=55 // pred_check_branch
              %5824 = sbr.rel target = $region64
            $region63: #{tpu_custom_call.1} parent=55 // pred_region
              loop: start=0, step=1, limit=1
              $region65: #{tpu_custom_call.1} parent=63 // loop_pre_header
                _
              $region66: #{tpu_custom_call.1} parent=63 // loop_header
                %s5827 = sphi 0, %s5831
                %p5828 = scmp.ge.s32.totalorder %s5827, 1
                %s5832 = sphi %s5811, %s5811
                %s5833 = sphi %s5818, %s5818
              $region67: #{tpu_custom_call.1} parent=63 // loop_header_branch
                %5830 = sbr.rel (%p5828) target = $region71
              $region68: #{tpu_custom_call.1} parent=63 // loop_body
                %v5834 = vld [vmem:[%s5832] sm:$0xff]
                %5835 = vst [vmem:[%s5833] sm:$0xff] %v5834
                %v5836 = vld [vmem:[%s5832 + $0x8] sm:$0xff]
                %5837 = vst [vmem:[%s5833 + $0x18] sm:$0xff] %v5836
                %v5838 = vld [vmem:[%s5832 + $0x10] sm:$0xff]
                %5839 = vst [vmem:[%s5833 + $0x30] sm:$0xff] %v5838
              $region69: #{tpu_custom_call.1} parent=63 // loop_footer
                %s5831 = sadd.s32 1, %s5827
              $region70: #{tpu_custom_call.1} parent=63 // loop_footer_branch
                %5826 = sbr.rel target = $region66
              $region71: #{tpu_custom_call.1} parent=63 // loop_exit
                _
            $region64: #{tpu_custom_call.1} parent=55 // pred_fallthru
              _
          $region56: #{tpu_custom_call.1} parent=51 // pred_fallthru
            _
          %5858 = vnop
        $region52: #{tpu_custom_call.1} parent=35 // pred_fallthru
          _
      $region36: #{tpu_custom_call.1} parent=5 // pred_fallthru
        _
      %p5859 = scmp.le.s32.totalorder 2, %s14
      // Predicated region
      $region87: #{tpu_custom_call.1} parent=5 // pred_check
        %p5860 = pneg %p5859
      $region88: #{tpu_custom_call.1} parent=5 // pred_check_branch
        %5862 = sbr.rel (%p5860) target = $region90
      $region89: #{tpu_custom_call.1} parent=5 // pred_region
        %s5863 = ssub.s32 %s14, 2
        // Predicated region
        $region91: #{tpu_custom_call.1} parent=89 // pred_check
          %p5864 = pneg %p150
        $region92: #{tpu_custom_call.1} parent=89 // pred_check_branch
          %5866 = sbr.rel (%p5864) target = $region94
        $region93: #{tpu_custom_call.1} parent=89 // pred_region
          %s5867 = sand.u32 %s135, 1
          %s5868 = sand.u32 %s135, 1
          %s5869 = smul.addr %s5868, 24
          %s5870 = scalar_lea.vmem [#allocation7], %s5869
        $region94: #{tpu_custom_call.1} parent=89 // pred_fallthru
          _
      $region90: #{tpu_custom_call.1} parent=5 // pred_fallthru
        _
    $region6: #{tpu_custom_call.1} parent=1 // loop_footer
      %s18 = sadd.s32 1, %s14
    $region7: #{tpu_custom_call.1} parent=1 // loop_footer_branch
      %13 = sbr.rel target = $region3
    $region8: #{tpu_custom_call.1} parent=1 // loop_exit
      _
    %5871 = vsyncpa [#allocation3], 1
    %s5872 = scalar_lea.sflag [#allocation3], 1
    %5873 = vsyncpa %s5872, 1
    %5874 = vsyncpa [#allocation5], 1

</llo_original>
